<compile_context>
chip_gen: v6e
topology: v6e:2x2x1
jax: 0.10.0
libtpu: 0.0.40
codegen_flags: <defaults>
</compile_context>

<pallas_src>
import functools

import jax
import jax.numpy as jnp
import numpy as np
from jax.experimental import pallas as pl
from jax.experimental.pallas import tpu as pltpu


# ------------------------------------------------------------------------------ kernel
def _conv_norm_lrelu_kernel(w_ref, x_ref, mask_ref, o_ref, *,
                            taps, mout_p, use_norm, use_act, slope, eps, inv_count):
    """Fused conv (tap-accumulated MXU matmuls) + InstanceNorm2d + LeakyReLU.

    w_ref:    (T, tile_co, Cs)      bf16  per-tap weight matrices (zero rows > Cout)
    x_ref:    (1, Cs, Min_p)        bf16  S2D'd + flattened input of one sample
    mask_ref: (1, Mout_p)           f32   1.0 on valid output columns, 0.0 elsewhere
    o_ref:    (1, tile_co, Mout_p)  bf16/f32 output slab
    """
    x = x_ref[0]                                                  # (Cs, Min_p) bf16
    acc = None
    for t, s in enumerate(taps):                                  # static unroll
        xt = jax.lax.slice(x, (0, s), (x.shape[0], s + mout_p))   # (Cs, Mout_p)
        part = jnp.dot(w_ref[t], xt, preferred_element_type=jnp.float32)
        acc = part if acc is None else acc + part                 # (tile_co, Mout_p)

    if use_norm:
        # Zero the full-width garbage columns so the statistics run over exactly the
        # Hout*Wout valid outputs (inv_count = 1/(Hout*Wout)).
        acc = acc * mask_ref[...]
        mean = jnp.sum(acc, axis=-1, keepdims=True) * inv_count
        ex2 = jnp.sum(acc * acc, axis=-1, keepdims=True) * inv_count
        var = jnp.maximum(ex2 - mean * mean, 0.0)
        scale = jax.lax.rsqrt(var + eps)
        acc = acc * scale + (-mean * scale)                       # fused scale + shift
    if use_act:
        acc = jnp.maximum(acc, acc * slope)                       # LeakyReLU(0.2)
    o_ref[0] = acc.astype(o_ref.dtype)


# ----------------------------------------------------------------------------- wrapper
def _round_up(x, m):
    return (x + m - 1) // m * m


def conv_norm_lrelu(x, w, cfg, *, eps=1e-5, slope=0.2, out_dtype=jnp.bfloat16):
    """One DNPF layer.  x: (N,Cin,H,W) float, w: (Cout,Cin,KH,KW) f32 (PyTorch OIHW)."""
    N, Cin, H, W = x.shape
    Cout, Cin_w, kh, kw = w.shape
    assert Cin_w == Cin
    sh, sw = cfg["stride"]
    ph, pw = cfg["pad"]
    assert kh % sh == 0 and kw % sw == 0
    Hp, Wp = H + 2 * ph, W + 2 * pw
    assert Hp % sh == 0 and Wp % sw == 0

    Hs, Ws = Hp // sh, Wp // sw                  # space-to-depth spatial grid
    kh2, kw2 = kh // sh, kw // sw                # equivalent stride-1 kernel on S2D grid
    Hout, Wout = Hs - kh2 + 1, Ws - kw2 + 1
    Cs, T = Cin * sh * sw, kh2 * kw2

    # ---- input: pad -> space-to-depth by (sh, sw) -> flatten spatial -> bf16 ---------
    xp = jnp.pad(x, ((0, 0), (0, 0), (ph, ph), (pw, pw)))
    xs = (xp.reshape(N, Cin, Hs, sh, Ws, sw)
            .transpose(0, 1, 3, 5, 2, 4)
            .reshape(N, Cs, Hs * Ws))
    Mout = Hout * Ws                             # full-width output rows (pitch Ws)
    Mout_p = _round_up(Mout, 128)                # lane-dense output width
    max_shift = (kh2 - 1) * Ws + (kw2 - 1)
    Min_p = Mout_p + _round_up(max_shift, 128)   # >= Hs*Ws and >= every tap slice end
    xs = jnp.pad(xs, ((0, 0), (0, 0), (0, Min_p - Hs * Ws))).astype(jnp.bfloat16)

    # ---- weights: OIHW -> (T, Cout_p, Cs), matching the S2D channel order ------------
    tile_co = 256 if Cout >= 256 else min(_round_up(Cout, 16), 128)
    Cout_p = _round_up(Cout, tile_co)
    wt = (w.reshape(Cout, Cin, kh2, sh, kw2, sw)
           .transpose(2, 4, 0, 1, 3, 5)           # (pi, pj, Cout, Cin, di, dj)
           .reshape(T, Cout, Cs))
    wt = jnp.pad(wt, ((0, 0), (0, Cout_p - Cout), (0, 0))).astype(jnp.bfloat16)

    # ---- validity mask over the full-width columns (only read by norm layers) --------
    f = jnp.arange(Mout_p, dtype=jnp.int32)
    mask = ((f < Mout) & ((f % Ws) < Wout)).astype(jnp.float32)[None, :]

    taps = tuple(pi * Ws + pj for pi in range(kh2) for pj in range(kw2))
    kernel = functools.partial(
        _conv_norm_lrelu_kernel,
        taps=taps, mout_p=Mout_p,
        use_norm=cfg["norm"], use_act=cfg["act"],
        slope=slope, eps=eps, inv_count=1.0 / float(Hout * Wout))

    out_isize = np.dtype(out_dtype).itemsize
    blk_bytes = (T * tile_co * Cs * 2 + Cs * Min_p * 2 + Mout_p * 4
                 + tile_co * Mout_p * (out_isize + 4))       # + f32 accumulator
    vmem_limit = int(min(64 * 2**20, max(32 * 2**20, 4 * blk_bytes)))
    cost = pl.CostEstimate(
        flops=2 * N * Cout_p * Cs * T * Mout_p,
        transcendentals=0,
        bytes_accessed=int(xs.size * 2 + wt.size * 2 + mask.size * 4
                           + N * Cout_p * Mout_p * out_isize))

    out = pl.pallas_call(
        kernel,
        out_shape=jax.ShapeDtypeStruct((N, Cout_p, Mout_p), out_dtype),
        grid=(N, Cout_p // tile_co),
        in_specs=[
            pl.BlockSpec((T, tile_co, Cs), lambda n, c: (0, c, 0)),
            pl.BlockSpec((1, Cs, Min_p), lambda n, c: (n, 0, 0)),
            pl.BlockSpec((1, Mout_p), lambda n, c: (0, 0)),
        ],
        out_specs=pl.BlockSpec((1, tile_co, Mout_p), lambda n, c: (n, c, 0)),
        compiler_params=pltpu.CompilerParams(
            dimension_semantics=("parallel", "parallel"),
            vmem_limit_bytes=vmem_limit),
        cost_estimate=cost,
    )(wt, xs, mask)

    # Crop Cout padding, flat padding, and the full-width garbage columns.
    out = out[:, :Cout, :Mout].reshape(N, Cout, Hout, Ws)[:, :, :, :Wout]
    return out


# ------------------------------------------------------------------------- model setup
def dnpf_layer_cfgs(ndf):
    # Note: nn.InstanceNorm2d(ndf) in the PyTorch code has a num_features mismatch with
    # the conv output, but with affine=False / track_running_stats=False (defaults) it
    # is just per-(sample, channel) normalization, so num_features is irrelevant.
    cfgs = [dict(cin=1, cout=ndf, k=(4, 4), stride=(2, 2), pad=(1, 1),
                 norm=False, act=True)]
    c = ndf
    for _ in range(3):
        cfgs.append(dict(cin=c, cout=2 * c, k=(4, 4), stride=(2, 2), pad=(1, 1),
                         norm=True, act=True))
        c *= 2
    cfgs.append(dict(cin=c, cout=1, k=(4, 4), stride=(2, 1), pad=(1, 2),
                     norm=False, act=False))
    return cfgs


def init_params(key, cfgs):
    """Deterministic Conv2d weights (OIHW), PyTorch default kaiming_uniform bounds."""
    weights = []
    for cfg in cfgs:
        kh, kw = cfg["k"]
        cin, cout = cfg["cin"], cfg["cout"]
        key, sub = jax.random.split(key)
        bound = 1.0 / np.sqrt(cin * kh * kw)
        weights.append(
            jax.random.uniform(sub, (cout, cin, kh, kw), jnp.float32, -bound, bound))
    return weights


def dnpf_forward(x, weights, cfgs):
    h = x.astype(jnp.bfloat16)          # activations stay bf16 between layers
    for i, (w, cfg) in enumerate(zip(weights, cfgs)):
        last = i == len(cfgs) - 1
        h = conv_norm_lrelu(h, w, cfg,
                            out_dtype=jnp.float32 if last else jnp.bfloat16)
    return h


# ----------------------------------------------------------------- pure-JAX reference
def dnpf_reference(x, weights, cfgs, eps=1e-5, slope=0.2):
    for w, cfg in zip(weights, cfgs):
        ph, pw = cfg["pad"]
        y = jax.lax.conv_general_dilated(
            x, w, window_strides=cfg["stride"], padding=((ph, ph), (pw, pw)),
            dimension_numbers=("NCHW", "OIHW", "NCHW"),
            precision=jax.lax.Precision.HIGHEST)
        if cfg["norm"]:
            mean = jnp.mean(y, axis=(2, 3), keepdims=True)
            var = jnp.mean((y - mean) ** 2, axis=(2, 3), keepdims=True)
            y = (y - mean) * jax.lax.rsqrt(var + eps)
        if cfg["act"]:
            y = jnp.where(y >= 0.0, y, slope * y)
        x = y
    return x


# --------------------------------------------------------------------------------- main
if __name__ == "__main__":
    ndf = 8                      # scaled-down DNPF(ndf=64)
    N, H, W = 2, 64, 64          # input: (batch, 1, H, W), PyTorch NCHW

    key = jax.random.PRNGKey(0)
    key, kx = jax.random.split(key)
    x = jax.random.normal(kx, (N, 1, H, W), jnp.float32)
    cfgs = dnpf_layer_cfgs(ndf)
    weights = init_params(key, cfgs)

    fwd = jax.jit(functools.partial(dnpf_forward, cfgs=cfgs))
    out = jax.block_until_ready(fwd(x, weights))
    ref = jax.block_until_ready(dnpf_reference(x, weights, cfgs))
    # 64x64 -> 32 -> 16 -> 8 -> 4 -> final conv (stride (2,1), pad (1,2)) -> (2, 5)
    assert out.shape == ref.shape == (N, 1, 2, 5), (out.shape, ref.shape)

    max_diff = float(jnp.max(jnp.abs(out - ref)))
    tol = 5e-2 * max(1.0, float(jnp.max(jnp.abs(ref))))   # bf16 MXU inputs, f32 accum
    assert max_diff <= tol, f"kernel/reference mismatch, max_diff={max_diff}"

    print("KERNEL_OK")
</pallas_src>

<mosaic_0001>
module attributes {stable_mosaic.version = 11 : i64} {
  func.func @_conv_norm_lrelu_kernel(%arg0: i32, %arg1: i32, %arg2: memref<4x16x4xbf16, #tpu.memory_space<vmem>>, %arg3: memref<1x4x1280xbf16, #tpu.memory_space<vmem>>, %arg4: memref<1x1152xf32, #tpu.memory_space<vmem>>, %arg5: memref<1x16x1152xbf16, #tpu.memory_space<vmem>>) attributes {dimension_semantics = [#tpu.dimension_semantics<parallel>, #tpu.dimension_semantics<parallel>], iteration_bounds = array<i64: 2, 1>, scalar_prefetch = 0 : i64, scratch_operands = 0 : i64, tpu.core_type = #tpu.core_type<tc>, window_params = [{transform_indices = @transform_0, window_bounds = array<i64: 4, 16, 4>}, {transform_indices = @transform_1, window_bounds = array<i64: 1, 4, 1280>}, {pipeline_mode = #tpu.pipeline_mode<synchronous>, transform_indices = @transform_2, window_bounds = array<i64: 1, 1152>}, {transform_indices = @transform_3, window_bounds = array<i64: 1, 16, 1152>}]} {
    %c0 = arith.constant 0 : index
    %c0_0 = arith.constant 0 : index
    %c0_1 = arith.constant 0 : index
    %0 = vector.load %arg3[%c0, %c0_0, %c0_1] : memref<1x4x1280xbf16, #tpu.memory_space<vmem>>, vector<1x4x1280xbf16>
    %1 = vector.shape_cast %0 : vector<1x4x1280xbf16> to vector<4x1280xbf16>
    %2 = vector.extract_strided_slice %1 {offsets = [0, 0], sizes = [4, 1152], strides = [1, 1]} : vector<4x1280xbf16> to vector<4x1152xbf16>
    %c0_2 = arith.constant 0 : index
    %c0_3 = arith.constant 0 : index
    %c0_4 = arith.constant 0 : index
    %3 = vector.load %arg2[%c0_2, %c0_3, %c0_4] : memref<4x16x4xbf16, #tpu.memory_space<vmem>>, vector<1x16x4xbf16>
    %4 = vector.shape_cast %3 : vector<1x16x4xbf16> to vector<16x4xbf16>
    %cst = arith.constant dense<0.000000e+00> : vector<16x1152xf32>
    %5 = tpu.matmul %4, %2, %cst {dimension_numbers = #tpu.dot_dimension_numbers<[1], [0], [0], [1], [0, 0, 1, 1], [], []>} : vector<16x4xbf16>, vector<4x1152xbf16>, vector<16x1152xf32> -> vector<16x1152xf32>
    %6 = vector.extract_strided_slice %1 {offsets = [0, 1], sizes = [4, 1152], strides = [1, 1]} : vector<4x1280xbf16> to vector<4x1152xbf16>
    %c1 = arith.constant 1 : index
    %c0_5 = arith.constant 0 : index
    %c0_6 = arith.constant 0 : index
    %7 = vector.load %arg2[%c1, %c0_5, %c0_6] : memref<4x16x4xbf16, #tpu.memory_space<vmem>>, vector<1x16x4xbf16>
    %8 = vector.shape_cast %7 : vector<1x16x4xbf16> to vector<16x4xbf16>
    %cst_7 = arith.constant dense<0.000000e+00> : vector<16x1152xf32>
    %9 = tpu.matmul %8, %6, %cst_7 {dimension_numbers = #tpu.dot_dimension_numbers<[1], [0], [0], [1], [0, 0, 1, 1], [], []>} : vector<16x4xbf16>, vector<4x1152xbf16>, vector<16x1152xf32> -> vector<16x1152xf32>
    %10 = arith.addf %5, %9 : vector<16x1152xf32>
    %11 = vector.extract_strided_slice %1 {offsets = [0, 33], sizes = [4, 1152], strides = [1, 1]} : vector<4x1280xbf16> to vector<4x1152xbf16>
    %c2 = arith.constant 2 : index
    %c0_8 = arith.constant 0 : index
    %c0_9 = arith.constant 0 : index
    %12 = vector.load %arg2[%c2, %c0_8, %c0_9] : memref<4x16x4xbf16, #tpu.memory_space<vmem>>, vector<1x16x4xbf16>
    %13 = vector.shape_cast %12 : vector<1x16x4xbf16> to vector<16x4xbf16>
    %cst_10 = arith.constant dense<0.000000e+00> : vector<16x1152xf32>
    %14 = tpu.matmul %13, %11, %cst_10 {dimension_numbers = #tpu.dot_dimension_numbers<[1], [0], [0], [1], [0, 0, 1, 1], [], []>} : vector<16x4xbf16>, vector<4x1152xbf16>, vector<16x1152xf32> -> vector<16x1152xf32>
    %15 = arith.addf %10, %14 : vector<16x1152xf32>
    %16 = vector.extract_strided_slice %1 {offsets = [0, 34], sizes = [4, 1152], strides = [1, 1]} : vector<4x1280xbf16> to vector<4x1152xbf16>
    %c3 = arith.constant 3 : index
    %c0_11 = arith.constant 0 : index
    %c0_12 = arith.constant 0 : index
    %17 = vector.load %arg2[%c3, %c0_11, %c0_12] : memref<4x16x4xbf16, #tpu.memory_space<vmem>>, vector<1x16x4xbf16>
    %18 = vector.shape_cast %17 : vector<1x16x4xbf16> to vector<16x4xbf16>
    %cst_13 = arith.constant dense<0.000000e+00> : vector<16x1152xf32>
    %19 = tpu.matmul %18, %16, %cst_13 {dimension_numbers = #tpu.dot_dimension_numbers<[1], [0], [0], [1], [0, 0, 1, 1], [], []>} : vector<16x4xbf16>, vector<4x1152xbf16>, vector<16x1152xf32> -> vector<16x1152xf32>
    %20 = arith.addf %15, %19 : vector<16x1152xf32>
    %cst_14 = arith.constant 2.000000e-01 : f32
    %21 = vector.broadcast %cst_14 : f32 to vector<16x1152xf32>
    %22 = arith.mulf %20, %21 : vector<16x1152xf32>
    %23 = arith.maximumf %20, %22 : vector<16x1152xf32>
    %24 = arith.truncf %23 : vector<16x1152xf32> to vector<16x1152xbf16>
    %c0_15 = arith.constant 0 : index
    %c0_16 = arith.constant 0 : index
    %c0_17 = arith.constant 0 : index
    %25 = vector.load %arg5[%c0_15, %c0_16, %c0_17] : memref<1x16x1152xbf16, #tpu.memory_space<vmem>>, vector<1x16x1152xbf16>
    %26 = vector.shape_cast %25 : vector<1x16x1152xbf16> to vector<16x1152xbf16>
    %27 = vector.shape_cast %24 : vector<16x1152xbf16> to vector<1x16x1152xbf16>
    tpu.vector_store %arg5[%c0_15, %c0_16, %c0_17], %27 {strides = array<i32>} : memref<1x16x1152xbf16, #tpu.memory_space<vmem>>, vector<1x16x1152xbf16>,
    return
  }
  func.func @transform_0(%arg0: i32, %arg1: i32) -> (i32, i32, i32) {
    %c0_i32 = arith.constant 0 : i32
    %c0_i32_0 = arith.constant 0 : i32
    %c0_i32_1 = arith.constant 0 : i32
    return %c0_i32, %arg1, %c0_i32_0 : i32, i32, i32
  }
  func.func @transform_1(%arg0: i32, %arg1: i32) -> (i32, i32, i32) {
    %c0_i32 = arith.constant 0 : i32
    %c0_i32_0 = arith.constant 0 : i32
    %c0_i32_1 = arith.constant 0 : i32
    return %arg0, %c0_i32, %c0_i32_0 : i32, i32, i32
  }
  func.func @transform_2(%arg0: i32, %arg1: i32) -> (i32, i32) {
    %c0_i32 = arith.constant 0 : i32
    %c0_i32_0 = arith.constant 0 : i32
    %c0_i32_1 = arith.constant 0 : i32
    return %c0_i32, %c0_i32_0 : i32, i32
  }
  func.func @transform_3(%arg0: i32, %arg1: i32) -> (i32, i32, i32) {
    %c0_i32 = arith.constant 0 : i32
    %c0_i32_0 = arith.constant 0 : i32
    return %arg0, %arg1, %c0_i32 : i32, i32, i32
  }
}

module attributes {stable_mosaic.version = 11 : i64} {
  func.func @_conv_norm_lrelu_kernel(%arg0: i32, %arg1: i32, %arg2: memref<4x16x32xbf16, #tpu.memory_space<vmem>>, %arg3: memref<1x32x512xbf16, #tpu.memory_space<vmem>>, %arg4: memref<1x384xf32, #tpu.memory_space<vmem>>, %arg5: memref<1x16x384xbf16, #tpu.memory_space<vmem>>) attributes {dimension_semantics = [#tpu.dimension_semantics<parallel>, #tpu.dimension_semantics<parallel>], iteration_bounds = array<i64: 2, 1>, scalar_prefetch = 0 : i64, scratch_operands = 0 : i64, tpu.core_type = #tpu.core_type<tc>, window_params = [{transform_indices = @transform_0, window_bounds = array<i64: 4, 16, 32>}, {transform_indices = @transform_1, window_bounds = array<i64: 1, 32, 512>}, {pipeline_mode = #tpu.pipeline_mode<synchronous>, transform_indices = @transform_2, window_bounds = array<i64: 1, 384>}, {transform_indices = @transform_3, window_bounds = array<i64: 1, 16, 384>}]} {
    %c0 = arith.constant 0 : index
    %c0_0 = arith.constant 0 : index
    %c0_1 = arith.constant 0 : index
    %0 = vector.load %arg3[%c0, %c0_0, %c0_1] : memref<1x32x512xbf16, #tpu.memory_space<vmem>>, vector<1x32x512xbf16>
    %1 = vector.shape_cast %0 : vector<1x32x512xbf16> to vector<32x512xbf16>
    %2 = vector.extract_strided_slice %1 {offsets = [0, 0], sizes = [32, 384], strides = [1, 1]} : vector<32x512xbf16> to vector<32x384xbf16>
    %c0_2 = arith.constant 0 : index
    %c0_3 = arith.constant 0 : index
    %c0_4 = arith.constant 0 : index
    %3 = vector.load %arg2[%c0_2, %c0_3, %c0_4] : memref<4x16x32xbf16, #tpu.memory_space<vmem>>, vector<1x16x32xbf16>
    %4 = vector.shape_cast %3 : vector<1x16x32xbf16> to vector<16x32xbf16>
    %cst = arith.constant dense<0.000000e+00> : vector<16x384xf32>
    %5 = tpu.matmul %4, %2, %cst {dimension_numbers = #tpu.dot_dimension_numbers<[1], [0], [0], [1], [0, 0, 1, 1], [], []>} : vector<16x32xbf16>, vector<32x384xbf16>, vector<16x384xf32> -> vector<16x384xf32>
    %6 = vector.extract_strided_slice %1 {offsets = [0, 1], sizes = [32, 384], strides = [1, 1]} : vector<32x512xbf16> to vector<32x384xbf16>
    %c1 = arith.constant 1 : index
    %c0_5 = arith.constant 0 : index
    %c0_6 = arith.constant 0 : index
    %7 = vector.load %arg2[%c1, %c0_5, %c0_6] : memref<4x16x32xbf16, #tpu.memory_space<vmem>>, vector<1x16x32xbf16>
    %8 = vector.shape_cast %7 : vector<1x16x32xbf16> to vector<16x32xbf16>
    %cst_7 = arith.constant dense<0.000000e+00> : vector<16x384xf32>
    %9 = tpu.matmul %8, %6, %cst_7 {dimension_numbers = #tpu.dot_dimension_numbers<[1], [0], [0], [1], [0, 0, 1, 1], [], []>} : vector<16x32xbf16>, vector<32x384xbf16>, vector<16x384xf32> -> vector<16x384xf32>
    %10 = arith.addf %5, %9 : vector<16x384xf32>
    %11 = vector.extract_strided_slice %1 {offsets = [0, 17], sizes = [32, 384], strides = [1, 1]} : vector<32x512xbf16> to vector<32x384xbf16>
    %c2 = arith.constant 2 : index
    %c0_8 = arith.constant 0 : index
    %c0_9 = arith.constant 0 : index
    %12 = vector.load %arg2[%c2, %c0_8, %c0_9] : memref<4x16x32xbf16, #tpu.memory_space<vmem>>, vector<1x16x32xbf16>
    %13 = vector.shape_cast %12 : vector<1x16x32xbf16> to vector<16x32xbf16>
    %cst_10 = arith.constant dense<0.000000e+00> : vector<16x384xf32>
    %14 = tpu.matmul %13, %11, %cst_10 {dimension_numbers = #tpu.dot_dimension_numbers<[1], [0], [0], [1], [0, 0, 1, 1], [], []>} : vector<16x32xbf16>, vector<32x384xbf16>, vector<16x384xf32> -> vector<16x384xf32>
    %15 = arith.addf %10, %14 : vector<16x384xf32>
    %16 = vector.extract_strided_slice %1 {offsets = [0, 18], sizes = [32, 384], strides = [1, 1]} : vector<32x512xbf16> to vector<32x384xbf16>
    %c3 = arith.constant 3 : index
    %c0_11 = arith.constant 0 : index
    %c0_12 = arith.constant 0 : index
    %17 = vector.load %arg2[%c3, %c0_11, %c0_12] : memref<4x16x32xbf16, #tpu.memory_space<vmem>>, vector<1x16x32xbf16>
    %18 = vector.shape_cast %17 : vector<1x16x32xbf16> to vector<16x32xbf16>
    %cst_13 = arith.constant dense<0.000000e+00> : vector<16x384xf32>
    %19 = tpu.matmul %18, %16, %cst_13 {dimension_numbers = #tpu.dot_dimension_numbers<[1], [0], [0], [1], [0, 0, 1, 1], [], []>} : vector<16x32xbf16>, vector<32x384xbf16>, vector<16x384xf32> -> vector<16x384xf32>
    %20 = arith.addf %15, %19 : vector<16x384xf32>
    %c0_14 = arith.constant 0 : index
    %c0_15 = arith.constant 0 : index
    %21 = vector.load %arg4[%c0_14, %c0_15] : memref<1x384xf32, #tpu.memory_space<vmem>>, vector<1x384xf32>
    %22 = vector.broadcast %21 : vector<1x384xf32> to vector<16x384xf32>
    %23 = arith.mulf %20, %22 : vector<16x384xf32>
    %cst_16 = arith.constant dense<0.000000e+00> : vector<16xf32>
    %24 = vector.multi_reduction <add>, %23, %cst_16 [1] : vector<16x384xf32> to vector<16xf32>
    %25 = vector.shape_cast %24 : vector<16xf32> to vector<16x1xf32>
    %cst_17 = arith.constant 3.906250e-03 : f32
    %26 = vector.broadcast %cst_17 : f32 to vector<16x1xf32>
    %27 = arith.mulf %25, %26 : vector<16x1xf32>
    %28 = arith.mulf %23, %23 : vector<16x384xf32>
    %cst_18 = arith.constant dense<0.000000e+00> : vector<16xf32>
    %29 = vector.multi_reduction <add>, %28, %cst_18 [1] : vector<16x384xf32> to vector<16xf32>
    %30 = vector.shape_cast %29 : vector<16xf32> to vector<16x1xf32>
    %cst_19 = arith.constant 3.906250e-03 : f32
    %31 = vector.broadcast %cst_19 : f32 to vector<16x1xf32>
    %32 = arith.mulf %30, %31 : vector<16x1xf32>
    %33 = arith.mulf %27, %27 : vector<16x1xf32>
    %34 = arith.subf %32, %33 : vector<16x1xf32>
    %cst_20 = arith.constant 0.000000e+00 : f32
    %35 = vector.broadcast %cst_20 : f32 to vector<16x1xf32>
    %36 = arith.maximumf %34, %35 : vector<16x1xf32>
    %cst_21 = arith.constant 9.99999974E-6 : f32
    %37 = vector.broadcast %cst_21 : f32 to vector<16x1xf32>
    %38 = arith.addf %36, %37 : vector<16x1xf32>
    %39 = math.rsqrt %38 : vector<16x1xf32>
    %40 = vector.broadcast %39 : vector<16x1xf32> to vector<16x384xf32>
    %41 = arith.mulf %23, %40 : vector<16x384xf32>
    %cst_22 = arith.constant 0.000000e+00 : f32
    %42 = vector.broadcast %cst_22 : f32 to vector<16x1xf32>
    %43 = arith.subf %42, %27 : vector<16x1xf32>
    %44 = arith.mulf %43, %39 : vector<16x1xf32>
    %45 = vector.broadcast %44 : vector<16x1xf32> to vector<16x384xf32>
    %46 = arith.addf %41, %45 : vector<16x384xf32>
    %cst_23 = arith.constant 2.000000e-01 : f32
    %47 = vector.broadcast %cst_23 : f32 to vector<16x384xf32>
    %48 = arith.mulf %46, %47 : vector<16x384xf32>
    %49 = arith.maximumf %46, %48 : vector<16x384xf32>
    %50 = arith.truncf %49 : vector<16x384xf32> to vector<16x384xbf16>
    %c0_24 = arith.constant 0 : index
    %c0_25 = arith.constant 0 : index
    %c0_26 = arith.constant 0 : index
    %51 = vector.load %arg5[%c0_24, %c0_25, %c0_26] : memref<1x16x384xbf16, #tpu.memory_space<vmem>>, vector<1x16x384xbf16>
    %52 = vector.shape_cast %51 : vector<1x16x384xbf16> to vector<16x384xbf16>
    %53 = vector.shape_cast %50 : vector<16x384xbf16> to vector<1x16x384xbf16>
    tpu.vector_store %arg5[%c0_24, %c0_25, %c0_26], %53 {strides = array<i32>} : memref<1x16x384xbf16, #tpu.memory_space<vmem>>, vector<1x16x384xbf16>,
    return
  }
  func.func @transform_0(%arg0: i32, %arg1: i32) -> (i32, i32, i32) {
    %c0_i32 = arith.constant 0 : i32
    %c0_i32_0 = arith.constant 0 : i32
    %c0_i32_1 = arith.constant 0 : i32
    return %c0_i32, %arg1, %c0_i32_0 : i32, i32, i32
  }
  func.func @transform_1(%arg0: i32, %arg1: i32) -> (i32, i32, i32) {
    %c0_i32 = arith.constant 0 : i32
    %c0_i32_0 = arith.constant 0 : i32
    %c0_i32_1 = arith.constant 0 : i32
    return %arg0, %c0_i32, %c0_i32_0 : i32, i32, i32
  }
  func.func @transform_2(%arg0: i32, %arg1: i32) -> (i32, i32) {
    %c0_i32 = arith.constant 0 : i32
    %c0_i32_0 = arith.constant 0 : i32
    %c0_i32_1 = arith.constant 0 : i32
    return %c0_i32, %c0_i32_0 : i32, i32
  }
  func.func @transform_3(%arg0: i32, %arg1: i32) -> (i32, i32, i32) {
    %c0_i32 = arith.constant 0 : i32
    %c0_i32_0 = arith.constant 0 : i32
    return %arg0, %arg1, %c0_i32 : i32, i32, i32
  }
}

module attributes {stable_mosaic.version = 11 : i64} {
  func.func @_conv_norm_lrelu_kernel(%arg0: i32, %arg1: i32, %arg2: memref<4x32x64xbf16, #tpu.memory_space<vmem>>, %arg3: memref<1x64x256xbf16, #tpu.memory_space<vmem>>, %arg4: memref<1x128xf32, #tpu.memory_space<vmem>>, %arg5: memref<1x32x128xbf16, #tpu.memory_space<vmem>>) attributes {dimension_semantics = [#tpu.dimension_semantics<parallel>, #tpu.dimension_semantics<parallel>], iteration_bounds = array<i64: 2, 1>, scalar_prefetch = 0 : i64, scratch_operands = 0 : i64, tpu.core_type = #tpu.core_type<tc>, window_params = [{transform_indices = @transform_0, window_bounds = array<i64: 4, 32, 64>}, {transform_indices = @transform_1, window_bounds = array<i64: 1, 64, 256>}, {pipeline_mode = #tpu.pipeline_mode<synchronous>, transform_indices = @transform_2, window_bounds = array<i64: 1, 128>}, {transform_indices = @transform_3, window_bounds = array<i64: 1, 32, 128>}]} {
    %c0 = arith.constant 0 : index
    %c0_0 = arith.constant 0 : index
    %c0_1 = arith.constant 0 : index
    %0 = vector.load %arg3[%c0, %c0_0, %c0_1] : memref<1x64x256xbf16, #tpu.memory_space<vmem>>, vector<1x64x256xbf16>
    %1 = vector.shape_cast %0 : vector<1x64x256xbf16> to vector<64x256xbf16>
    %2 = vector.extract_strided_slice %1 {offsets = [0, 0], sizes = [64, 128], strides = [1, 1]} : vector<64x256xbf16> to vector<64x128xbf16>
    %c0_2 = arith.constant 0 : index
    %c0_3 = arith.constant 0 : index
    %c0_4 = arith.constant 0 : index
    %3 = vector.load %arg2[%c0_2, %c0_3, %c0_4] : memref<4x32x64xbf16, #tpu.memory_space<vmem>>, vector<1x32x64xbf16>
    %4 = vector.shape_cast %3 : vector<1x32x64xbf16> to vector<32x64xbf16>
    %cst = arith.constant dense<0.000000e+00> : vector<32x128xf32>
    %5 = tpu.matmul %4, %2, %cst {dimension_numbers = #tpu.dot_dimension_numbers<[1], [0], [0], [1], [0, 0, 1, 1], [], []>} : vector<32x64xbf16>, vector<64x128xbf16>, vector<32x128xf32> -> vector<32x128xf32>
    %6 = vector.extract_strided_slice %1 {offsets = [0, 1], sizes = [64, 128], strides = [1, 1]} : vector<64x256xbf16> to vector<64x128xbf16>
    %c1 = arith.constant 1 : index
    %c0_5 = arith.constant 0 : index
    %c0_6 = arith.constant 0 : index
    %7 = vector.load %arg2[%c1, %c0_5, %c0_6] : memref<4x32x64xbf16, #tpu.memory_space<vmem>>, vector<1x32x64xbf16>
    %8 = vector.shape_cast %7 : vector<1x32x64xbf16> to vector<32x64xbf16>
    %cst_7 = arith.constant dense<0.000000e+00> : vector<32x128xf32>
    %9 = tpu.matmul %8, %6, %cst_7 {dimension_numbers = #tpu.dot_dimension_numbers<[1], [0], [0], [1], [0, 0, 1, 1], [], []>} : vector<32x64xbf16>, vector<64x128xbf16>, vector<32x128xf32> -> vector<32x128xf32>
    %10 = arith.addf %5, %9 : vector<32x128xf32>
    %11 = vector.extract_strided_slice %1 {offsets = [0, 9], sizes = [64, 128], strides = [1, 1]} : vector<64x256xbf16> to vector<64x128xbf16>
    %c2 = arith.constant 2 : index
    %c0_8 = arith.constant 0 : index
    %c0_9 = arith.constant 0 : index
    %12 = vector.load %arg2[%c2, %c0_8, %c0_9] : memref<4x32x64xbf16, #tpu.memory_space<vmem>>, vector<1x32x64xbf16>
    %13 = vector.shape_cast %12 : vector<1x32x64xbf16> to vector<32x64xbf16>
    %cst_10 = arith.constant dense<0.000000e+00> : vector<32x128xf32>
    %14 = tpu.matmul %13, %11, %cst_10 {dimension_numbers = #tpu.dot_dimension_numbers<[1], [0], [0], [1], [0, 0, 1, 1], [], []>} : vector<32x64xbf16>, vector<64x128xbf16>, vector<32x128xf32> -> vector<32x128xf32>
    %15 = arith.addf %10, %14 : vector<32x128xf32>
    %16 = vector.extract_strided_slice %1 {offsets = [0, 10], sizes = [64, 128], strides = [1, 1]} : vector<64x256xbf16> to vector<64x128xbf16>
    %c3 = arith.constant 3 : index
    %c0_11 = arith.constant 0 : index
    %c0_12 = arith.constant 0 : index
    %17 = vector.load %arg2[%c3, %c0_11, %c0_12] : memref<4x32x64xbf16, #tpu.memory_space<vmem>>, vector<1x32x64xbf16>
    %18 = vector.shape_cast %17 : vector<1x32x64xbf16> to vector<32x64xbf16>
    %cst_13 = arith.constant dense<0.000000e+00> : vector<32x128xf32>
    %19 = tpu.matmul %18, %16, %cst_13 {dimension_numbers = #tpu.dot_dimension_numbers<[1], [0], [0], [1], [0, 0, 1, 1], [], []>} : vector<32x64xbf16>, vector<64x128xbf16>, vector<32x128xf32> -> vector<32x128xf32>
    %20 = arith.addf %15, %19 : vector<32x128xf32>
    %c0_14 = arith.constant 0 : index
    %c0_15 = arith.constant 0 : index
    %21 = vector.load %arg4[%c0_14, %c0_15] : memref<1x128xf32, #tpu.memory_space<vmem>>, vector<1x128xf32>
    %22 = vector.broadcast %21 : vector<1x128xf32> to vector<32x128xf32>
    %23 = arith.mulf %20, %22 : vector<32x128xf32>
    %cst_16 = arith.constant dense<0.000000e+00> : vector<32xf32>
    %24 = vector.multi_reduction <add>, %23, %cst_16 [1] : vector<32x128xf32> to vector<32xf32>
    %25 = vector.shape_cast %24 : vector<32xf32> to vector<32x1xf32>
    %cst_17 = arith.constant 1.562500e-02 : f32
    %26 = vector.broadcast %cst_17 : f32 to vector<32x1xf32>
    %27 = arith.mulf %25, %26 : vector<32x1xf32>
    %28 = arith.mulf %23, %23 : vector<32x128xf32>
    %cst_18 = arith.constant dense<0.000000e+00> : vector<32xf32>
    %29 = vector.multi_reduction <add>, %28, %cst_18 [1] : vector<32x128xf32> to vector<32xf32>
    %30 = vector.shape_cast %29 : vector<32xf32> to vector<32x1xf32>
    %cst_19 = arith.constant 1.562500e-02 : f32
    %31 = vector.broadcast %cst_19 : f32 to vector<32x1xf32>
    %32 = arith.mulf %30, %31 : vector<32x1xf32>
    %33 = arith.mulf %27, %27 : vector<32x1xf32>
    %34 = arith.subf %32, %33 : vector<32x1xf32>
    %cst_20 = arith.constant 0.000000e+00 : f32
    %35 = vector.broadcast %cst_20 : f32 to vector<32x1xf32>
    %36 = arith.maximumf %34, %35 : vector<32x1xf32>
    %cst_21 = arith.constant 9.99999974E-6 : f32
    %37 = vector.broadcast %cst_21 : f32 to vector<32x1xf32>
    %38 = arith.addf %36, %37 : vector<32x1xf32>
    %39 = math.rsqrt %38 : vector<32x1xf32>
    %40 = vector.broadcast %39 : vector<32x1xf32> to vector<32x128xf32>
    %41 = arith.mulf %23, %40 : vector<32x128xf32>
    %cst_22 = arith.constant 0.000000e+00 : f32
    %42 = vector.broadcast %cst_22 : f32 to vector<32x1xf32>
    %43 = arith.subf %42, %27 : vector<32x1xf32>
    %44 = arith.mulf %43, %39 : vector<32x1xf32>
    %45 = vector.broadcast %44 : vector<32x1xf32> to vector<32x128xf32>
    %46 = arith.addf %41, %45 : vector<32x128xf32>
    %cst_23 = arith.constant 2.000000e-01 : f32
    %47 = vector.broadcast %cst_23 : f32 to vector<32x128xf32>
    %48 = arith.mulf %46, %47 : vector<32x128xf32>
    %49 = arith.maximumf %46, %48 : vector<32x128xf32>
    %50 = arith.truncf %49 : vector<32x128xf32> to vector<32x128xbf16>
    %c0_24 = arith.constant 0 : index
    %c0_25 = arith.constant 0 : index
    %c0_26 = arith.constant 0 : index
    %51 = vector.load %arg5[%c0_24, %c0_25, %c0_26] : memref<1x32x128xbf16, #tpu.memory_space<vmem>>, vector<1x32x128xbf16>
    %52 = vector.shape_cast %51 : vector<1x32x128xbf16> to vector<32x128xbf16>
    %53 = vector.shape_cast %50 : vector<32x128xbf16> to vector<1x32x128xbf16>
    tpu.vector_store %arg5[%c0_24, %c0_25, %c0_26], %53 {strides = array<i32>} : memref<1x32x128xbf16, #tpu.memory_space<vmem>>, vector<1x32x128xbf16>,
    return
  }
  func.func @transform_0(%arg0: i32, %arg1: i32) -> (i32, i32, i32) {
    %c0_i32 = arith.constant 0 : i32
    %c0_i32_0 = arith.constant 0 : i32
    %c0_i32_1 = arith.constant 0 : i32
    return %c0_i32, %arg1, %c0_i32_0 : i32, i32, i32
  }
  func.func @transform_1(%arg0: i32, %arg1: i32) -> (i32, i32, i32) {
    %c0_i32 = arith.constant 0 : i32
    %c0_i32_0 = arith.constant 0 : i32
    %c0_i32_1 = arith.constant 0 : i32
    return %arg0, %c0_i32, %c0_i32_0 : i32, i32, i32
  }
  func.func @transform_2(%arg0: i32, %arg1: i32) -> (i32, i32) {
    %c0_i32 = arith.constant 0 : i32
    %c0_i32_0 = arith.constant 0 : i32
    %c0_i32_1 = arith.constant 0 : i32
    return %c0_i32, %c0_i32_0 : i32, i32
  }
  func.func @transform_3(%arg0: i32, %arg1: i32) -> (i32, i32, i32) {
    %c0_i32 = arith.constant 0 : i32
    %c0_i32_0 = arith.constant 0 : i32
    return %arg0, %arg1, %c0_i32 : i32, i32, i32
  }
}

module attributes {stable_mosaic.version = 11 : i64} {
  func.func @_conv_norm_lrelu_kernel(%arg0: i32, %arg1: i32, %arg2: memref<4x64x128xbf16, #tpu.memory_space<vmem>>, %arg3: memref<1x128x256xbf16, #tpu.memory_space<vmem>>, %arg4: memref<1x128xf32, #tpu.memory_space<vmem>>, %arg5: memref<1x64x128xbf16, #tpu.memory_space<vmem>>) attributes {dimension_semantics = [#tpu.dimension_semantics<parallel>, #tpu.dimension_semantics<parallel>], iteration_bounds = array<i64: 2, 1>, scalar_prefetch = 0 : i64, scratch_operands = 0 : i64, tpu.core_type = #tpu.core_type<tc>, window_params = [{transform_indices = @transform_0, window_bounds = array<i64: 4, 64, 128>}, {transform_indices = @transform_1, window_bounds = array<i64: 1, 128, 256>}, {pipeline_mode = #tpu.pipeline_mode<synchronous>, transform_indices = @transform_2, window_bounds = array<i64: 1, 128>}, {transform_indices = @transform_3, window_bounds = array<i64: 1, 64, 128>}]} {
    %c0 = arith.constant 0 : index
    %c0_0 = arith.constant 0 : index
    %c0_1 = arith.constant 0 : index
    %0 = vector.load %arg3[%c0, %c0_0, %c0_1] : memref<1x128x256xbf16, #tpu.memory_space<vmem>>, vector<1x128x256xbf16>
    %1 = vector.shape_cast %0 : vector<1x128x256xbf16> to vector<128x256xbf16>
    %2 = vector.extract_strided_slice %1 {offsets = [0, 0], sizes = [128, 128], strides = [1, 1]} : vector<128x256xbf16> to vector<128x128xbf16>
    %c0_2 = arith.constant 0 : index
    %c0_3 = arith.constant 0 : index
    %c0_4 = arith.constant 0 : index
    %3 = vector.load %arg2[%c0_2, %c0_3, %c0_4] : memref<4x64x128xbf16, #tpu.memory_space<vmem>>, vector<1x64x128xbf16>
    %4 = vector.shape_cast %3 : vector<1x64x128xbf16> to vector<64x128xbf16>
    %cst = arith.constant dense<0.000000e+00> : vector<64x128xf32>
    %5 = tpu.matmul %4, %2, %cst {dimension_numbers = #tpu.dot_dimension_numbers<[1], [0], [0], [1], [0, 0, 1, 1], [], []>} : vector<64x128xbf16>, vector<128x128xbf16>, vector<64x128xf32> -> vector<64x128xf32>
    %6 = vector.extract_strided_slice %1 {offsets = [0, 1], sizes = [128, 128], strides = [1, 1]} : vector<128x256xbf16> to vector<128x128xbf16>
    %c1 = arith.constant 1 : index
    %c0_5 = arith.constant 0 : index
    %c0_6 = arith.constant 0 : index
    %7 = vector.load %arg2[%c1, %c0_5, %c0_6] : memref<4x64x128xbf16, #tpu.memory_space<vmem>>, vector<1x64x128xbf16>
    %8 = vector.shape_cast %7 : vector<1x64x128xbf16> to vector<64x128xbf16>
    %cst_7 = arith.constant dense<0.000000e+00> : vector<64x128xf32>
    %9 = tpu.matmul %8, %6, %cst_7 {dimension_numbers = #tpu.dot_dimension_numbers<[1], [0], [0], [1], [0, 0, 1, 1], [], []>} : vector<64x128xbf16>, vector<128x128xbf16>, vector<64x128xf32> -> vector<64x128xf32>
    %10 = arith.addf %5, %9 : vector<64x128xf32>
    %11 = vector.extract_strided_slice %1 {offsets = [0, 5], sizes = [128, 128], strides = [1, 1]} : vector<128x256xbf16> to vector<128x128xbf16>
    %c2 = arith.constant 2 : index
    %c0_8 = arith.constant 0 : index
    %c0_9 = arith.constant 0 : index
    %12 = vector.load %arg2[%c2, %c0_8, %c0_9] : memref<4x64x128xbf16, #tpu.memory_space<vmem>>, vector<1x64x128xbf16>
    %13 = vector.shape_cast %12 : vector<1x64x128xbf16> to vector<64x128xbf16>
    %cst_10 = arith.constant dense<0.000000e+00> : vector<64x128xf32>
    %14 = tpu.matmul %13, %11, %cst_10 {dimension_numbers = #tpu.dot_dimension_numbers<[1], [0], [0], [1], [0, 0, 1, 1], [], []>} : vector<64x128xbf16>, vector<128x128xbf16>, vector<64x128xf32> -> vector<64x128xf32>
    %15 = arith.addf %10, %14 : vector<64x128xf32>
    %16 = vector.extract_strided_slice %1 {offsets = [0, 6], sizes = [128, 128], strides = [1, 1]} : vector<128x256xbf16> to vector<128x128xbf16>
    %c3 = arith.constant 3 : index
    %c0_11 = arith.constant 0 : index
    %c0_12 = arith.constant 0 : index
    %17 = vector.load %arg2[%c3, %c0_11, %c0_12] : memref<4x64x128xbf16, #tpu.memory_space<vmem>>, vector<1x64x128xbf16>
    %18 = vector.shape_cast %17 : vector<1x64x128xbf16> to vector<64x128xbf16>
    %cst_13 = arith.constant dense<0.000000e+00> : vector<64x128xf32>
    %19 = tpu.matmul %18, %16, %cst_13 {dimension_numbers = #tpu.dot_dimension_numbers<[1], [0], [0], [1], [0, 0, 1, 1], [], []>} : vector<64x128xbf16>, vector<128x128xbf16>, vector<64x128xf32> -> vector<64x128xf32>
    %20 = arith.addf %15, %19 : vector<64x128xf32>
    %c0_14 = arith.constant 0 : index
    %c0_15 = arith.constant 0 : index
    %21 = vector.load %arg4[%c0_14, %c0_15] : memref<1x128xf32, #tpu.memory_space<vmem>>, vector<1x128xf32>
    %22 = vector.broadcast %21 : vector<1x128xf32> to vector<64x128xf32>
    %23 = arith.mulf %20, %22 : vector<64x128xf32>
    %cst_16 = arith.constant dense<0.000000e+00> : vector<64xf32>
    %24 = vector.multi_reduction <add>, %23, %cst_16 [1] : vector<64x128xf32> to vector<64xf32>
    %25 = vector.shape_cast %24 : vector<64xf32> to vector<64x1xf32>
    %cst_17 = arith.constant 6.250000e-02 : f32
    %26 = vector.broadcast %cst_17 : f32 to vector<64x1xf32>
    %27 = arith.mulf %25, %26 : vector<64x1xf32>
    %28 = arith.mulf %23, %23 : vector<64x128xf32>
    %cst_18 = arith.constant dense<0.000000e+00> : vector<64xf32>
    %29 = vector.multi_reduction <add>, %28, %cst_18 [1] : vector<64x128xf32> to vector<64xf32>
    %30 = vector.shape_cast %29 : vector<64xf32> to vector<64x1xf32>
    %cst_19 = arith.constant 6.250000e-02 : f32
    %31 = vector.broadcast %cst_19 : f32 to vector<64x1xf32>
    %32 = arith.mulf %30, %31 : vector<64x1xf32>
    %33 = arith.mulf %27, %27 : vector<64x1xf32>
    %34 = arith.subf %32, %33 : vector<64x1xf32>
    %cst_20 = arith.constant 0.000000e+00 : f32
    %35 = vector.broadcast %cst_20 : f32 to vector<64x1xf32>
    %36 = arith.maximumf %34, %35 : vector<64x1xf32>
    %cst_21 = arith.constant 9.99999974E-6 : f32
    %37 = vector.broadcast %cst_21 : f32 to vector<64x1xf32>
    %38 = arith.addf %36, %37 : vector<64x1xf32>
    %39 = math.rsqrt %38 : vector<64x1xf32>
    %40 = vector.broadcast %39 : vector<64x1xf32> to vector<64x128xf32>
    %41 = arith.mulf %23, %40 : vector<64x128xf32>
    %cst_22 = arith.constant 0.000000e+00 : f32
    %42 = vector.broadcast %cst_22 : f32 to vector<64x1xf32>
    %43 = arith.subf %42, %27 : vector<64x1xf32>
    %44 = arith.mulf %43, %39 : vector<64x1xf32>
    %45 = vector.broadcast %44 : vector<64x1xf32> to vector<64x128xf32>
    %46 = arith.addf %41, %45 : vector<64x128xf32>
    %cst_23 = arith.constant 2.000000e-01 : f32
    %47 = vector.broadcast %cst_23 : f32 to vector<64x128xf32>
    %48 = arith.mulf %46, %47 : vector<64x128xf32>
    %49 = arith.maximumf %46, %48 : vector<64x128xf32>
    %50 = arith.truncf %49 : vector<64x128xf32> to vector<64x128xbf16>
    %c0_24 = arith.constant 0 : index
    %c0_25 = arith.constant 0 : index
    %c0_26 = arith.constant 0 : index
    %51 = vector.load %arg5[%c0_24, %c0_25, %c0_26] : memref<1x64x128xbf16, #tpu.memory_space<vmem>>, vector<1x64x128xbf16>
    %52 = vector.shape_cast %51 : vector<1x64x128xbf16> to vector<64x128xbf16>
    %53 = vector.shape_cast %50 : vector<64x128xbf16> to vector<1x64x128xbf16>
    tpu.vector_store %arg5[%c0_24, %c0_25, %c0_26], %53 {strides = array<i32>} : memref<1x64x128xbf16, #tpu.memory_space<vmem>>, vector<1x64x128xbf16>,
    return
  }
  func.func @transform_0(%arg0: i32, %arg1: i32) -> (i32, i32, i32) {
    %c0_i32 = arith.constant 0 : i32
    %c0_i32_0 = arith.constant 0 : i32
    %c0_i32_1 = arith.constant 0 : i32
    return %c0_i32, %arg1, %c0_i32_0 : i32, i32, i32
  }
  func.func @transform_1(%arg0: i32, %arg1: i32) -> (i32, i32, i32) {
    %c0_i32 = arith.constant 0 : i32
    %c0_i32_0 = arith.constant 0 : i32
    %c0_i32_1 = arith.constant 0 : i32
    return %arg0, %c0_i32, %c0_i32_0 : i32, i32, i32
  }
  func.func @transform_2(%arg0: i32, %arg1: i32) -> (i32, i32) {
    %c0_i32 = arith.constant 0 : i32
    %c0_i32_0 = arith.constant 0 : i32
    %c0_i32_1 = arith.constant 0 : i32
    return %c0_i32, %c0_i32_0 : i32, i32
  }
  func.func @transform_3(%arg0: i32, %arg1: i32) -> (i32, i32, i32) {
    %c0_i32 = arith.constant 0 : i32
    %c0_i32_0 = arith.constant 0 : i32
    return %arg0, %arg1, %c0_i32 : i32, i32, i32
  }
}

module attributes {stable_mosaic.version = 11 : i64} {
  func.func @_conv_norm_lrelu_kernel(%arg0: i32, %arg1: i32, %arg2: memref<8x16x128xbf16, #tpu.memory_space<vmem>>, %arg3: memref<1x128x256xbf16, #tpu.memory_space<vmem>>, %arg4: memref<1x128xf32, #tpu.memory_space<vmem>>, %arg5: memref<1x16x128xf32, #tpu.memory_space<vmem>>) attributes {dimension_semantics = [#tpu.dimension_semantics<parallel>, #tpu.dimension_semantics<parallel>], iteration_bounds = array<i64: 2, 1>, scalar_prefetch = 0 : i64, scratch_operands = 0 : i64, tpu.core_type = #tpu.core_type<tc>, window_params = [{transform_indices = @transform_0, window_bounds = array<i64: 8, 16, 128>}, {transform_indices = @transform_1, window_bounds = array<i64: 1, 128, 256>}, {pipeline_mode = #tpu.pipeline_mode<synchronous>, transform_indices = @transform_2, window_bounds = array<i64: 1, 128>}, {transform_indices = @transform_3, window_bounds = array<i64: 1, 16, 128>}]} {
    %c0 = arith.constant 0 : index
    %c0_0 = arith.constant 0 : index
    %c0_1 = arith.constant 0 : index
    %0 = vector.load %arg3[%c0, %c0_0, %c0_1] : memref<1x128x256xbf16, #tpu.memory_space<vmem>>, vector<1x128x256xbf16>
    %1 = vector.shape_cast %0 : vector<1x128x256xbf16> to vector<128x256xbf16>
    %2 = vector.extract_strided_slice %1 {offsets = [0, 0], sizes = [128, 128], strides = [1, 1]} : vector<128x256xbf16> to vector<128x128xbf16>
    %c0_2 = arith.constant 0 : index
    %c0_3 = arith.constant 0 : index
    %c0_4 = arith.constant 0 : index
    %3 = vector.load %arg2[%c0_2, %c0_3, %c0_4] : memref<8x16x128xbf16, #tpu.memory_space<vmem>>, vector<1x16x128xbf16>
    %4 = vector.shape_cast %3 : vector<1x16x128xbf16> to vector<16x128xbf16>
    %cst = arith.constant dense<0.000000e+00> : vector<16x128xf32>
    %5 = tpu.matmul %4, %2, %cst {dimension_numbers = #tpu.dot_dimension_numbers<[1], [0], [0], [1], [0, 0, 1, 1], [], []>} : vector<16x128xbf16>, vector<128x128xbf16>, vector<16x128xf32> -> vector<16x128xf32>
    %6 = vector.extract_strided_slice %1 {offsets = [0, 1], sizes = [128, 128], strides = [1, 1]} : vector<128x256xbf16> to vector<128x128xbf16>
    %c1 = arith.constant 1 : index
    %c0_5 = arith.constant 0 : index
    %c0_6 = arith.constant 0 : index
    %7 = vector.load %arg2[%c1, %c0_5, %c0_6] : memref<8x16x128xbf16, #tpu.memory_space<vmem>>, vector<1x16x128xbf16>
    %8 = vector.shape_cast %7 : vector<1x16x128xbf16> to vector<16x128xbf16>
    %cst_7 = arith.constant dense<0.000000e+00> : vector<16x128xf32>
    %9 = tpu.matmul %8, %6, %cst_7 {dimension_numbers = #tpu.dot_dimension_numbers<[1], [0], [0], [1], [0, 0, 1, 1], [], []>} : vector<16x128xbf16>, vector<128x128xbf16>, vector<16x128xf32> -> vector<16x128xf32>
    %10 = arith.addf %5, %9 : vector<16x128xf32>
    %11 = vector.extract_strided_slice %1 {offsets = [0, 2], sizes = [128, 128], strides = [1, 1]} : vector<128x256xbf16> to vector<128x128xbf16>
    %c2 = arith.constant 2 : index
    %c0_8 = arith.constant 0 : index
    %c0_9 = arith.constant 0 : index
    %12 = vector.load %arg2[%c2, %c0_8, %c0_9] : memref<8x16x128xbf16, #tpu.memory_space<vmem>>, vector<1x16x128xbf16>
    %13 = vector.shape_cast %12 : vector<1x16x128xbf16> to vector<16x128xbf16>
    %cst_10 = arith.constant dense<0.000000e+00> : vector<16x128xf32>
    %14 = tpu.matmul %13, %11, %cst_10 {dimension_numbers = #tpu.dot_dimension_numbers<[1], [0], [0], [1], [0, 0, 1, 1], [], []>} : vector<16x128xbf16>, vector<128x128xbf16>, vector<16x128xf32> -> vector<16x128xf32>
    %15 = arith.addf %10, %14 : vector<16x128xf32>
    %16 = vector.extract_strided_slice %1 {offsets = [0, 3], sizes = [128, 128], strides = [1, 1]} : vector<128x256xbf16> to vector<128x128xbf16>
    %c3 = arith.constant 3 : index
    %c0_11 = arith.constant 0 : index
    %c0_12 = arith.constant 0 : index
    %17 = vector.load %arg2[%c3, %c0_11, %c0_12] : memref<8x16x128xbf16, #tpu.memory_space<vmem>>, vector<1x16x128xbf16>
    %18 = vector.shape_cast %17 : vector<1x16x128xbf16> to vector<16x128xbf16>
    %cst_13 = arith.constant dense<0.000000e+00> : vector<16x128xf32>
    %19 = tpu.matmul %18, %16, %cst_13 {dimension_numbers = #tpu.dot_dimension_numbers<[1], [0], [0], [1], [0, 0, 1, 1], [], []>} : vector<16x128xbf16>, vector<128x128xbf16>, vector<16x128xf32> -> vector<16x128xf32>
    %20 = arith.addf %15, %19 : vector<16x128xf32>
    %21 = vector.extract_strided_slice %1 {offsets = [0, 8], sizes = [128, 128], strides = [1, 1]} : vector<128x256xbf16> to vector<128x128xbf16>
    %c4 = arith.constant 4 : index
    %c0_14 = arith.constant 0 : index
    %c0_15 = arith.constant 0 : index
    %22 = vector.load %arg2[%c4, %c0_14, %c0_15] : memref<8x16x128xbf16, #tpu.memory_space<vmem>>, vector<1x16x128xbf16>
    %23 = vector.shape_cast %22 : vector<1x16x128xbf16> to vector<16x128xbf16>
    %cst_16 = arith.constant dense<0.000000e+00> : vector<16x128xf32>
    %24 = tpu.matmul %23, %21, %cst_16 {dimension_numbers = #tpu.dot_dimension_numbers<[1], [0], [0], [1], [0, 0, 1, 1], [], []>} : vector<16x128xbf16>, vector<128x128xbf16>, vector<16x128xf32> -> vector<16x128xf32>
    %25 = arith.addf %20, %24 : vector<16x128xf32>
    %26 = vector.extract_strided_slice %1 {offsets = [0, 9], sizes = [128, 128], strides = [1, 1]} : vector<128x256xbf16> to vector<128x128xbf16>
    %c5 = arith.constant 5 : index
    %c0_17 = arith.constant 0 : index
    %c0_18 = arith.constant 0 : index
    %27 = vector.load %arg2[%c5, %c0_17, %c0_18] : memref<8x16x128xbf16, #tpu.memory_space<vmem>>, vector<1x16x128xbf16>
    %28 = vector.shape_cast %27 : vector<1x16x128xbf16> to vector<16x128xbf16>
    %cst_19 = arith.constant dense<0.000000e+00> : vector<16x128xf32>
    %29 = tpu.matmul %28, %26, %cst_19 {dimension_numbers = #tpu.dot_dimension_numbers<[1], [0], [0], [1], [0, 0, 1, 1], [], []>} : vector<16x128xbf16>, vector<128x128xbf16>, vector<16x128xf32> -> vector<16x128xf32>
    %30 = arith.addf %25, %29 : vector<16x128xf32>
    %31 = vector.extract_strided_slice %1 {offsets = [0, 10], sizes = [128, 128], strides = [1, 1]} : vector<128x256xbf16> to vector<128x128xbf16>
    %c6 = arith.constant 6 : index
    %c0_20 = arith.constant 0 : index
    %c0_21 = arith.constant 0 : index
    %32 = vector.load %arg2[%c6, %c0_20, %c0_21] : memref<8x16x128xbf16, #tpu.memory_space<vmem>>, vector<1x16x128xbf16>
    %33 = vector.shape_cast %32 : vector<1x16x128xbf16> to vector<16x128xbf16>
    %cst_22 = arith.constant dense<0.000000e+00> : vector<16x128xf32>
    %34 = tpu.matmul %33, %31, %cst_22 {dimension_numbers = #tpu.dot_dimension_numbers<[1], [0], [0], [1], [0, 0, 1, 1], [], []>} : vector<16x128xbf16>, vector<128x128xbf16>, vector<16x128xf32> -> vector<16x128xf32>
    %35 = arith.addf %30, %34 : vector<16x128xf32>
    %36 = vector.extract_strided_slice %1 {offsets = [0, 11], sizes = [128, 128], strides = [1, 1]} : vector<128x256xbf16> to vector<128x128xbf16>
    %c7 = arith.constant 7 : index
    %c0_23 = arith.constant 0 : index
    %c0_24 = arith.constant 0 : index
    %37 = vector.load %arg2[%c7, %c0_23, %c0_24] : memref<8x16x128xbf16, #tpu.memory_space<vmem>>, vector<1x16x128xbf16>
    %38 = vector.shape_cast %37 : vector<1x16x128xbf16> to vector<16x128xbf16>
    %cst_25 = arith.constant dense<0.000000e+00> : vector<16x128xf32>
    %39 = tpu.matmul %38, %36, %cst_25 {dimension_numbers = #tpu.dot_dimension_numbers<[1], [0], [0], [1], [0, 0, 1, 1], [], []>} : vector<16x128xbf16>, vector<128x128xbf16>, vector<16x128xf32> -> vector<16x128xf32>
    %40 = arith.addf %35, %39 : vector<16x128xf32>
    %c0_26 = arith.constant 0 : index
    %c0_27 = arith.constant 0 : index
    %c0_28 = arith.constant 0 : index
    %41 = vector.load %arg5[%c0_26, %c0_27, %c0_28] : memref<1x16x128xf32, #tpu.memory_space<vmem>>, vector<1x16x128xf32>
    %42 = vector.shape_cast %41 : vector<1x16x128xf32> to vector<16x128xf32>
    %43 = vector.shape_cast %40 : vector<16x128xf32> to vector<1x16x128xf32>
    tpu.vector_store %arg5[%c0_26, %c0_27, %c0_28], %43 {strides = array<i32>} : memref<1x16x128xf32, #tpu.memory_space<vmem>>, vector<1x16x128xf32>,
    return
  }
  func.func @transform_0(%arg0: i32, %arg1: i32) -> (i32, i32, i32) {
    %c0_i32 = arith.constant 0 : i32
    %c0_i32_0 = arith.constant 0 : i32
    %c0_i32_1 = arith.constant 0 : i32
    return %c0_i32, %arg1, %c0_i32_0 : i32, i32, i32
  }
  func.func @transform_1(%arg0: i32, %arg1: i32) -> (i32, i32, i32) {
    %c0_i32 = arith.constant 0 : i32
    %c0_i32_0 = arith.constant 0 : i32
    %c0_i32_1 = arith.constant 0 : i32
    return %arg0, %c0_i32, %c0_i32_0 : i32, i32, i32
  }
  func.func @transform_2(%arg0: i32, %arg1: i32) -> (i32, i32) {
    %c0_i32 = arith.constant 0 : i32
    %c0_i32_0 = arith.constant 0 : i32
    %c0_i32_1 = arith.constant 0 : i32
    return %c0_i32, %c0_i32_0 : i32, i32
  }
  func.func @transform_3(%arg0: i32, %arg1: i32) -> (i32, i32, i32) {
    %c0_i32 = arith.constant 0 : i32
    %c0_i32_0 = arith.constant 0 : i32
    return %arg0, %arg1, %c0_i32 : i32, i32, i32
  }
}

</mosaic_0001>

<llo_original>
// kernel: dnpf_forward.5
$region0: #{dnpf_forward.5}
  #allocation0 [shape = 'u32[]', space=smem, size = 0x4, offset = 0x4, fixed_abs, tag = 'smem constant byte address 0x4 - core index']
  #allocation1 [shape = 'u32[144,128]{1,0:T(1,128)}', space=vmem, size = 0x12000, scoped, tag = 'internal scratch']
  %s0 = inlined_call_operand.vmem [shape: bf16[4,16,4], index: 0, kind: input, shape index: {}]
  %s1 = inlined_call_operand.vmem [shape: bf16[2,4,1280], index: 1, kind: input, shape index: {}]
  %s2 = inlined_call_operand.vmem [shape: f32[1,1152], index: 2, kind: input, shape index: {}]
  %s3 = inlined_call_operand.vmem [shape: bf16[2,16,1152], index: 3, kind: output, shape index: {}]
  %s4 = sld [smem:[#allocation0]]
  $region45: #{dnpf_forward.5} parent=0
    _
  %s6 = ssub.s32 1, %s4
  %s7 = scalar_select 0, %s6, %s4
  loop: start=0, step=1, limit=4
  $region2: #{dnpf_forward.5} parent=0 // loop_pre_header
    _
  $region3: #{dnpf_forward.5} parent=0 // loop_header
    %s9 = sphi 0, %s13
    %p10 = scmp.ge.s32.totalorder %s9, 4
    %s16 = sphi 0, %s28
    %s17 = sphi 0, %s24
    %s18 = sphi 0, %s16
    %s19 = sphi 0, %s17
    %s20 = sphi 0, %s18
    %s21 = sphi 0, %s19
    %s31 = sphi 0, %s33
    %s34 = sphi 0, %s31
    %s35 = sphi 0, %s34
    %s51 = sphi 0, %s35
    %s57 = sphi 0, %s59
    %s60 = sphi 0, %s57
    %s61 = sphi 0, %s60
    %s77 = sphi 0, %s61
    %s81 = sphi 0, %s81
    %s83 = sphi 0, %s81
    %s84 = sphi 0, %s83
    %s98 = sphi 0, %s84
    %s106 = sphi 0, %s108
    %s109 = sphi 0, %s106
    %s110 = sphi 0, %s109
    %s126 = sphi 0, %s110
  $region4: #{dnpf_forward.5} parent=0 // loop_header_branch
    %12 = sbr.rel (%p10) target = $region8
  $region5: #{dnpf_forward.5} parent=0 // loop_body
    %s14 = ssub.s32 %s9, 1
    %s15 = ssub.s32 %s9, 2
    %s22 = sadd.s32 1, %s17
    %p23 = scmp.ge.s32.totalorder %s22, 1
    %s24 = scalar_select %p23, 0, %s22
    %s25 = sadd.s32 1, %s16
    %s26 = scalar_select %p23, %s25, %s16
    %p27 = scmp.ge.s32.totalorder %s26, 2
    %s28 = scalar_select %p27, 0, %s26
    %s29 = ssub.s32 %s17, %s24
    %p30 = scmp.eq.s32.totalorder %s29, 0
    %s32 = sadd.s32 %s31, 1
    %s33 = scalar_select %p30, %s31, %s32
    %p36 = pneg %p30
    %p37 = scmp.eq.s32.totalorder %s9, 1
    %p38 = por %p36, %p37
    %p39 = scmp.ne.s32.totalorder %s31, %s34
    %p40 = scmp.eq.s32.totalorder %s9, 0
    %p41 = por %p39, %p40
    %p42 = scmp.ne.s32.totalorder %s31, %s34
    %p43 = scmp.eq.s32.totalorder %s14, 1
    %p44 = por %p42, %p43
    %p45 = scmp.ne.s32.totalorder %s34, %s35
    %p46 = scmp.eq.s32.totalorder %s14, 0
    %p47 = por %p45, %p46
    %p48 = scmp.ne.s32.totalorder %s34, %s35
    %p49 = scmp.eq.s32.totalorder %s15, 1
    %p50 = por %p48, %p49
    %p52 = scmp.ne.s32.totalorder %s35, %s51
    %p53 = scmp.eq.s32.totalorder %s15, 0
    %p54 = por %p52, %p53
    %s55 = ssub.s32 %s16, %s28
    %p56 = scmp.eq.s32.totalorder %s55, 0
    %s58 = sadd.s32 %s57, 1
    %s59 = scalar_select %p56, %s57, %s58
    %p62 = pneg %p56
    %p63 = scmp.eq.s32.totalorder %s9, 1
    %p64 = por %p62, %p63
    %p65 = scmp.ne.s32.totalorder %s57, %s60
    %p66 = scmp.eq.s32.totalorder %s9, 0
    %p67 = por %p65, %p66
    %p68 = scmp.ne.s32.totalorder %s57, %s60
    %p69 = scmp.eq.s32.totalorder %s14, 1
    %p70 = por %p68, %p69
    %p71 = scmp.ne.s32.totalorder %s60, %s61
    %p72 = scmp.eq.s32.totalorder %s14, 0
    %p73 = por %p71, %p72
    %p74 = scmp.ne.s32.totalorder %s60, %s61
    %p75 = scmp.eq.s32.totalorder %s15, 1
    %p76 = por %p74, %p75
    %p78 = scmp.ne.s32.totalorder %s61, %s77
    %p79 = scmp.eq.s32.totalorder %s15, 0
    %p80 = por %p78, %p79
    %s82 = sadd.s32 %s81, 1
    %p85 = scmp.eq.s32.totalorder %s9, 1
    %p86 = scmp.ne.s32.totalorder %s81, %s83
    %p87 = scmp.eq.s32.totalorder %s9, 0
    %p88 = por %p86, %p87
    %p89 = scmp.ne.s32.totalorder %s81, %s83
    %p90 = scmp.eq.s32.totalorder %s14, 1
    %p91 = por %p89, %p90
    %p92 = scmp.ne.s32.totalorder %s83, %s84
    %p93 = scmp.eq.s32.totalorder %s14, 0
    %p94 = por %p92, %p93
    %p95 = scmp.ne.s32.totalorder %s83, %s84
    %p96 = scmp.eq.s32.totalorder %s15, 1
    %p97 = por %p95, %p96
    %p99 = scmp.ne.s32.totalorder %s84, %s98
    %p100 = scmp.eq.s32.totalorder %s15, 0
    %p101 = por %p99, %p100
    %s102 = ssub.s32 %s16, %s28
    %s103 = ssub.s32 %s17, %s24
    %s104 = sor.u32 %s102, %s103
    %p105 = scmp.eq.s32.totalorder %s104, 0
    %s107 = sadd.s32 %s106, 1
    %s108 = scalar_select %p105, %s106, %s107
    %p111 = pneg %p105
    %p112 = scmp.eq.s32.totalorder %s9, 1
    %p113 = por %p111, %p112
    %p114 = scmp.ne.s32.totalorder %s106, %s109
    %p115 = scmp.eq.s32.totalorder %s9, 0
    %p116 = por %p114, %p115
    %p117 = scmp.ne.s32.totalorder %s106, %s109
    %p118 = scmp.eq.s32.totalorder %s14, 1
    %p119 = por %p117, %p118
    %p120 = scmp.ne.s32.totalorder %s109, %s110
    %p121 = scmp.eq.s32.totalorder %s14, 0
    %p122 = por %p120, %p121
    %p123 = scmp.ne.s32.totalorder %s109, %s110
    %p124 = scmp.eq.s32.totalorder %s15, 1
    %p125 = por %p123, %p124
    %p127 = scmp.ne.s32.totalorder %s110, %s126
    %p128 = scmp.eq.s32.totalorder %s15, 0
    %p129 = por %p127, %p128
    %p130 = scmp.le.s32.totalorder 1, %s9
    %p131 = scmp.lt.s32.totalorder %s9, 3
    %p132 = pnand %p130, %p131
    %p133 = pneg %p132
    // Predicated region
    $region9: #{dnpf_forward.5} parent=5 // pred_check
      _
    $region10: #{dnpf_forward.5} parent=5 // pred_check_branch
      %135 = sbr.rel (%p132) target = $region12
    $region11: #{dnpf_forward.5} parent=5 // pred_region
      %s136 = ssub.s32 %s9, 1
      // Predicated region
      $region13: #{dnpf_forward.5} parent=11 // pred_check
        %p137 = pneg %p47
      $region14: #{dnpf_forward.5} parent=11 // pred_check_branch
        %139 = sbr.rel (%p137) target = $region16
      $region15: #{dnpf_forward.5} parent=11 // pred_region
        %s140 = smul.u32 2, %s19
        %p141 = scmp.lt.s32.totalorder %s140, 1
        %s142 = scalar_select %p141, %s140, 1
        %s143 = smul.addr %s142, 4
        %s144 = scalar_lea.vmem %s0, %s143
        %s145 = smul.u32 2, %s19
      $region16: #{dnpf_forward.5} parent=11 // pred_fallthru
        _
      // Predicated region
      $region17: #{dnpf_forward.5} parent=11 // pred_check
        %p146 = pneg %p94
      $region18: #{dnpf_forward.5} parent=11 // pred_check_branch
        %148 = sbr.rel (%p146) target = $region20
      $region19: #{dnpf_forward.5} parent=11 // pred_region
        _
      $region20: #{dnpf_forward.5} parent=11 // pred_fallthru
        _
    $region12: #{dnpf_forward.5} parent=5 // pred_fallthru
      _
    %p149 = scmp.lt.s32.totalorder %s9, 2
    // Predicated region
    $region21: #{dnpf_forward.5} parent=5 // pred_check
      %p150 = pneg %p149
    $region22: #{dnpf_forward.5} parent=5 // pred_check_branch
      %152 = sbr.rel (%p150) target = $region24
    $region23: #{dnpf_forward.5} parent=5 // pred_region
      // Predicated region
      $region25: #{dnpf_forward.5} parent=23 // pred_check
        %p153 = pneg %p67
      $region26: #{dnpf_forward.5} parent=23 // pred_check_branch
        %155 = sbr.rel (%p153) target = $region28
      $region27: #{dnpf_forward.5} parent=23 // pred_region
        %p156 = scmp.lt.s32.totalorder %s16, 1
        %s157 = scalar_select %p156, %s16, 1
        %s158 = smul.addr %s157, 10
        %s159 = smul.addr %s158, 2
        %s160 = scalar_lea.vmem %s1, %s159
      $region28: #{dnpf_forward.5} parent=23 // pred_fallthru
        _
    $region24: #{dnpf_forward.5} parent=5 // pred_fallthru
      _
    %p161 = scmp.le.s32.totalorder 1, %s9
    %p162 = scmp.lt.s32.totalorder %s9, 3
    %p163 = pnand %p161, %p162
    %p164 = pneg %p163
    // Predicated region
    $region29: #{dnpf_forward.5} parent=5 // pred_check
      _
    $region30: #{dnpf_forward.5} parent=5 // pred_check_branch
      %166 = sbr.rel (%p163) target = $region32
    $region31: #{dnpf_forward.5} parent=5 // pred_region
      %s167 = ssub.s32 %s9, 1
      %s168 = smul.u32 2, %s19
      %p169 = scmp.lt.s32.totalorder %s168, 1
      %s170 = scalar_select %p169, %s168, 1
      %s171 = smul.addr %s170, 4
      %s172 = scalar_lea.vmem %s0, %s171
      %p173 = pneg %p47
      %p174 = pneg %p44
      %p175 = scmp.lt.s32.totalorder %s18, 1
      %s176 = scalar_select %p175, %s18, 1
      %s177 = smul.addr %s176, 10
      %s178 = smul.addr %s177, 2
      %s179 = scalar_lea.vmem %s1, %s178
      %p180 = pneg %p73
      %p181 = pneg %p70
      %p182 = pneg %p94
      %p183 = pneg %p91
      %p184 = pneg %p122
      %p185 = pneg %p119
      %s186 = smul.u32 2, %s19
      %p187 = scmp.lt.s32.totalorder %s18, 1
      %s188 = scalar_select %p187, %s18, 1
      %p189 = scmp.lt.s32.totalorder %s186, 1
      %s190 = scalar_select %p189, %s186, 1
      %s191 = smul.addr %s190, 9
      %s192 = smul.addr %s188, 18
      %s193 = sadd.s32 %s191, %s192
      %s194 = smul.addr %s193, 4
      %s195 = scalar_lea.vmem %s3, %s194
      %s196 = smul.u32 2, %s19
      %p197 = scmp.lt.s32.totalorder %s196, 1
      %s198 = scalar_select %p197, %s196, 1
      %s199 = smul.addr %s198, 4
      %s200 = scalar_lea.vmem %s0, %s199
      %s201 = smul.u32 2, %s19
      %p202 = scmp.lt.s32.totalorder %s18, 1
      %s203 = scalar_select %p202, %s18, 1
      %s204 = smul.addr %s203, 10
      %s205 = smul.addr %s204, 2
      %s206 = scalar_lea.vmem %s1, %s205
      %s207 = smul.u32 2, %s19
      %p208 = scmp.lt.s32.totalorder %s18, 1
      %s209 = scalar_select %p208, %s18, 1
      %p210 = scmp.lt.s32.totalorder %s207, 1
      %s211 = scalar_select %p210, %s207, 1
      %s212 = smul.addr %s211, 9
      %s213 = smul.addr %s209, 18
      %s214 = sadd.s32 %s212, %s213
      %s215 = smul.addr %s214, 4
      %s216 = scalar_lea.vmem %s3, %s215
      %s217 = smul.u32 2, %s19
      %v219 = vld [vmem:[%s206] sm:$0xff]
      %v220 = vld [vmem:[%s206 + $0x8] sm:$0xff]
      %v221 = vld [vmem:[%s206 + $0x10] sm:$0xf]
      %v222 = vld [vmem:[%s200] sm:$0xf]
      %v223 = vld [vmem:[%s200 + $0x4] sm:$0xf]
      %s224 = scalar_lea.vmem %s200, 8
      %v225 = vld [vmem:[%s224] sm:$0xf]
      %v226 = vld [vmem:[%s224 + $0x4] sm:$0xf]
      %v229 = vunpack.c.l.b16 %v225
      %v230 = vunpack.c.l.b16 %v226
      %v231 = vpack.c.b16 %v230, %v229
      %v235 = vcombine.high %v219, %v219
      %v237 = vunpack.c.l.s4 1983009808
      %v238 = vunpack.c.0.s8 %v237
      %v239 = vlaneseq
      %v240 = vshrl.u32 %v239, 7
      %v241 = vsub.s32 %v238, %v240
      %v242 = vrot.slane %v219, %v241
      %v244 = vunpack.c.l.s4 1983009808
      %v245 = vunpack.c.0.s8 %v244
      %v246 = vlaneseq
      %v247 = vshrl.u32 %v246, 7
      %v248 = vsub.s32 %v245, %v247
      %v249 = vrot.slane %v235, %v248
      %v250 = vcombine.high %v242, %v242
      %v251 = vcombine.high %v249, %v249
      %v252 = vcombine.high %v220, %v220
      %v254 = vunpack.c.l.s4 1983009808
      %v255 = vunpack.c.0.s8 %v254
      %v256 = vlaneseq
      %v257 = vshrl.u32 %v256, 7
      %v258 = vsub.s32 %v255, %v257
      %v259 = vrot.slane %v220, %v258
      %v261 = vunpack.c.l.s4 1983009808
      %v262 = vunpack.c.0.s8 %v261
      %v263 = vlaneseq
      %v264 = vshrl.u32 %v263, 7
      %v265 = vsub.s32 %v262, %v264
      %v266 = vrot.slane %v252, %v265
      %v267 = vcombine.high %v259, %v259
      %v268 = vcombine.high %v266, %v266
      %v270 = vunpack.c.l.s4 1983009808
      %v271 = vunpack.c.0.s8 %v270
      %v272 = vlaneseq
      %v273 = vshrl.u32 %v272, 7
      %v274 = vsub.s32 %v271, %v273
      %v275 = vrot.slane %v221, %v274
      %v276 = vcombine.high %v275, %v275
      %277 = vrot.lane.b32.xlu0 %v242, 127
      %v278 = vpop.permute.xlu0 %277
      %279 = vrot.lane.b32.xlu0 %v250, 127
      %v280 = vpop.permute.xlu0 %279
      %281 = vrot.lane.b32.xlu0 %v249, 127
      %v282 = vpop.permute.xlu0 %281
      %283 = vrot.lane.b32.xlu0 %v251, 127
      %v284 = vpop.permute.xlu0 %283
      %285 = vrot.lane.b32.xlu0 %v259, 127
      %v286 = vpop.permute.xlu0 %285
      %287 = vrot.lane.b32.xlu0 %v267, 127
      %v288 = vpop.permute.xlu0 %287
      %289 = vrot.lane.b32.xlu0 %v266, 127
      %v290 = vpop.permute.xlu0 %289
      %291 = vrot.lane.b32.xlu0 %v268, 127
      %v292 = vpop.permute.xlu0 %291
      %293 = vrot.lane.b32.xlu0 %v275, 127
      %v294 = vpop.permute.xlu0 %293
      %295 = vrot.lane.b32.xlu0 %v276, 127
      %v296 = vpop.permute.xlu0 %295
      %vm297 = vcmask 1039360
      %v298 = vsel %vm297, %v278, %v280
      %v299 = vsel %vm297, %v280, %v282
      %v300 = vsel %vm297, %v282, %v284
      %v301 = vsel %vm297, %v284, %v286
      %v302 = vsel %vm297, %v286, %v288
      %v303 = vsel %vm297, %v288, %v290
      %v304 = vsel %vm297, %v290, %v292
      %v305 = vsel %vm297, %v292, %v294
      %v306 = vsel %vm297, %v294, %v296
      %vm307 = vcmask 31744
      %v309 = vsel %vm307, %v231, 0
      %vm311 = vcmask 1041408
      %v313 = vsel %vm311, %v298, 0
      %v316 = vsel %vm311, %v299, 0
      %v319 = vsel %vm311, %v300, 0
      %v322 = vsel %vm311, %v301, 0
      %v325 = vsel %vm311, %v302, 0
      %v328 = vsel %vm311, %v303, 0
      %v331 = vsel %vm311, %v304, 0
      %v334 = vsel %vm311, %v305, 0
      %v337 = vsel %vm311, %v306, 0
      %339 = vmatprep.subr.bf16.mxu0 0
      %340 = vmatpush1.bf16.msra.mxu0 0
      %341 = vmatprep.subr.bf16.mxu0 0
      %342 = vmatpush1.bf16.msra.mxu0 0
      %343 = vmatprep.subr.bf16.mxu0 0
      %344 = vmatpush1.bf16.msra.mxu0 0
      %345 = vmatprep.subr.bf16.mxu0 0
      %346 = vmatpush1.bf16.msra.mxu0 0
      %347 = vmatprep.subr.bf16.mxu0 0
      %348 = vmatpush1.bf16.msra.mxu0 0
      %349 = vmatprep.subr.bf16.mxu0 0
      %350 = vmatpush1.bf16.msra.mxu0 0
      %351 = vmatprep.subr.bf16.mxu0 0
      %352 = vmatpush1.bf16.msra.mxu0 0
      %353 = vmatprep.subr.bf16.mxu0 %v316
      %354 = vmatpush1.bf16.msra.mxu0 %v313
      %355 = vmatprep.subr.bf16.mxu0 0
      %356 = vmatpush2.bf16.msra.mxu0 0
      %357 = vmatprep.subr.bf16.mxu0 0
      %358 = vmatpush2.bf16.msra.mxu0 0
      %359 = vmatprep.subr.bf16.mxu0 0
      %360 = vmatpush2.bf16.msra.mxu0 0
      %361 = vmatprep.subr.bf16.mxu0 0
      %362 = vmatpush2.bf16.msra.mxu0 0
      %363 = vmatprep.subr.bf16.mxu0 0
      %364 = vmatpush2.bf16.msra.mxu0 0
      %365 = vmatprep.subr.bf16.mxu0 0
      %366 = vmatpush2.bf16.msra.mxu0 0
      %367 = vmatprep.subr.bf16.mxu0 0
      %368 = vmatpush2.bf16.msra.mxu0 0
      %369 = vmatprep.subr.bf16.mxu0 0
      %370 = vmatpush2.bf16.msra.mxu0 0
      %371 = vmatprep.mubr.bf16.mxu0 0
      %372 = vmatmul.mubr.bf16.gmra.mxu0 %v309
      %v373 = vpop.f32.mrf.mxu0
      %v374 = vadd.f32 0.0, %v373
      %v375 = vpop.f32.mrf.mxu0
      %v376 = vadd.f32 0.0, %v375
      %v377 = vpop.f32.mrf.mxu0
      %v378 = vadd.f32 0.0, %v377
      %v379 = vpop.f32.mrf.mxu0
      %v380 = vadd.f32 0.0, %v379
      %381 = vdwg.mxu0
      %382 = vmatprep.subr.bf16.mxu0 0
      %383 = vmatpush1.bf16.msra.mxu0 0
      %384 = vmatprep.subr.bf16.mxu0 0
      %385 = vmatpush1.bf16.msra.mxu0 0
      %386 = vmatprep.subr.bf16.mxu0 0
      %387 = vmatpush1.bf16.msra.mxu0 0
      %388 = vmatprep.subr.bf16.mxu0 0
      %389 = vmatpush1.bf16.msra.mxu0 0
      %390 = vmatprep.subr.bf16.mxu0 0
      %391 = vmatpush1.bf16.msra.mxu0 0
      %392 = vmatprep.subr.bf16.mxu0 0
      %393 = vmatpush1.bf16.msra.mxu0 0
      %394 = vmatprep.subr.bf16.mxu0 0
      %395 = vmatpush1.bf16.msra.mxu0 0
      %396 = vmatprep.subr.bf16.mxu0 %v322
      %397 = vmatpush1.bf16.msra.mxu0 %v319
      %398 = vmatprep.subr.bf16.mxu0 0
      %399 = vmatpush2.bf16.msra.mxu0 0
      %400 = vmatprep.subr.bf16.mxu0 0
      %401 = vmatpush2.bf16.msra.mxu0 0
      %402 = vmatprep.subr.bf16.mxu0 0
      %403 = vmatpush2.bf16.msra.mxu0 0
      %404 = vmatprep.subr.bf16.mxu0 0
      %405 = vmatpush2.bf16.msra.mxu0 0
      %406 = vmatprep.subr.bf16.mxu0 0
      %407 = vmatpush2.bf16.msra.mxu0 0
      %408 = vmatprep.subr.bf16.mxu0 0
      %409 = vmatpush2.bf16.msra.mxu0 0
      %410 = vmatprep.subr.bf16.mxu0 0
      %411 = vmatpush2.bf16.msra.mxu0 0
      %412 = vmatprep.subr.bf16.mxu0 0
      %413 = vmatpush2.bf16.msra.mxu0 0
      %414 = vmatprep.mubr.bf16.mxu0 0
      %415 = vmatmul.mubr.bf16.gmra.mxu0 %v309
      %v416 = vpop.f32.mrf.mxu0
      %v417 = vadd.f32 0.0, %v416
      %v418 = vpop.f32.mrf.mxu0
      %v419 = vadd.f32 0.0, %v418
      %v420 = vpop.f32.mrf.mxu0
      %v421 = vadd.f32 0.0, %v420
      %v422 = vpop.f32.mrf.mxu0
      %v423 = vadd.f32 0.0, %v422
      %424 = vdwg.mxu0
      %425 = vmatprep.subr.bf16.mxu0 0
      %426 = vmatpush1.bf16.msra.mxu0 0
      %427 = vmatprep.subr.bf16.mxu0 0
      %428 = vmatpush1.bf16.msra.mxu0 0
      %429 = vmatprep.subr.bf16.mxu0 0
      %430 = vmatpush1.bf16.msra.mxu0 0
      %431 = vmatprep.subr.bf16.mxu0 0
      %432 = vmatpush1.bf16.msra.mxu0 0
      %433 = vmatprep.subr.bf16.mxu0 0
      %434 = vmatpush1.bf16.msra.mxu0 0
      %435 = vmatprep.subr.bf16.mxu0 0
      %436 = vmatpush1.bf16.msra.mxu0 0
      %437 = vmatprep.subr.bf16.mxu0 0
      %438 = vmatpush1.bf16.msra.mxu0 0
      %439 = vmatprep.subr.bf16.mxu0 %v328
      %440 = vmatpush1.bf16.msra.mxu0 %v325
      %441 = vmatprep.subr.bf16.mxu0 0
      %442 = vmatpush2.bf16.msra.mxu0 0
      %443 = vmatprep.subr.bf16.mxu0 0
      %444 = vmatpush2.bf16.msra.mxu0 0
      %445 = vmatprep.subr.bf16.mxu0 0
      %446 = vmatpush2.bf16.msra.mxu0 0
      %447 = vmatprep.subr.bf16.mxu0 0
      %448 = vmatpush2.bf16.msra.mxu0 0
      %449 = vmatprep.subr.bf16.mxu0 0
      %450 = vmatpush2.bf16.msra.mxu0 0
      %451 = vmatprep.subr.bf16.mxu0 0
      %452 = vmatpush2.bf16.msra.mxu0 0
      %453 = vmatprep.subr.bf16.mxu0 0
      %454 = vmatpush2.bf16.msra.mxu0 0
      %455 = vmatprep.subr.bf16.mxu0 0
      %456 = vmatpush2.bf16.msra.mxu0 0
      %457 = vmatprep.mubr.bf16.mxu0 0
      %458 = vmatmul.mubr.bf16.gmra.mxu0 %v309
      %v459 = vpop.f32.mrf.mxu0
      %v460 = vadd.f32 0.0, %v459
      %v461 = vpop.f32.mrf.mxu0
      %v462 = vadd.f32 0.0, %v461
      %v463 = vpop.f32.mrf.mxu0
      %v464 = vadd.f32 0.0, %v463
      %v465 = vpop.f32.mrf.mxu0
      %v466 = vadd.f32 0.0, %v465
      %467 = vdwg.mxu0
      %468 = vmatprep.subr.bf16.mxu0 0
      %469 = vmatpush1.bf16.msra.mxu0 0
      %470 = vmatprep.subr.bf16.mxu0 0
      %471 = vmatpush1.bf16.msra.mxu0 0
      %472 = vmatprep.subr.bf16.mxu0 0
      %473 = vmatpush1.bf16.msra.mxu0 0
      %474 = vmatprep.subr.bf16.mxu0 0
      %475 = vmatpush1.bf16.msra.mxu0 0
      %476 = vmatprep.subr.bf16.mxu0 0
      %477 = vmatpush1.bf16.msra.mxu0 0
      %478 = vmatprep.subr.bf16.mxu0 0
      %479 = vmatpush1.bf16.msra.mxu0 0
      %480 = vmatprep.subr.bf16.mxu0 0
      %481 = vmatpush1.bf16.msra.mxu0 0
      %482 = vmatprep.subr.bf16.mxu0 %v334
      %483 = vmatpush1.bf16.msra.mxu0 %v331
      %484 = vmatprep.subr.bf16.mxu0 0
      %485 = vmatpush2.bf16.msra.mxu0 0
      %486 = vmatprep.subr.bf16.mxu0 0
      %487 = vmatpush2.bf16.msra.mxu0 0
      %488 = vmatprep.subr.bf16.mxu0 0
      %489 = vmatpush2.bf16.msra.mxu0 0
      %490 = vmatprep.subr.bf16.mxu0 0
      %491 = vmatpush2.bf16.msra.mxu0 0
      %492 = vmatprep.subr.bf16.mxu0 0
      %493 = vmatpush2.bf16.msra.mxu0 0
      %494 = vmatprep.subr.bf16.mxu0 0
      %495 = vmatpush2.bf16.msra.mxu0 0
      %496 = vmatprep.subr.bf16.mxu0 0
      %497 = vmatpush2.bf16.msra.mxu0 0
      %498 = vmatprep.subr.bf16.mxu0 0
      %499 = vmatpush2.bf16.msra.mxu0 0
      %500 = vmatprep.mubr.bf16.mxu0 0
      %501 = vmatmul.mubr.bf16.gmra.mxu0 %v309
      %v502 = vpop.f32.mrf.mxu0
      %v503 = vadd.f32 0.0, %v502
      %v504 = vpop.f32.mrf.mxu0
      %v505 = vadd.f32 0.0, %v504
      %v506 = vpop.f32.mrf.mxu0
      %v507 = vadd.f32 0.0, %v506
      %v508 = vpop.f32.mrf.mxu0
      %v509 = vadd.f32 0.0, %v508
      %510 = vdwg.mxu0
      %511 = vmatprep.subr.bf16.mxu0 0
      %512 = vmatpush1.bf16.msra.mxu0 0
      %513 = vmatprep.subr.bf16.mxu0 0
      %514 = vmatpush1.bf16.msra.mxu0 0
      %515 = vmatprep.subr.bf16.mxu0 0
      %516 = vmatpush1.bf16.msra.mxu0 0
      %517 = vmatprep.subr.bf16.mxu0 0
      %518 = vmatpush1.bf16.msra.mxu0 0
      %519 = vmatprep.subr.bf16.mxu0 0
      %520 = vmatpush1.bf16.msra.mxu0 0
      %521 = vmatprep.subr.bf16.mxu0 0
      %522 = vmatpush1.bf16.msra.mxu0 0
      %523 = vmatprep.subr.bf16.mxu0 0
      %524 = vmatpush1.bf16.msra.mxu0 0
      %525 = vmatprep.subr.bf16.mxu0 0
      %526 = vmatpush1.bf16.msra.mxu0 %v337
      %527 = vmatprep.subr.bf16.mxu0 0
      %528 = vmatpush2.bf16.msra.mxu0 0
      %529 = vmatprep.subr.bf16.mxu0 0
      %530 = vmatpush2.bf16.msra.mxu0 0
      %531 = vmatprep.subr.bf16.mxu0 0
      %532 = vmatpush2.bf16.msra.mxu0 0
      %533 = vmatprep.subr.bf16.mxu0 0
      %534 = vmatpush2.bf16.msra.mxu0 0
      %535 = vmatprep.subr.bf16.mxu0 0
      %536 = vmatpush2.bf16.msra.mxu0 0
      %537 = vmatprep.subr.bf16.mxu0 0
      %538 = vmatpush2.bf16.msra.mxu0 0
      %539 = vmatprep.subr.bf16.mxu0 0
      %540 = vmatpush2.bf16.msra.mxu0 0
      %541 = vmatprep.subr.bf16.mxu0 0
      %542 = vmatpush2.bf16.msra.mxu0 0
      %543 = vmatprep.mubr.bf16.mxu0 0
      %544 = vmatmul.mubr.bf16.gmra.mxu0 %v309
      %v545 = vpop.f32.mrf.mxu0
      %v546 = vadd.f32 0.0, %v545
      %v547 = vpop.f32.mrf.mxu0
      %v548 = vpop.f32.mrf.mxu0
      %v549 = vadd.f32 0.0, %v548
      %v550 = vpop.f32.mrf.mxu0
      %551 = vdwg.mxu0
      %v554 = vunpack.c.l.b16 %v222
      %v555 = vunpack.c.l.b16 %v223
      %v556 = vpack.c.b16 %v555, %v554
      %v558 = vsel %vm307, %v556, 0
      %v561 = vsel %vm311, %v242, 0
      %v564 = vsel %vm311, %v250, 0
      %v567 = vsel %vm311, %v249, 0
      %v570 = vsel %vm311, %v251, 0
      %v573 = vsel %vm311, %v259, 0
      %v576 = vsel %vm311, %v267, 0
      %v579 = vsel %vm311, %v266, 0
      %v582 = vsel %vm311, %v268, 0
      %v585 = vsel %vm311, %v275, 0
      %587 = vmatprep.subr.bf16.mxu0 0
      %588 = vmatpush1.bf16.msra.mxu0 0
      %589 = vmatprep.subr.bf16.mxu0 0
      %590 = vmatpush1.bf16.msra.mxu0 0
      %591 = vmatprep.subr.bf16.mxu0 0
      %592 = vmatpush1.bf16.msra.mxu0 0
      %593 = vmatprep.subr.bf16.mxu0 0
      %594 = vmatpush1.bf16.msra.mxu0 0
      %595 = vmatprep.subr.bf16.mxu0 0
      %596 = vmatpush1.bf16.msra.mxu0 0
      %597 = vmatprep.subr.bf16.mxu0 0
      %598 = vmatpush1.bf16.msra.mxu0 0
      %599 = vmatprep.subr.bf16.mxu0 0
      %600 = vmatpush1.bf16.msra.mxu0 0
      %601 = vmatprep.subr.bf16.mxu0 %v564
      %602 = vmatpush1.bf16.msra.mxu0 %v561
      %603 = vmatprep.subr.bf16.mxu0 0
      %604 = vmatpush2.bf16.msra.mxu0 0
      %605 = vmatprep.subr.bf16.mxu0 0
      %606 = vmatpush2.bf16.msra.mxu0 0
      %607 = vmatprep.subr.bf16.mxu0 0
      %608 = vmatpush2.bf16.msra.mxu0 0
      %609 = vmatprep.subr.bf16.mxu0 0
      %610 = vmatpush2.bf16.msra.mxu0 0
      %611 = vmatprep.subr.bf16.mxu0 0
      %612 = vmatpush2.bf16.msra.mxu0 0
      %613 = vmatprep.subr.bf16.mxu0 0
      %614 = vmatpush2.bf16.msra.mxu0 0
      %615 = vmatprep.subr.bf16.mxu0 0
      %616 = vmatpush2.bf16.msra.mxu0 0
      %617 = vmatprep.subr.bf16.mxu0 0
      %618 = vmatpush2.bf16.msra.mxu0 0
      %619 = vmatprep.mubr.bf16.mxu0 0
      %620 = vmatmul.mubr.bf16.gmra.mxu0 %v558
      %v621 = vpop.f32.mrf.mxu0
      %v622 = vadd.f32 %v374, %v621
      %v623 = vpop.f32.mrf.mxu0
      %v624 = vadd.f32 %v376, %v623
      %v625 = vpop.f32.mrf.mxu0
      %v626 = vadd.f32 %v378, %v625
      %v627 = vpop.f32.mrf.mxu0
      %v628 = vadd.f32 %v380, %v627
      %629 = vdwg.mxu0
      %630 = vmatprep.subr.bf16.mxu0 0
      %631 = vmatpush1.bf16.msra.mxu0 0
      %632 = vmatprep.subr.bf16.mxu0 0
      %633 = vmatpush1.bf16.msra.mxu0 0
      %634 = vmatprep.subr.bf16.mxu0 0
      %635 = vmatpush1.bf16.msra.mxu0 0
      %636 = vmatprep.subr.bf16.mxu0 0
      %637 = vmatpush1.bf16.msra.mxu0 0
      %638 = vmatprep.subr.bf16.mxu0 0
      %639 = vmatpush1.bf16.msra.mxu0 0
      %640 = vmatprep.subr.bf16.mxu0 0
      %641 = vmatpush1.bf16.msra.mxu0 0
      %642 = vmatprep.subr.bf16.mxu0 0
      %643 = vmatpush1.bf16.msra.mxu0 0
      %644 = vmatprep.subr.bf16.mxu0 %v570
      %645 = vmatpush1.bf16.msra.mxu0 %v567
      %646 = vmatprep.subr.bf16.mxu0 0
      %647 = vmatpush2.bf16.msra.mxu0 0
      %648 = vmatprep.subr.bf16.mxu0 0
      %649 = vmatpush2.bf16.msra.mxu0 0
      %650 = vmatprep.subr.bf16.mxu0 0
      %651 = vmatpush2.bf16.msra.mxu0 0
      %652 = vmatprep.subr.bf16.mxu0 0
      %653 = vmatpush2.bf16.msra.mxu0 0
      %654 = vmatprep.subr.bf16.mxu0 0
      %655 = vmatpush2.bf16.msra.mxu0 0
      %656 = vmatprep.subr.bf16.mxu0 0
      %657 = vmatpush2.bf16.msra.mxu0 0
      %658 = vmatprep.subr.bf16.mxu0 0
      %659 = vmatpush2.bf16.msra.mxu0 0
      %660 = vmatprep.subr.bf16.mxu0 0
      %661 = vmatpush2.bf16.msra.mxu0 0
      %662 = vmatprep.mubr.bf16.mxu0 0
      %663 = vmatmul.mubr.bf16.gmra.mxu0 %v558
      %v664 = vpop.f32.mrf.mxu0
      %v665 = vadd.f32 %v417, %v664
      %v666 = vpop.f32.mrf.mxu0
      %v667 = vadd.f32 %v419, %v666
      %v668 = vpop.f32.mrf.mxu0
      %v669 = vadd.f32 %v421, %v668
      %v670 = vpop.f32.mrf.mxu0
      %v671 = vadd.f32 %v423, %v670
      %672 = vdwg.mxu0
      %673 = vmatprep.subr.bf16.mxu0 0
      %674 = vmatpush1.bf16.msra.mxu0 0
      %675 = vmatprep.subr.bf16.mxu0 0
      %676 = vmatpush1.bf16.msra.mxu0 0
      %677 = vmatprep.subr.bf16.mxu0 0
      %678 = vmatpush1.bf16.msra.mxu0 0
      %679 = vmatprep.subr.bf16.mxu0 0
      %680 = vmatpush1.bf16.msra.mxu0 0
      %681 = vmatprep.subr.bf16.mxu0 0
      %682 = vmatpush1.bf16.msra.mxu0 0
      %683 = vmatprep.subr.bf16.mxu0 0
      %684 = vmatpush1.bf16.msra.mxu0 0
      %685 = vmatprep.subr.bf16.mxu0 0
      %686 = vmatpush1.bf16.msra.mxu0 0
      %687 = vmatprep.subr.bf16.mxu0 %v576
      %688 = vmatpush1.bf16.msra.mxu0 %v573
      %689 = vmatprep.subr.bf16.mxu0 0
      %690 = vmatpush2.bf16.msra.mxu0 0
      %691 = vmatprep.subr.bf16.mxu0 0
      %692 = vmatpush2.bf16.msra.mxu0 0
      %693 = vmatprep.subr.bf16.mxu0 0
      %694 = vmatpush2.bf16.msra.mxu0 0
      %695 = vmatprep.subr.bf16.mxu0 0
      %696 = vmatpush2.bf16.msra.mxu0 0
      %697 = vmatprep.subr.bf16.mxu0 0
      %698 = vmatpush2.bf16.msra.mxu0 0
      %699 = vmatprep.subr.bf16.mxu0 0
      %700 = vmatpush2.bf16.msra.mxu0 0
      %701 = vmatprep.subr.bf16.mxu0 0
      %702 = vmatpush2.bf16.msra.mxu0 0
      %703 = vmatprep.subr.bf16.mxu0 0
      %704 = vmatpush2.bf16.msra.mxu0 0
      %705 = vmatprep.mubr.bf16.mxu0 0
      %706 = vmatmul.mubr.bf16.gmra.mxu0 %v558
      %v707 = vpop.f32.mrf.mxu0
      %v708 = vadd.f32 %v460, %v707
      %v709 = vpop.f32.mrf.mxu0
      %v710 = vadd.f32 %v462, %v709
      %v711 = vpop.f32.mrf.mxu0
      %v712 = vadd.f32 %v464, %v711
      %v713 = vpop.f32.mrf.mxu0
      %v714 = vadd.f32 %v466, %v713
      %715 = vdwg.mxu0
      %716 = vmatprep.subr.bf16.mxu0 0
      %717 = vmatpush1.bf16.msra.mxu0 0
      %718 = vmatprep.subr.bf16.mxu0 0
      %719 = vmatpush1.bf16.msra.mxu0 0
      %720 = vmatprep.subr.bf16.mxu0 0
      %721 = vmatpush1.bf16.msra.mxu0 0
      %722 = vmatprep.subr.bf16.mxu0 0
      %723 = vmatpush1.bf16.msra.mxu0 0
      %724 = vmatprep.subr.bf16.mxu0 0
      %725 = vmatpush1.bf16.msra.mxu0 0
      %726 = vmatprep.subr.bf16.mxu0 0
      %727 = vmatpush1.bf16.msra.mxu0 0
      %728 = vmatprep.subr.bf16.mxu0 0
      %729 = vmatpush1.bf16.msra.mxu0 0
      %730 = vmatprep.subr.bf16.mxu0 %v582
      %731 = vmatpush1.bf16.msra.mxu0 %v579
      %732 = vmatprep.subr.bf16.mxu0 0
      %733 = vmatpush2.bf16.msra.mxu0 0
      %734 = vmatprep.subr.bf16.mxu0 0
      %735 = vmatpush2.bf16.msra.mxu0 0
      %736 = vmatprep.subr.bf16.mxu0 0
      %737 = vmatpush2.bf16.msra.mxu0 0
      %738 = vmatprep.subr.bf16.mxu0 0
      %739 = vmatpush2.bf16.msra.mxu0 0
      %740 = vmatprep.subr.bf16.mxu0 0
      %741 = vmatpush2.bf16.msra.mxu0 0
      %742 = vmatprep.subr.bf16.mxu0 0
      %743 = vmatpush2.bf16.msra.mxu0 0
      %744 = vmatprep.subr.bf16.mxu0 0
      %745 = vmatpush2.bf16.msra.mxu0 0
      %746 = vmatprep.subr.bf16.mxu0 0
      %747 = vmatpush2.bf16.msra.mxu0 0
      %748 = vmatprep.mubr.bf16.mxu0 0
      %749 = vmatmul.mubr.bf16.gmra.mxu0 %v558
      %v750 = vpop.f32.mrf.mxu0
      %v751 = vadd.f32 %v503, %v750
      %v752 = vpop.f32.mrf.mxu0
      %v753 = vadd.f32 %v505, %v752
      %v754 = vpop.f32.mrf.mxu0
      %v755 = vadd.f32 %v507, %v754
      %v756 = vpop.f32.mrf.mxu0
      %v757 = vadd.f32 %v509, %v756
      %758 = vdwg.mxu0
      %759 = vmatprep.subr.bf16.mxu0 0
      %760 = vmatpush1.bf16.msra.mxu0 0
      %761 = vmatprep.subr.bf16.mxu0 0
      %762 = vmatpush1.bf16.msra.mxu0 0
      %763 = vmatprep.subr.bf16.mxu0 0
      %764 = vmatpush1.bf16.msra.mxu0 0
      %765 = vmatprep.subr.bf16.mxu0 0
      %766 = vmatpush1.bf16.msra.mxu0 0
      %767 = vmatprep.subr.bf16.mxu0 0
      %768 = vmatpush1.bf16.msra.mxu0 0
      %769 = vmatprep.subr.bf16.mxu0 0
      %770 = vmatpush1.bf16.msra.mxu0 0
      %771 = vmatprep.subr.bf16.mxu0 0
      %772 = vmatpush1.bf16.msra.mxu0 0
      %773 = vmatprep.subr.bf16.mxu0 0
      %774 = vmatpush1.bf16.msra.mxu0 %v585
      %775 = vmatprep.subr.bf16.mxu0 0
      %776 = vmatpush2.bf16.msra.mxu0 0
      %777 = vmatprep.subr.bf16.mxu0 0
      %778 = vmatpush2.bf16.msra.mxu0 0
      %779 = vmatprep.subr.bf16.mxu0 0
      %780 = vmatpush2.bf16.msra.mxu0 0
      %781 = vmatprep.subr.bf16.mxu0 0
      %782 = vmatpush2.bf16.msra.mxu0 0
      %783 = vmatprep.subr.bf16.mxu0 0
      %784 = vmatpush2.bf16.msra.mxu0 0
      %785 = vmatprep.subr.bf16.mxu0 0
      %786 = vmatpush2.bf16.msra.mxu0 0
      %787 = vmatprep.subr.bf16.mxu0 0
      %788 = vmatpush2.bf16.msra.mxu0 0
      %789 = vmatprep.subr.bf16.mxu0 0
      %790 = vmatpush2.bf16.msra.mxu0 0
      %791 = vmatprep.mubr.bf16.mxu0 0
      %792 = vmatmul.mubr.bf16.gmra.mxu0 %v558
      %v793 = vpop.f32.mrf.mxu0
      %v794 = vadd.f32 %v546, %v793
      %v795 = vpop.f32.mrf.mxu0
      %v796 = vpop.f32.mrf.mxu0
      %v797 = vadd.f32 %v549, %v796
      %v798 = vpop.f32.mrf.mxu0
      %799 = vdwg.mxu0
      %s800 = scalar_lea.vmem %s200, 16
      %v801 = vld [vmem:[%s800] sm:$0xf]
      %v802 = vld [vmem:[%s800 + $0x4] sm:$0xf]
      %v805 = vunpack.c.l.b16 %v801
      %v806 = vunpack.c.l.b16 %v802
      %v807 = vpack.c.b16 %v806, %v805
      %808 = vrot.lane.b32.xlu0 %v242, 95
      %v809 = vpop.permute.xlu0 %808
      %810 = vrot.lane.b32.xlu0 %v250, 95
      %v811 = vpop.permute.xlu0 %810
      %812 = vrot.lane.b32.xlu0 %v249, 95
      %v813 = vpop.permute.xlu0 %812
      %814 = vrot.lane.b32.xlu0 %v251, 95
      %v815 = vpop.permute.xlu0 %814
      %816 = vrot.lane.b32.xlu0 %v259, 95
      %v817 = vpop.permute.xlu0 %816
      %818 = vrot.lane.b32.xlu0 %v267, 95
      %v819 = vpop.permute.xlu0 %818
      %820 = vrot.lane.b32.xlu0 %v266, 95
      %v821 = vpop.permute.xlu0 %820
      %822 = vrot.lane.b32.xlu0 %v268, 95
      %v823 = vpop.permute.xlu0 %822
      %824 = vrot.lane.b32.xlu0 %v275, 95
      %v825 = vpop.permute.xlu0 %824
      %826 = vrot.lane.b32.xlu0 %v276, 95
      %v827 = vpop.permute.xlu0 %826
      %vm828 = vcmask 777216
      %v829 = vsel %vm828, %v809, %v811
      %v830 = vsel %vm828, %v811, %v813
      %v831 = vsel %vm828, %v813, %v815
      %v832 = vsel %vm828, %v815, %v817
      %v833 = vsel %vm828, %v817, %v819
      %v834 = vsel %vm828, %v819, %v821
      %v835 = vsel %vm828, %v821, %v823
      %v836 = vsel %vm828, %v823, %v825
      %v837 = vsel %vm828, %v825, %v827
      %v839 = vsel %vm307, %v807, 0
      %v842 = vsel %vm311, %v829, 0
      %v845 = vsel %vm311, %v830, 0
      %v848 = vsel %vm311, %v831, 0
      %v851 = vsel %vm311, %v832, 0
      %v854 = vsel %vm311, %v833, 0
      %v857 = vsel %vm311, %v834, 0
      %v860 = vsel %vm311, %v835, 0
      %v863 = vsel %vm311, %v836, 0
      %v866 = vsel %vm311, %v837, 0
      %868 = vmatprep.subr.bf16.mxu0 0
      %869 = vmatpush1.bf16.msra.mxu0 0
      %870 = vmatprep.subr.bf16.mxu0 0
      %871 = vmatpush1.bf16.msra.mxu0 0
      %872 = vmatprep.subr.bf16.mxu0 0
      %873 = vmatpush1.bf16.msra.mxu0 0
      %874 = vmatprep.subr.bf16.mxu0 0
      %875 = vmatpush1.bf16.msra.mxu0 0
      %876 = vmatprep.subr.bf16.mxu0 0
      %877 = vmatpush1.bf16.msra.mxu0 0
      %878 = vmatprep.subr.bf16.mxu0 0
      %879 = vmatpush1.bf16.msra.mxu0 0
      %880 = vmatprep.subr.bf16.mxu0 0
      %881 = vmatpush1.bf16.msra.mxu0 0
      %882 = vmatprep.subr.bf16.mxu0 %v845
      %883 = vmatpush1.bf16.msra.mxu0 %v842
      %884 = vmatprep.subr.bf16.mxu0 0
      %885 = vmatpush2.bf16.msra.mxu0 0
      %886 = vmatprep.subr.bf16.mxu0 0
      %887 = vmatpush2.bf16.msra.mxu0 0
      %888 = vmatprep.subr.bf16.mxu0 0
      %889 = vmatpush2.bf16.msra.mxu0 0
      %890 = vmatprep.subr.bf16.mxu0 0
      %891 = vmatpush2.bf16.msra.mxu0 0
      %892 = vmatprep.subr.bf16.mxu0 0
      %893 = vmatpush2.bf16.msra.mxu0 0
      %894 = vmatprep.subr.bf16.mxu0 0
      %895 = vmatpush2.bf16.msra.mxu0 0
      %896 = vmatprep.subr.bf16.mxu0 0
      %897 = vmatpush2.bf16.msra.mxu0 0
      %898 = vmatprep.subr.bf16.mxu0 0
      %899 = vmatpush2.bf16.msra.mxu0 0
      %900 = vmatprep.mubr.bf16.mxu0 0
      %901 = vmatmul.mubr.bf16.gmra.mxu0 %v839
      %v902 = vpop.f32.mrf.mxu0
      %v903 = vadd.f32 0.0, %v902
      %v904 = vpop.f32.mrf.mxu0
      %v905 = vadd.f32 0.0, %v904
      %v906 = vpop.f32.mrf.mxu0
      %v907 = vadd.f32 0.0, %v906
      %v908 = vpop.f32.mrf.mxu0
      %v909 = vadd.f32 0.0, %v908
      %910 = vdwg.mxu0
      %911 = vmatprep.subr.bf16.mxu0 0
      %912 = vmatpush1.bf16.msra.mxu0 0
      %913 = vmatprep.subr.bf16.mxu0 0
      %914 = vmatpush1.bf16.msra.mxu0 0
      %915 = vmatprep.subr.bf16.mxu0 0
      %916 = vmatpush1.bf16.msra.mxu0 0
      %917 = vmatprep.subr.bf16.mxu0 0
      %918 = vmatpush1.bf16.msra.mxu0 0
      %919 = vmatprep.subr.bf16.mxu0 0
      %920 = vmatpush1.bf16.msra.mxu0 0
      %921 = vmatprep.subr.bf16.mxu0 0
      %922 = vmatpush1.bf16.msra.mxu0 0
      %923 = vmatprep.subr.bf16.mxu0 0
      %924 = vmatpush1.bf16.msra.mxu0 0
      %925 = vmatprep.subr.bf16.mxu0 %v851
      %926 = vmatpush1.bf16.msra.mxu0 %v848
      %927 = vmatprep.subr.bf16.mxu0 0
      %928 = vmatpush2.bf16.msra.mxu0 0
      %929 = vmatprep.subr.bf16.mxu0 0
      %930 = vmatpush2.bf16.msra.mxu0 0
      %931 = vmatprep.subr.bf16.mxu0 0
      %932 = vmatpush2.bf16.msra.mxu0 0
      %933 = vmatprep.subr.bf16.mxu0 0
      %934 = vmatpush2.bf16.msra.mxu0 0
      %935 = vmatprep.subr.bf16.mxu0 0
      %936 = vmatpush2.bf16.msra.mxu0 0
      %937 = vmatprep.subr.bf16.mxu0 0
      %938 = vmatpush2.bf16.msra.mxu0 0
      %939 = vmatprep.subr.bf16.mxu0 0
      %940 = vmatpush2.bf16.msra.mxu0 0
      %941 = vmatprep.subr.bf16.mxu0 0
      %942 = vmatpush2.bf16.msra.mxu0 0
      %943 = vmatprep.mubr.bf16.mxu0 0
      %944 = vmatmul.mubr.bf16.gmra.mxu0 %v839
      %v945 = vpop.f32.mrf.mxu0
      %v946 = vadd.f32 0.0, %v945
      %v947 = vpop.f32.mrf.mxu0
      %v948 = vadd.f32 0.0, %v947
      %v949 = vpop.f32.mrf.mxu0
      %v950 = vadd.f32 0.0, %v949
      %v951 = vpop.f32.mrf.mxu0
      %v952 = vadd.f32 0.0, %v951
      %953 = vdwg.mxu0
      %954 = vmatprep.subr.bf16.mxu0 0
      %955 = vmatpush1.bf16.msra.mxu0 0
      %956 = vmatprep.subr.bf16.mxu0 0
      %957 = vmatpush1.bf16.msra.mxu0 0
      %958 = vmatprep.subr.bf16.mxu0 0
      %959 = vmatpush1.bf16.msra.mxu0 0
      %960 = vmatprep.subr.bf16.mxu0 0
      %961 = vmatpush1.bf16.msra.mxu0 0
      %962 = vmatprep.subr.bf16.mxu0 0
      %963 = vmatpush1.bf16.msra.mxu0 0
      %964 = vmatprep.subr.bf16.mxu0 0
      %965 = vmatpush1.bf16.msra.mxu0 0
      %966 = vmatprep.subr.bf16.mxu0 0
      %967 = vmatpush1.bf16.msra.mxu0 0
      %968 = vmatprep.subr.bf16.mxu0 %v857
      %969 = vmatpush1.bf16.msra.mxu0 %v854
      %970 = vmatprep.subr.bf16.mxu0 0
      %971 = vmatpush2.bf16.msra.mxu0 0
      %972 = vmatprep.subr.bf16.mxu0 0
      %973 = vmatpush2.bf16.msra.mxu0 0
      %974 = vmatprep.subr.bf16.mxu0 0
      %975 = vmatpush2.bf16.msra.mxu0 0
      %976 = vmatprep.subr.bf16.mxu0 0
      %977 = vmatpush2.bf16.msra.mxu0 0
      %978 = vmatprep.subr.bf16.mxu0 0
      %979 = vmatpush2.bf16.msra.mxu0 0
      %980 = vmatprep.subr.bf16.mxu0 0
      %981 = vmatpush2.bf16.msra.mxu0 0
      %982 = vmatprep.subr.bf16.mxu0 0
      %983 = vmatpush2.bf16.msra.mxu0 0
      %984 = vmatprep.subr.bf16.mxu0 0
      %985 = vmatpush2.bf16.msra.mxu0 0
      %986 = vmatprep.mubr.bf16.mxu0 0
      %987 = vmatmul.mubr.bf16.gmra.mxu0 %v839
      %v988 = vpop.f32.mrf.mxu0
      %v989 = vadd.f32 0.0, %v988
      %v990 = vpop.f32.mrf.mxu0
      %v991 = vadd.f32 0.0, %v990
      %v992 = vpop.f32.mrf.mxu0
      %v993 = vadd.f32 0.0, %v992
      %v994 = vpop.f32.mrf.mxu0
      %v995 = vadd.f32 0.0, %v994
      %996 = vdwg.mxu0
      %997 = vmatprep.subr.bf16.mxu0 0
      %998 = vmatpush1.bf16.msra.mxu0 0
      %999 = vmatprep.subr.bf16.mxu0 0
      %1000 = vmatpush1.bf16.msra.mxu0 0
      %1001 = vmatprep.subr.bf16.mxu0 0
      %1002 = vmatpush1.bf16.msra.mxu0 0
      %1003 = vmatprep.subr.bf16.mxu0 0
      %1004 = vmatpush1.bf16.msra.mxu0 0
      %1005 = vmatprep.subr.bf16.mxu0 0
      %1006 = vmatpush1.bf16.msra.mxu0 0
      %1007 = vmatprep.subr.bf16.mxu0 0
      %1008 = vmatpush1.bf16.msra.mxu0 0
      %1009 = vmatprep.subr.bf16.mxu0 0
      %1010 = vmatpush1.bf16.msra.mxu0 0
      %1011 = vmatprep.subr.bf16.mxu0 %v863
      %1012 = vmatpush1.bf16.msra.mxu0 %v860
      %1013 = vmatprep.subr.bf16.mxu0 0
      %1014 = vmatpush2.bf16.msra.mxu0 0
      %1015 = vmatprep.subr.bf16.mxu0 0
      %1016 = vmatpush2.bf16.msra.mxu0 0
      %1017 = vmatprep.subr.bf16.mxu0 0
      %1018 = vmatpush2.bf16.msra.mxu0 0
      %1019 = vmatprep.subr.bf16.mxu0 0
      %1020 = vmatpush2.bf16.msra.mxu0 0
      %1021 = vmatprep.subr.bf16.mxu0 0
      %1022 = vmatpush2.bf16.msra.mxu0 0
      %1023 = vmatprep.subr.bf16.mxu0 0
      %1024 = vmatpush2.bf16.msra.mxu0 0
      %1025 = vmatprep.subr.bf16.mxu0 0
      %1026 = vmatpush2.bf16.msra.mxu0 0
      %1027 = vmatprep.subr.bf16.mxu0 0
      %1028 = vmatpush2.bf16.msra.mxu0 0
      %1029 = vmatprep.mubr.bf16.mxu0 0
      %1030 = vmatmul.mubr.bf16.gmra.mxu0 %v839
      %v1031 = vpop.f32.mrf.mxu0
      %v1032 = vadd.f32 0.0, %v1031
      %v1033 = vpop.f32.mrf.mxu0
      %v1034 = vadd.f32 0.0, %v1033
      %v1035 = vpop.f32.mrf.mxu0
      %v1036 = vadd.f32 0.0, %v1035
      %v1037 = vpop.f32.mrf.mxu0
      %v1038 = vadd.f32 0.0, %v1037
      %1039 = vdwg.mxu0
      %1040 = vmatprep.subr.bf16.mxu0 0
      %1041 = vmatpush1.bf16.msra.mxu0 0
      %1042 = vmatprep.subr.bf16.mxu0 0
      %1043 = vmatpush1.bf16.msra.mxu0 0
      %1044 = vmatprep.subr.bf16.mxu0 0
      %1045 = vmatpush1.bf16.msra.mxu0 0
      %1046 = vmatprep.subr.bf16.mxu0 0
      %1047 = vmatpush1.bf16.msra.mxu0 0
      %1048 = vmatprep.subr.bf16.mxu0 0
      %1049 = vmatpush1.bf16.msra.mxu0 0
      %1050 = vmatprep.subr.bf16.mxu0 0
      %1051 = vmatpush1.bf16.msra.mxu0 0
      %1052 = vmatprep.subr.bf16.mxu0 0
      %1053 = vmatpush1.bf16.msra.mxu0 0
      %1054 = vmatprep.subr.bf16.mxu0 0
      %1055 = vmatpush1.bf16.msra.mxu0 %v866
      %1056 = vmatprep.subr.bf16.mxu0 0
      %1057 = vmatpush2.bf16.msra.mxu0 0
      %1058 = vmatprep.subr.bf16.mxu0 0
      %1059 = vmatpush2.bf16.msra.mxu0 0
      %1060 = vmatprep.subr.bf16.mxu0 0
      %1061 = vmatpush2.bf16.msra.mxu0 0
      %1062 = vmatprep.subr.bf16.mxu0 0
      %1063 = vmatpush2.bf16.msra.mxu0 0
      %1064 = vmatprep.subr.bf16.mxu0 0
      %1065 = vmatpush2.bf16.msra.mxu0 0
      %1066 = vmatprep.subr.bf16.mxu0 0
      %1067 = vmatpush2.bf16.msra.mxu0 0
      %1068 = vmatprep.subr.bf16.mxu0 0
      %1069 = vmatpush2.bf16.msra.mxu0 0
      %1070 = vmatprep.subr.bf16.mxu0 0
      %1071 = vmatpush2.bf16.msra.mxu0 0
      %1072 = vmatprep.mubr.bf16.mxu0 0
      %1073 = vmatmul.mubr.bf16.gmra.mxu0 %v839
      %v1074 = vpop.f32.mrf.mxu0
      %v1075 = vadd.f32 0.0, %v1074
      %v1076 = vpop.f32.mrf.mxu0
      %v1077 = vpop.f32.mrf.mxu0
      %v1078 = vadd.f32 0.0, %v1077
      %v1079 = vpop.f32.mrf.mxu0
      %1080 = vdwg.mxu0
      %v1081 = vadd.f32 %v622, %v903
      %v1082 = vadd.f32 %v624, %v905
      %v1083 = vadd.f32 %v665, %v946
      %v1084 = vadd.f32 %v667, %v948
      %v1085 = vadd.f32 %v708, %v989
      %v1086 = vadd.f32 %v710, %v991
      %v1087 = vadd.f32 %v751, %v1032
      %v1088 = vadd.f32 %v753, %v1034
      %v1089 = vadd.f32 %v794, %v1075
      %v1090 = vadd.f32 %v626, %v907
      %v1091 = vadd.f32 %v628, %v909
      %v1092 = vadd.f32 %v669, %v950
      %v1093 = vadd.f32 %v671, %v952
      %v1094 = vadd.f32 %v712, %v993
      %v1095 = vadd.f32 %v714, %v995
      %v1096 = vadd.f32 %v755, %v1036
      %v1097 = vadd.f32 %v757, %v1038
      %v1098 = vadd.f32 %v797, %v1078
      %s1099 = scalar_lea.vmem %s200, 24
      %v1100 = vld [vmem:[%s1099] sm:$0xf]
      %v1101 = vld [vmem:[%s1099 + $0x4] sm:$0xf]
      %v1104 = vunpack.c.l.b16 %v1100
      %v1105 = vunpack.c.l.b16 %v1101
      %v1106 = vpack.c.b16 %v1105, %v1104
      %1107 = vrot.lane.b32.xlu0 %v242, 94
      %v1108 = vpop.permute.xlu0 %1107
      %1109 = vrot.lane.b32.xlu0 %v250, 94
      %v1110 = vpop.permute.xlu0 %1109
      %1111 = vrot.lane.b32.xlu0 %v249, 94
      %v1112 = vpop.permute.xlu0 %1111
      %1113 = vrot.lane.b32.xlu0 %v251, 94
      %v1114 = vpop.permute.xlu0 %1113
      %1115 = vrot.lane.b32.xlu0 %v259, 94
      %v1116 = vpop.permute.xlu0 %1115
      %1117 = vrot.lane.b32.xlu0 %v267, 94
      %v1118 = vpop.permute.xlu0 %1117
      %1119 = vrot.lane.b32.xlu0 %v266, 94
      %v1120 = vpop.permute.xlu0 %1119
      %1121 = vrot.lane.b32.xlu0 %v268, 94
      %v1122 = vpop.permute.xlu0 %1121
      %1123 = vrot.lane.b32.xlu0 %v275, 94
      %v1124 = vpop.permute.xlu0 %1123
      %1125 = vrot.lane.b32.xlu0 %v276, 94
      %v1126 = vpop.permute.xlu0 %1125
      %vm1127 = vcmask 769024
      %v1128 = vsel %vm1127, %v1108, %v1110
      %v1129 = vsel %vm1127, %v1110, %v1112
      %v1130 = vsel %vm1127, %v1112, %v1114
      %v1131 = vsel %vm1127, %v1114, %v1116
      %v1132 = vsel %vm1127, %v1116, %v1118
      %v1133 = vsel %vm1127, %v1118, %v1120
      %v1134 = vsel %vm1127, %v1120, %v1122
      %v1135 = vsel %vm1127, %v1122, %v1124
      %v1136 = vsel %vm1127, %v1124, %v1126
      %v1138 = vsel %vm307, %v1106, 0
      %v1141 = vsel %vm311, %v1128, 0
      %v1144 = vsel %vm311, %v1129, 0
      %v1147 = vsel %vm311, %v1130, 0
      %v1150 = vsel %vm311, %v1131, 0
      %v1153 = vsel %vm311, %v1132, 0
      %v1156 = vsel %vm311, %v1133, 0
      %v1159 = vsel %vm311, %v1134, 0
      %v1162 = vsel %vm311, %v1135, 0
      %v1165 = vsel %vm311, %v1136, 0
      %1167 = vmatprep.subr.bf16.mxu0 0
      %1168 = vmatpush1.bf16.msra.mxu0 0
      %1169 = vmatprep.subr.bf16.mxu0 0
      %1170 = vmatpush1.bf16.msra.mxu0 0
      %1171 = vmatprep.subr.bf16.mxu0 0
      %1172 = vmatpush1.bf16.msra.mxu0 0
      %1173 = vmatprep.subr.bf16.mxu0 0
      %1174 = vmatpush1.bf16.msra.mxu0 0
      %1175 = vmatprep.subr.bf16.mxu0 0
      %1176 = vmatpush1.bf16.msra.mxu0 0
      %1177 = vmatprep.subr.bf16.mxu0 0
      %1178 = vmatpush1.bf16.msra.mxu0 0
      %1179 = vmatprep.subr.bf16.mxu0 0
      %1180 = vmatpush1.bf16.msra.mxu0 0
      %1181 = vmatprep.subr.bf16.mxu0 %v1144
      %1182 = vmatpush1.bf16.msra.mxu0 %v1141
      %1183 = vmatprep.subr.bf16.mxu0 0
      %1184 = vmatpush2.bf16.msra.mxu0 0
      %1185 = vmatprep.subr.bf16.mxu0 0
      %1186 = vmatpush2.bf16.msra.mxu0 0
      %1187 = vmatprep.subr.bf16.mxu0 0
      %1188 = vmatpush2.bf16.msra.mxu0 0
      %1189 = vmatprep.subr.bf16.mxu0 0
      %1190 = vmatpush2.bf16.msra.mxu0 0
      %1191 = vmatprep.subr.bf16.mxu0 0
      %1192 = vmatpush2.bf16.msra.mxu0 0
      %1193 = vmatprep.subr.bf16.mxu0 0
      %1194 = vmatpush2.bf16.msra.mxu0 0
      %1195 = vmatprep.subr.bf16.mxu0 0
      %1196 = vmatpush2.bf16.msra.mxu0 0
      %1197 = vmatprep.subr.bf16.mxu0 0
      %1198 = vmatpush2.bf16.msra.mxu0 0
      %1199 = vmatprep.mubr.bf16.mxu0 0
      %1200 = vmatmul.mubr.bf16.gmra.mxu0 %v1138
      %v1201 = vpop.f32.mrf.mxu0
      %v1202 = vadd.f32 0.0, %v1201
      %v1203 = vpop.f32.mrf.mxu0
      %v1204 = vadd.f32 0.0, %v1203
      %v1205 = vpop.f32.mrf.mxu0
      %v1206 = vadd.f32 0.0, %v1205
      %v1207 = vpop.f32.mrf.mxu0
      %v1208 = vadd.f32 0.0, %v1207
      %1209 = vdwg.mxu0
      %1210 = vmatprep.subr.bf16.mxu0 0
      %1211 = vmatpush1.bf16.msra.mxu0 0
      %1212 = vmatprep.subr.bf16.mxu0 0
      %1213 = vmatpush1.bf16.msra.mxu0 0
      %1214 = vmatprep.subr.bf16.mxu0 0
      %1215 = vmatpush1.bf16.msra.mxu0 0
      %1216 = vmatprep.subr.bf16.mxu0 0
      %1217 = vmatpush1.bf16.msra.mxu0 0
      %1218 = vmatprep.subr.bf16.mxu0 0
      %1219 = vmatpush1.bf16.msra.mxu0 0
      %1220 = vmatprep.subr.bf16.mxu0 0
      %1221 = vmatpush1.bf16.msra.mxu0 0
      %1222 = vmatprep.subr.bf16.mxu0 0
      %1223 = vmatpush1.bf16.msra.mxu0 0
      %1224 = vmatprep.subr.bf16.mxu0 %v1150
      %1225 = vmatpush1.bf16.msra.mxu0 %v1147
      %1226 = vmatprep.subr.bf16.mxu0 0
      %1227 = vmatpush2.bf16.msra.mxu0 0
      %1228 = vmatprep.subr.bf16.mxu0 0
      %1229 = vmatpush2.bf16.msra.mxu0 0
      %1230 = vmatprep.subr.bf16.mxu0 0
      %1231 = vmatpush2.bf16.msra.mxu0 0
      %1232 = vmatprep.subr.bf16.mxu0 0
      %1233 = vmatpush2.bf16.msra.mxu0 0
      %1234 = vmatprep.subr.bf16.mxu0 0
      %1235 = vmatpush2.bf16.msra.mxu0 0
      %1236 = vmatprep.subr.bf16.mxu0 0
      %1237 = vmatpush2.bf16.msra.mxu0 0
      %1238 = vmatprep.subr.bf16.mxu0 0
      %1239 = vmatpush2.bf16.msra.mxu0 0
      %1240 = vmatprep.subr.bf16.mxu0 0
      %1241 = vmatpush2.bf16.msra.mxu0 0
      %1242 = vmatprep.mubr.bf16.mxu0 0
      %1243 = vmatmul.mubr.bf16.gmra.mxu0 %v1138
      %v1244 = vpop.f32.mrf.mxu0
      %v1245 = vadd.f32 0.0, %v1244
      %v1246 = vpop.f32.mrf.mxu0
      %v1247 = vadd.f32 0.0, %v1246
      %v1248 = vpop.f32.mrf.mxu0
      %v1249 = vadd.f32 0.0, %v1248
      %v1250 = vpop.f32.mrf.mxu0
      %v1251 = vadd.f32 0.0, %v1250
      %1252 = vdwg.mxu0
      %1253 = vmatprep.subr.bf16.mxu0 0
      %1254 = vmatpush1.bf16.msra.mxu0 0
      %1255 = vmatprep.subr.bf16.mxu0 0
      %1256 = vmatpush1.bf16.msra.mxu0 0
      %1257 = vmatprep.subr.bf16.mxu0 0
      %1258 = vmatpush1.bf16.msra.mxu0 0
      %1259 = vmatprep.subr.bf16.mxu0 0
      %1260 = vmatpush1.bf16.msra.mxu0 0
      %1261 = vmatprep.subr.bf16.mxu0 0
      %1262 = vmatpush1.bf16.msra.mxu0 0
      %1263 = vmatprep.subr.bf16.mxu0 0
      %1264 = vmatpush1.bf16.msra.mxu0 0
      %1265 = vmatprep.subr.bf16.mxu0 0
      %1266 = vmatpush1.bf16.msra.mxu0 0
      %1267 = vmatprep.subr.bf16.mxu0 %v1156
      %1268 = vmatpush1.bf16.msra.mxu0 %v1153
      %1269 = vmatprep.subr.bf16.mxu0 0
      %1270 = vmatpush2.bf16.msra.mxu0 0
      %1271 = vmatprep.subr.bf16.mxu0 0
      %1272 = vmatpush2.bf16.msra.mxu0 0
      %1273 = vmatprep.subr.bf16.mxu0 0
      %1274 = vmatpush2.bf16.msra.mxu0 0
      %1275 = vmatprep.subr.bf16.mxu0 0
      %1276 = vmatpush2.bf16.msra.mxu0 0
      %1277 = vmatprep.subr.bf16.mxu0 0
      %1278 = vmatpush2.bf16.msra.mxu0 0
      %1279 = vmatprep.subr.bf16.mxu0 0
      %1280 = vmatpush2.bf16.msra.mxu0 0
      %1281 = vmatprep.subr.bf16.mxu0 0
      %1282 = vmatpush2.bf16.msra.mxu0 0
      %1283 = vmatprep.subr.bf16.mxu0 0
      %1284 = vmatpush2.bf16.msra.mxu0 0
      %1285 = vmatprep.mubr.bf16.mxu0 0
      %1286 = vmatmul.mubr.bf16.gmra.mxu0 %v1138
      %v1287 = vpop.f32.mrf.mxu0
      %v1288 = vadd.f32 0.0, %v1287
      %v1289 = vpop.f32.mrf.mxu0
      %v1290 = vadd.f32 0.0, %v1289
      %v1291 = vpop.f32.mrf.mxu0
      %v1292 = vadd.f32 0.0, %v1291
      %v1293 = vpop.f32.mrf.mxu0
      %v1294 = vadd.f32 0.0, %v1293
      %1295 = vdwg.mxu0
      %1296 = vmatprep.subr.bf16.mxu0 0
      %1297 = vmatpush1.bf16.msra.mxu0 0
      %1298 = vmatprep.subr.bf16.mxu0 0
      %1299 = vmatpush1.bf16.msra.mxu0 0
      %1300 = vmatprep.subr.bf16.mxu0 0
      %1301 = vmatpush1.bf16.msra.mxu0 0
      %1302 = vmatprep.subr.bf16.mxu0 0
      %1303 = vmatpush1.bf16.msra.mxu0 0
      %1304 = vmatprep.subr.bf16.mxu0 0
      %1305 = vmatpush1.bf16.msra.mxu0 0
      %1306 = vmatprep.subr.bf16.mxu0 0
      %1307 = vmatpush1.bf16.msra.mxu0 0
      %1308 = vmatprep.subr.bf16.mxu0 0
      %1309 = vmatpush1.bf16.msra.mxu0 0
      %1310 = vmatprep.subr.bf16.mxu0 %v1162
      %1311 = vmatpush1.bf16.msra.mxu0 %v1159
      %1312 = vmatprep.subr.bf16.mxu0 0
      %1313 = vmatpush2.bf16.msra.mxu0 0
      %1314 = vmatprep.subr.bf16.mxu0 0
      %1315 = vmatpush2.bf16.msra.mxu0 0
      %1316 = vmatprep.subr.bf16.mxu0 0
      %1317 = vmatpush2.bf16.msra.mxu0 0
      %1318 = vmatprep.subr.bf16.mxu0 0
      %1319 = vmatpush2.bf16.msra.mxu0 0
      %1320 = vmatprep.subr.bf16.mxu0 0
      %1321 = vmatpush2.bf16.msra.mxu0 0
      %1322 = vmatprep.subr.bf16.mxu0 0
      %1323 = vmatpush2.bf16.msra.mxu0 0
      %1324 = vmatprep.subr.bf16.mxu0 0
      %1325 = vmatpush2.bf16.msra.mxu0 0
      %1326 = vmatprep.subr.bf16.mxu0 0
      %1327 = vmatpush2.bf16.msra.mxu0 0
      %1328 = vmatprep.mubr.bf16.mxu0 0
      %1329 = vmatmul.mubr.bf16.gmra.mxu0 %v1138
      %v1330 = vpop.f32.mrf.mxu0
      %v1331 = vadd.f32 0.0, %v1330
      %v1332 = vpop.f32.mrf.mxu0
      %v1333 = vadd.f32 0.0, %v1332
      %v1334 = vpop.f32.mrf.mxu0
      %v1335 = vadd.f32 0.0, %v1334
      %v1336 = vpop.f32.mrf.mxu0
      %v1337 = vadd.f32 0.0, %v1336
      %1338 = vdwg.mxu0
      %1339 = vmatprep.subr.bf16.mxu0 0
      %1340 = vmatpush1.bf16.msra.mxu0 0
      %1341 = vmatprep.subr.bf16.mxu0 0
      %1342 = vmatpush1.bf16.msra.mxu0 0
      %1343 = vmatprep.subr.bf16.mxu0 0
      %1344 = vmatpush1.bf16.msra.mxu0 0
      %1345 = vmatprep.subr.bf16.mxu0 0
      %1346 = vmatpush1.bf16.msra.mxu0 0
      %1347 = vmatprep.subr.bf16.mxu0 0
      %1348 = vmatpush1.bf16.msra.mxu0 0
      %1349 = vmatprep.subr.bf16.mxu0 0
      %1350 = vmatpush1.bf16.msra.mxu0 0
      %1351 = vmatprep.subr.bf16.mxu0 0
      %1352 = vmatpush1.bf16.msra.mxu0 0
      %1353 = vmatprep.subr.bf16.mxu0 0
      %1354 = vmatpush1.bf16.msra.mxu0 %v1165
      %1355 = vmatprep.subr.bf16.mxu0 0
      %1356 = vmatpush2.bf16.msra.mxu0 0
      %1357 = vmatprep.subr.bf16.mxu0 0
      %1358 = vmatpush2.bf16.msra.mxu0 0
      %1359 = vmatprep.subr.bf16.mxu0 0
      %1360 = vmatpush2.bf16.msra.mxu0 0
      %1361 = vmatprep.subr.bf16.mxu0 0
      %1362 = vmatpush2.bf16.msra.mxu0 0
      %1363 = vmatprep.subr.bf16.mxu0 0
      %1364 = vmatpush2.bf16.msra.mxu0 0
      %1365 = vmatprep.subr.bf16.mxu0 0
      %1366 = vmatpush2.bf16.msra.mxu0 0
      %1367 = vmatprep.subr.bf16.mxu0 0
      %1368 = vmatpush2.bf16.msra.mxu0 0
      %1369 = vmatprep.subr.bf16.mxu0 0
      %1370 = vmatpush2.bf16.msra.mxu0 0
      %1371 = vmatprep.mubr.bf16.mxu0 0
      %1372 = vmatmul.mubr.bf16.gmra.mxu0 %v1138
      %v1373 = vpop.f32.mrf.mxu0
      %v1374 = vadd.f32 0.0, %v1373
      %v1375 = vpop.f32.mrf.mxu0
      %v1376 = vpop.f32.mrf.mxu0
      %v1377 = vadd.f32 0.0, %v1376
      %v1378 = vpop.f32.mrf.mxu0
      %1379 = vdwg.mxu0
      %v1380 = vadd.f32 %v1081, %v1202
      %v1381 = vadd.f32 %v1082, %v1204
      %v1382 = vadd.f32 %v1083, %v1245
      %v1383 = vadd.f32 %v1084, %v1247
      %v1384 = vadd.f32 %v1085, %v1288
      %v1385 = vadd.f32 %v1086, %v1290
      %v1386 = vadd.f32 %v1087, %v1331
      %v1387 = vadd.f32 %v1088, %v1333
      %v1388 = vadd.f32 %v1089, %v1374
      %v1389 = vadd.f32 %v1090, %v1206
      %v1390 = vadd.f32 %v1091, %v1208
      %v1391 = vadd.f32 %v1092, %v1249
      %v1392 = vadd.f32 %v1093, %v1251
      %v1393 = vadd.f32 %v1094, %v1292
      %v1394 = vadd.f32 %v1095, %v1294
      %v1395 = vadd.f32 %v1096, %v1335
      %v1396 = vadd.f32 %v1097, %v1337
      %v1397 = vadd.f32 %v1098, %v1377
      %v1398 = vmul.f32 %v1380, 0.2
      %v1399 = vmul.f32 %v1381, 0.2
      %v1400 = vmul.f32 %v1382, 0.2
      %v1401 = vmul.f32 %v1383, 0.2
      %v1402 = vmul.f32 %v1384, 0.2
      %v1403 = vmul.f32 %v1385, 0.2
      %v1404 = vmul.f32 %v1386, 0.2
      %v1405 = vmul.f32 %v1387, 0.2
      %v1406 = vmul.f32 %v1388, 0.2
      %v1407 = vmul.f32 %v1389, 0.2
      %v1408 = vmul.f32 %v1390, 0.2
      %v1409 = vmul.f32 %v1391, 0.2
      %v1410 = vmul.f32 %v1392, 0.2
      %v1411 = vmul.f32 %v1393, 0.2
      %v1412 = vmul.f32 %v1394, 0.2
      %v1413 = vmul.f32 %v1395, 0.2
      %v1414 = vmul.f32 %v1396, 0.2
      %v1415 = vmul.f32 %v1397, 0.2
      %v1416 = vmax.f32 %v1380, %v1398
      %v1417 = vmax.f32 %v1381, %v1399
      %v1418 = vmax.f32 %v1382, %v1400
      %v1419 = vmax.f32 %v1383, %v1401
      %v1420 = vmax.f32 %v1384, %v1402
      %v1421 = vmax.f32 %v1385, %v1403
      %v1422 = vmax.f32 %v1386, %v1404
      %v1423 = vmax.f32 %v1387, %v1405
      %v1424 = vmax.f32 %v1388, %v1406
      %v1425 = vmax.f32 %v1389, %v1407
      %v1426 = vmax.f32 %v1390, %v1408
      %v1427 = vmax.f32 %v1391, %v1409
      %v1428 = vmax.f32 %v1392, %v1410
      %v1429 = vmax.f32 %v1393, %v1411
      %v1430 = vmax.f32 %v1394, %v1412
      %v1431 = vmax.f32 %v1395, %v1413
      %v1432 = vmax.f32 %v1396, %v1414
      %v1433 = vmax.f32 %v1397, %v1415
      %v1434 = vpack.c.bf16 %v1425, %v1416
      %v1435 = vpack.c.bf16 %v1426, %v1417
      %v1436 = vpack.c.bf16 %v1427, %v1418
      %v1437 = vpack.c.bf16 %v1428, %v1419
      %v1438 = vpack.c.bf16 %v1429, %v1420
      %v1439 = vpack.c.bf16 %v1430, %v1421
      %v1440 = vpack.c.bf16 %v1431, %v1422
      %v1441 = vpack.c.bf16 %v1432, %v1423
      %v1442 = vpack.c.bf16 %v1433, %v1424
      %v1452 = vunpack.c.l.b16 %v1434
      %v1453 = vunpack.c.l.b16 %v1435
      %v1454 = vunpack.c.l.b16 %v1436
      %v1455 = vunpack.c.l.b16 %v1437
      %v1456 = vunpack.c.l.b16 %v1438
      %v1457 = vunpack.c.l.b16 %v1439
      %v1458 = vunpack.c.l.b16 %v1440
      %v1459 = vunpack.c.l.b16 %v1441
      %v1460 = vunpack.c.l.b16 %v1442
      %v1461 = vunpack.c.h.b16 %v1434
      %v1462 = vunpack.c.h.b16 %v1435
      %v1463 = vunpack.c.h.b16 %v1436
      %v1464 = vunpack.c.h.b16 %v1437
      %v1465 = vunpack.c.h.b16 %v1438
      %v1466 = vunpack.c.h.b16 %v1439
      %v1467 = vunpack.c.h.b16 %v1440
      %v1468 = vunpack.c.h.b16 %v1441
      %v1469 = vunpack.c.h.b16 %v1442
      %v1470 = vpack.c.b16 %v1453, %v1452
      %v1471 = vpack.c.b16 %v1455, %v1454
      %v1472 = vpack.c.b16 %v1457, %v1456
      %v1473 = vpack.c.b16 %v1459, %v1458
      %v1474 = vpack.c.b16 %v1460, %v1460
      %v1475 = vpack.c.b16 %v1462, %v1461
      %v1476 = vpack.c.b16 %v1464, %v1463
      %v1477 = vpack.c.b16 %v1466, %v1465
      %v1478 = vpack.c.b16 %v1468, %v1467
      %v1479 = vpack.c.b16 %v1469, %v1469
      %1490 = vst [vmem:[%s216] sm:$0xff] %v1470
      %1491 = vst [vmem:[%s216 + $0x8] sm:$0xff] %v1471
      %1492 = vst [vmem:[%s216 + $0x10] sm:$0xff] %v1472
      %1493 = vst [vmem:[%s216 + $0x18] sm:$0xff] %v1473
      %1494 = vst [vmem:[%s216 + $0x20] sm:$0xf] %v1474
      %1495 = vst [vmem:[%s216 + $0x24] sm:$0xff] %v1475
      %1496 = vst [vmem:[%s216 + $0x2c] sm:$0xff] %v1476
      %1497 = vst [vmem:[%s216 + $0x34] sm:$0xff] %v1477
      %1498 = vst [vmem:[%s216 + $0x3c] sm:$0xff] %v1478
      %1499 = vst [vmem:[%s216 + $0x44] sm:$0xf] %v1479
      %s1500 = smul.u32 2, %s19
      %p1501 = scmp.lt.s32.totalorder %s18, 1
      %s1502 = scalar_select %p1501, %s18, 1
      %p1503 = scmp.lt.s32.totalorder %s1500, 1
      %s1504 = scalar_select %p1503, %s1500, 1
      %s1505 = smul.addr %s1504, 9
      %s1506 = smul.addr %s1502, 18
      %s1507 = sadd.s32 %s1505, %s1506
      %s1508 = smul.addr %s1507, 4
      %s1509 = scalar_lea.vmem %s3, %s1508
      // Predicated region
      $region33: #{dnpf_forward.5} parent=31 // pred_check
        %p1510 = pneg %p119
      $region34: #{dnpf_forward.5} parent=31 // pred_check_branch
        %1512 = sbr.rel (%p1510) target = $region36
      $region35: #{dnpf_forward.5} parent=31 // pred_region
        %s1513 = smul.u32 2, %s19
      $region36: #{dnpf_forward.5} parent=31 // pred_fallthru
        _
    $region32: #{dnpf_forward.5} parent=5 // pred_fallthru
      _
    %p1514 = scmp.le.s32.totalorder 2, %s9
    // Predicated region
    $region37: #{dnpf_forward.5} parent=5 // pred_check
      %p1515 = pneg %p1514
    $region38: #{dnpf_forward.5} parent=5 // pred_check_branch
      %1517 = sbr.rel (%p1515) target = $region40
    $region39: #{dnpf_forward.5} parent=5 // pred_region
      %s1518 = ssub.s32 %s9, 2
      // Predicated region
      $region41: #{dnpf_forward.5} parent=39 // pred_check
        %p1519 = pneg %p125
      $region42: #{dnpf_forward.5} parent=39 // pred_check_branch
        %1521 = sbr.rel (%p1519) target = $region44
      $region43: #{dnpf_forward.5} parent=39 // pred_region
        %s1522 = smul.u32 2, %s21
        %p1523 = scmp.lt.s32.totalorder %s20, 1
        %s1524 = scalar_select %p1523, %s20, 1
        %p1525 = scmp.lt.s32.totalorder %s1522, 1
        %s1526 = scalar_select %p1525, %s1522, 1
        %s1527 = smul.addr %s1526, 9
        %s1528 = smul.addr %s1524, 18
        %s1529 = sadd.s32 %s1527, %s1528
        %s1530 = smul.addr %s1529, 4
        %s1531 = scalar_lea.vmem %s3, %s1530
      $region44: #{dnpf_forward.5} parent=39 // pred_fallthru
        _
    $region40: #{dnpf_forward.5} parent=5 // pred_fallthru
      _
  $region6: #{dnpf_forward.5} parent=0 // loop_footer
    %s13 = sadd.s32 1, %s9
  $region7: #{dnpf_forward.5} parent=0 // loop_footer_branch
    %8 = sbr.rel target = $region3
  $region8: #{dnpf_forward.5} parent=0 // loop_exit
    _

// kernel: dnpf_forward.6
$region0: #{dnpf_forward.6}
  #allocation0 [shape = 'u32[]', space=smem, size = 0x4, offset = 0x4, fixed_abs, tag = 'smem constant byte address 0x4 - core index']
  #allocation1 [shape = 'u32[144,128]{1,0:T(1,128)}', space=vmem, size = 0x12000, scoped, tag = 'internal scratch']
  %s0 = inlined_call_operand.vmem [shape: bf16[4,16,32], index: 0, kind: input, shape index: {}]
  %s1 = inlined_call_operand.vmem [shape: bf16[2,32,512], index: 1, kind: input, shape index: {}]
  %s2 = inlined_call_operand.vmem [shape: f32[1,384], index: 2, kind: input, shape index: {}]
  %s3 = inlined_call_operand.vmem [shape: bf16[2,16,384], index: 3, kind: output, shape index: {}]
  %s4 = sld [smem:[#allocation0]]
  $region45: #{dnpf_forward.6} parent=0
    _
  %s6 = ssub.s32 1, %s4
  %s7 = scalar_select 0, %s6, %s4
  loop: start=0, step=1, limit=4
  $region2: #{dnpf_forward.6} parent=0 // loop_pre_header
    _
  $region3: #{dnpf_forward.6} parent=0 // loop_header
    %s9 = sphi 0, %s13
    %p10 = scmp.ge.s32.totalorder %s9, 4
    %s16 = sphi 0, %s28
    %s17 = sphi 0, %s24
    %s18 = sphi 0, %s16
    %s19 = sphi 0, %s17
    %s20 = sphi 0, %s18
    %s21 = sphi 0, %s19
    %s31 = sphi 0, %s33
    %s34 = sphi 0, %s31
    %s35 = sphi 0, %s34
    %s51 = sphi 0, %s35
    %s57 = sphi 0, %s59
    %s60 = sphi 0, %s57
    %s61 = sphi 0, %s60
    %s77 = sphi 0, %s61
    %s81 = sphi 0, %s81
    %s83 = sphi 0, %s81
    %s84 = sphi 0, %s83
    %s98 = sphi 0, %s84
    %s106 = sphi 0, %s108
    %s109 = sphi 0, %s106
    %s110 = sphi 0, %s109
    %s126 = sphi 0, %s110
  $region4: #{dnpf_forward.6} parent=0 // loop_header_branch
    %12 = sbr.rel (%p10) target = $region8
  $region5: #{dnpf_forward.6} parent=0 // loop_body
    %s14 = ssub.s32 %s9, 1
    %s15 = ssub.s32 %s9, 2
    %s22 = sadd.s32 1, %s17
    %p23 = scmp.ge.s32.totalorder %s22, 1
    %s24 = scalar_select %p23, 0, %s22
    %s25 = sadd.s32 1, %s16
    %s26 = scalar_select %p23, %s25, %s16
    %p27 = scmp.ge.s32.totalorder %s26, 2
    %s28 = scalar_select %p27, 0, %s26
    %s29 = ssub.s32 %s17, %s24
    %p30 = scmp.eq.s32.totalorder %s29, 0
    %s32 = sadd.s32 %s31, 1
    %s33 = scalar_select %p30, %s31, %s32
    %p36 = pneg %p30
    %p37 = scmp.eq.s32.totalorder %s9, 1
    %p38 = por %p36, %p37
    %p39 = scmp.ne.s32.totalorder %s31, %s34
    %p40 = scmp.eq.s32.totalorder %s9, 0
    %p41 = por %p39, %p40
    %p42 = scmp.ne.s32.totalorder %s31, %s34
    %p43 = scmp.eq.s32.totalorder %s14, 1
    %p44 = por %p42, %p43
    %p45 = scmp.ne.s32.totalorder %s34, %s35
    %p46 = scmp.eq.s32.totalorder %s14, 0
    %p47 = por %p45, %p46
    %p48 = scmp.ne.s32.totalorder %s34, %s35
    %p49 = scmp.eq.s32.totalorder %s15, 1
    %p50 = por %p48, %p49
    %p52 = scmp.ne.s32.totalorder %s35, %s51
    %p53 = scmp.eq.s32.totalorder %s15, 0
    %p54 = por %p52, %p53
    %s55 = ssub.s32 %s16, %s28
    %p56 = scmp.eq.s32.totalorder %s55, 0
    %s58 = sadd.s32 %s57, 1
    %s59 = scalar_select %p56, %s57, %s58
    %p62 = pneg %p56
    %p63 = scmp.eq.s32.totalorder %s9, 1
    %p64 = por %p62, %p63
    %p65 = scmp.ne.s32.totalorder %s57, %s60
    %p66 = scmp.eq.s32.totalorder %s9, 0
    %p67 = por %p65, %p66
    %p68 = scmp.ne.s32.totalorder %s57, %s60
    %p69 = scmp.eq.s32.totalorder %s14, 1
    %p70 = por %p68, %p69
    %p71 = scmp.ne.s32.totalorder %s60, %s61
    %p72 = scmp.eq.s32.totalorder %s14, 0
    %p73 = por %p71, %p72
    %p74 = scmp.ne.s32.totalorder %s60, %s61
    %p75 = scmp.eq.s32.totalorder %s15, 1
    %p76 = por %p74, %p75
    %p78 = scmp.ne.s32.totalorder %s61, %s77
    %p79 = scmp.eq.s32.totalorder %s15, 0
    %p80 = por %p78, %p79
    %s82 = sadd.s32 %s81, 1
    %p85 = scmp.eq.s32.totalorder %s9, 1
    %p86 = scmp.ne.s32.totalorder %s81, %s83
    %p87 = scmp.eq.s32.totalorder %s9, 0
    %p88 = por %p86, %p87
    %p89 = scmp.ne.s32.totalorder %s81, %s83
    %p90 = scmp.eq.s32.totalorder %s14, 1
    %p91 = por %p89, %p90
    %p92 = scmp.ne.s32.totalorder %s83, %s84
    %p93 = scmp.eq.s32.totalorder %s14, 0
    %p94 = por %p92, %p93
    %p95 = scmp.ne.s32.totalorder %s83, %s84
    %p96 = scmp.eq.s32.totalorder %s15, 1
    %p97 = por %p95, %p96
    %p99 = scmp.ne.s32.totalorder %s84, %s98
    %p100 = scmp.eq.s32.totalorder %s15, 0
    %p101 = por %p99, %p100
    %s102 = ssub.s32 %s16, %s28
    %s103 = ssub.s32 %s17, %s24
    %s104 = sor.u32 %s102, %s103
    %p105 = scmp.eq.s32.totalorder %s104, 0
    %s107 = sadd.s32 %s106, 1
    %s108 = scalar_select %p105, %s106, %s107
    %p111 = pneg %p105
    %p112 = scmp.eq.s32.totalorder %s9, 1
    %p113 = por %p111, %p112
    %p114 = scmp.ne.s32.totalorder %s106, %s109
    %p115 = scmp.eq.s32.totalorder %s9, 0
    %p116 = por %p114, %p115
    %p117 = scmp.ne.s32.totalorder %s106, %s109
    %p118 = scmp.eq.s32.totalorder %s14, 1
    %p119 = por %p117, %p118
    %p120 = scmp.ne.s32.totalorder %s109, %s110
    %p121 = scmp.eq.s32.totalorder %s14, 0
    %p122 = por %p120, %p121
    %p123 = scmp.ne.s32.totalorder %s109, %s110
    %p124 = scmp.eq.s32.totalorder %s15, 1
    %p125 = por %p123, %p124
    %p127 = scmp.ne.s32.totalorder %s110, %s126
    %p128 = scmp.eq.s32.totalorder %s15, 0
    %p129 = por %p127, %p128
    %p130 = scmp.le.s32.totalorder 1, %s9
    %p131 = scmp.lt.s32.totalorder %s9, 3
    %p132 = pnand %p130, %p131
    %p133 = pneg %p132
    // Predicated region
    $region9: #{dnpf_forward.6} parent=5 // pred_check
      _
    $region10: #{dnpf_forward.6} parent=5 // pred_check_branch
      %135 = sbr.rel (%p132) target = $region12
    $region11: #{dnpf_forward.6} parent=5 // pred_region
      %s136 = ssub.s32 %s9, 1
      // Predicated region
      $region13: #{dnpf_forward.6} parent=11 // pred_check
        %p137 = pneg %p47
      $region14: #{dnpf_forward.6} parent=11 // pred_check_branch
        %139 = sbr.rel (%p137) target = $region16
      $region15: #{dnpf_forward.6} parent=11 // pred_region
        %s140 = smul.u32 2, %s19
        %p141 = scmp.lt.s32.totalorder %s140, 1
        %s142 = scalar_select %p141, %s140, 1
        %s143 = smul.addr %s142, 4
        %s144 = scalar_lea.vmem %s0, %s143
        %s145 = smul.u32 2, %s19
      $region16: #{dnpf_forward.6} parent=11 // pred_fallthru
        _
      // Predicated region
      $region17: #{dnpf_forward.6} parent=11 // pred_check
        %p146 = pneg %p94
      $region18: #{dnpf_forward.6} parent=11 // pred_check_branch
        %148 = sbr.rel (%p146) target = $region20
      $region19: #{dnpf_forward.6} parent=11 // pred_region
        _
      $region20: #{dnpf_forward.6} parent=11 // pred_fallthru
        _
    $region12: #{dnpf_forward.6} parent=5 // pred_fallthru
      _
    %p149 = scmp.lt.s32.totalorder %s9, 2
    // Predicated region
    $region21: #{dnpf_forward.6} parent=5 // pred_check
      %p150 = pneg %p149
    $region22: #{dnpf_forward.6} parent=5 // pred_check_branch
      %152 = sbr.rel (%p150) target = $region24
    $region23: #{dnpf_forward.6} parent=5 // pred_region
      // Predicated region
      $region25: #{dnpf_forward.6} parent=23 // pred_check
        %p153 = pneg %p67
      $region26: #{dnpf_forward.6} parent=23 // pred_check_branch
        %155 = sbr.rel (%p153) target = $region28
      $region27: #{dnpf_forward.6} parent=23 // pred_region
        %p156 = scmp.lt.s32.totalorder %s16, 1
        %s157 = scalar_select %p156, %s16, 1
        %s158 = smul.addr %s157, 16
        %s159 = smul.addr %s158, 4
        %s160 = scalar_lea.vmem %s1, %s159
      $region28: #{dnpf_forward.6} parent=23 // pred_fallthru
        _
    $region24: #{dnpf_forward.6} parent=5 // pred_fallthru
      _
    %p161 = scmp.le.s32.totalorder 1, %s9
    %p162 = scmp.lt.s32.totalorder %s9, 3
    %p163 = pnand %p161, %p162
    %p164 = pneg %p163
    // Predicated region
    $region29: #{dnpf_forward.6} parent=5 // pred_check
      _
    $region30: #{dnpf_forward.6} parent=5 // pred_check_branch
      %166 = sbr.rel (%p163) target = $region32
    $region31: #{dnpf_forward.6} parent=5 // pred_region
      %s167 = ssub.s32 %s9, 1
      %s168 = smul.u32 2, %s19
      %p169 = scmp.lt.s32.totalorder %s168, 1
      %s170 = scalar_select %p169, %s168, 1
      %s171 = smul.addr %s170, 4
      %s172 = scalar_lea.vmem %s0, %s171
      %p173 = pneg %p47
      %p174 = pneg %p44
      %p175 = scmp.lt.s32.totalorder %s18, 1
      %s176 = scalar_select %p175, %s18, 1
      %s177 = smul.addr %s176, 16
      %s178 = smul.addr %s177, 4
      %s179 = scalar_lea.vmem %s1, %s178
      %p180 = pneg %p73
      %p181 = pneg %p70
      %p182 = pneg %p94
      %p183 = pneg %p91
      %p184 = pneg %p122
      %p185 = pneg %p119
      %s186 = smul.u32 2, %s19
      %p187 = scmp.lt.s32.totalorder %s18, 1
      %s188 = scalar_select %p187, %s18, 1
      %p189 = scmp.lt.s32.totalorder %s186, 1
      %s190 = scalar_select %p189, %s186, 1
      %s191 = smul.addr %s190, 3
      %s192 = smul.addr %s188, 6
      %s193 = sadd.s32 %s191, %s192
      %s194 = smul.addr %s193, 4
      %s195 = scalar_lea.vmem %s3, %s194
      %s196 = smul.u32 2, %s19
      %p197 = scmp.lt.s32.totalorder %s196, 1
      %s198 = scalar_select %p197, %s196, 1
      %s199 = smul.addr %s198, 4
      %s200 = scalar_lea.vmem %s0, %s199
      %s201 = smul.u32 2, %s19
      %p202 = scmp.lt.s32.totalorder %s18, 1
      %s203 = scalar_select %p202, %s18, 1
      %s204 = smul.addr %s203, 16
      %s205 = smul.addr %s204, 4
      %s206 = scalar_lea.vmem %s1, %s205
      %s207 = smul.u32 2, %s19
      %p208 = scmp.lt.s32.totalorder %s18, 1
      %s209 = scalar_select %p208, %s18, 1
      %p210 = scmp.lt.s32.totalorder %s207, 1
      %s211 = scalar_select %p210, %s207, 1
      %s212 = smul.addr %s211, 3
      %s213 = smul.addr %s209, 6
      %s214 = sadd.s32 %s212, %s213
      %s215 = smul.addr %s214, 4
      %s216 = scalar_lea.vmem %s3, %s215
      %s217 = smul.u32 2, %s19
      %v219 = vld [vmem:[%s206] sm:$0xff]
      %v220 = vld [vmem:[%s206 + $0x8] sm:$0xff]
      %v221 = vld [vmem:[%s206 + $0x10] sm:$0xff]
      %v222 = vld [vmem:[%s206 + $0x18] sm:$0xff]
      %v223 = vld [vmem:[%s206 + $0x20] sm:$0xff]
      %v224 = vld [vmem:[%s206 + $0x28] sm:$0xff]
      %v225 = vld [vmem:[%s206 + $0x30] sm:$0xff]
      %v226 = vld [vmem:[%s206 + $0x38] sm:$0xff]
      %v227 = vld [vmem:[%s200] sm:$0xf]
      %v228 = vld [vmem:[%s200 + $0x4] sm:$0xf]
      %s229 = scalar_lea.vmem %s200, 8
      %v230 = vld [vmem:[%s229] sm:$0xf]
      %v231 = vld [vmem:[%s229 + $0x4] sm:$0xf]
      %v234 = vunpack.c.l.b16 %v230
      %v235 = vunpack.c.l.b16 %v231
      %v236 = vpack.c.b16 %v235, %v234
      %v245 = vunpack.c.l.b16 %v219
      %v246 = vunpack.c.h.b16 %v219
      %v247 = vunpack.c.l.b16 %v220
      %v248 = vunpack.c.h.b16 %v220
      %v249 = vunpack.c.l.b16 %v221
      %v250 = vunpack.c.h.b16 %v221
      %v251 = vunpack.c.l.b16 %v222
      %v252 = vunpack.c.h.b16 %v222
      %v253 = vunpack.c.l.b16 %v223
      %v254 = vunpack.c.h.b16 %v223
      %v255 = vunpack.c.l.b16 %v224
      %v256 = vunpack.c.h.b16 %v224
      %v257 = vunpack.c.l.b16 %v225
      %v258 = vunpack.c.h.b16 %v225
      %v259 = vunpack.c.l.b16 %v226
      %v260 = vunpack.c.h.b16 %v226
      %v261 = vpack.c.b16 %v249, %v245
      %v262 = vpack.c.b16 %v250, %v246
      %v263 = vpack.c.b16 %v251, %v247
      %v264 = vpack.c.b16 %v252, %v248
      %v265 = vpack.c.b16 %v257, %v253
      %v266 = vpack.c.b16 %v258, %v254
      %v267 = vpack.c.b16 %v259, %v255
      %v268 = vpack.c.b16 %v260, %v256
      %269 = vrot.lane.b32.xlu0 %v261, 127
      %v270 = vpop.permute.xlu0 %269
      %271 = vrot.lane.b32.xlu0 %v262, 127
      %v272 = vpop.permute.xlu0 %271
      %273 = vrot.lane.b32.xlu0 %v263, 127
      %v274 = vpop.permute.xlu0 %273
      %275 = vrot.lane.b32.xlu0 %v264, 127
      %v276 = vpop.permute.xlu0 %275
      %277 = vrot.lane.b32.xlu0 %v265, 127
      %v278 = vpop.permute.xlu0 %277
      %279 = vrot.lane.b32.xlu0 %v266, 127
      %v280 = vpop.permute.xlu0 %279
      %281 = vrot.lane.b32.xlu0 %v267, 127
      %v282 = vpop.permute.xlu0 %281
      %283 = vrot.lane.b32.xlu0 %v268, 127
      %v284 = vpop.permute.xlu0 %283
      %vm285 = vcmask 1039360
      %v286 = vsel %vm285, %v270, %v272
      %v287 = vsel %vm285, %v272, %v274
      %v288 = vsel %vm285, %v274, %v276
      %v289 = vsel %vm285, %v278, %v280
      %v290 = vsel %vm285, %v280, %v282
      %v291 = vsel %vm285, %v282, %v284
      %vm298 = vcmask 261120
      %v300 = vsel %vm298, %v236, 0
      %302 = vmatprep.subr.bf16.mxu0 0
      %303 = vmatpush1.bf16.msra.mxu0 0
      %304 = vmatprep.subr.bf16.mxu0 0
      %305 = vmatpush1.bf16.msra.mxu0 0
      %306 = vmatprep.subr.bf16.mxu0 0
      %307 = vmatpush1.bf16.msra.mxu0 0
      %308 = vmatprep.subr.bf16.mxu0 0
      %309 = vmatpush1.bf16.msra.mxu0 0
      %310 = vmatprep.subr.bf16.mxu0 0
      %311 = vmatpush1.bf16.msra.mxu0 0
      %312 = vmatprep.subr.bf16.mxu0 0
      %313 = vmatpush1.bf16.msra.mxu0 0
      %314 = vmatprep.subr.bf16.mxu0 %v290
      %315 = vmatpush1.bf16.msra.mxu0 %v289
      %316 = vmatprep.subr.bf16.mxu0 %v287
      %317 = vmatpush1.bf16.msra.mxu0 %v286
      %318 = vmatprep.subr.bf16.mxu0 0
      %319 = vmatpush2.bf16.msra.mxu0 0
      %320 = vmatprep.subr.bf16.mxu0 0
      %321 = vmatpush2.bf16.msra.mxu0 0
      %322 = vmatprep.subr.bf16.mxu0 0
      %323 = vmatpush2.bf16.msra.mxu0 0
      %324 = vmatprep.subr.bf16.mxu0 0
      %325 = vmatpush2.bf16.msra.mxu0 0
      %326 = vmatprep.subr.bf16.mxu0 0
      %327 = vmatpush2.bf16.msra.mxu0 0
      %328 = vmatprep.subr.bf16.mxu0 0
      %329 = vmatpush2.bf16.msra.mxu0 0
      %330 = vmatprep.subr.bf16.mxu0 0
      %331 = vmatpush2.bf16.msra.mxu0 0
      %332 = vmatprep.subr.bf16.mxu0 0
      %333 = vmatpush2.bf16.msra.mxu0 0
      %334 = vmatprep.mubr.bf16.mxu0 0
      %335 = vmatmul.mubr.bf16.gmra.mxu0 %v300
      %v336 = vpop.f32.mrf.mxu0
      %v337 = vadd.f32 0.0, %v336
      %v338 = vpop.f32.mrf.mxu0
      %v339 = vadd.f32 0.0, %v338
      %v340 = vpop.f32.mrf.mxu0
      %v341 = vadd.f32 0.0, %v340
      %v342 = vpop.f32.mrf.mxu0
      %v343 = vadd.f32 0.0, %v342
      %344 = vdwg.mxu0
      %345 = vmatprep.subr.bf16.mxu0 0
      %346 = vmatpush1.bf16.msra.mxu0 0
      %347 = vmatprep.subr.bf16.mxu0 0
      %348 = vmatpush1.bf16.msra.mxu0 0
      %349 = vmatprep.subr.bf16.mxu0 0
      %350 = vmatpush1.bf16.msra.mxu0 0
      %351 = vmatprep.subr.bf16.mxu0 0
      %352 = vmatpush1.bf16.msra.mxu0 0
      %353 = vmatprep.subr.bf16.mxu0 0
      %354 = vmatpush1.bf16.msra.mxu0 0
      %355 = vmatprep.subr.bf16.mxu0 0
      %356 = vmatpush1.bf16.msra.mxu0 0
      %357 = vmatprep.subr.bf16.mxu0 0
      %358 = vmatpush1.bf16.msra.mxu0 %v291
      %359 = vmatprep.subr.bf16.mxu0 0
      %360 = vmatpush1.bf16.msra.mxu0 %v288
      %361 = vmatprep.subr.bf16.mxu0 0
      %362 = vmatpush2.bf16.msra.mxu0 0
      %363 = vmatprep.subr.bf16.mxu0 0
      %364 = vmatpush2.bf16.msra.mxu0 0
      %365 = vmatprep.subr.bf16.mxu0 0
      %366 = vmatpush2.bf16.msra.mxu0 0
      %367 = vmatprep.subr.bf16.mxu0 0
      %368 = vmatpush2.bf16.msra.mxu0 0
      %369 = vmatprep.subr.bf16.mxu0 0
      %370 = vmatpush2.bf16.msra.mxu0 0
      %371 = vmatprep.subr.bf16.mxu0 0
      %372 = vmatpush2.bf16.msra.mxu0 0
      %373 = vmatprep.subr.bf16.mxu0 0
      %374 = vmatpush2.bf16.msra.mxu0 0
      %375 = vmatprep.subr.bf16.mxu0 0
      %376 = vmatpush2.bf16.msra.mxu0 0
      %377 = vmatprep.mubr.bf16.mxu0 0
      %378 = vmatmul.mubr.bf16.gmra.mxu0 %v300
      %v379 = vpop.f32.mrf.mxu0
      %v380 = vadd.f32 0.0, %v379
      %v381 = vpop.f32.mrf.mxu0
      %v382 = vpop.f32.mrf.mxu0
      %v383 = vadd.f32 0.0, %v382
      %v384 = vpop.f32.mrf.mxu0
      %385 = vdwg.mxu0
      %v388 = vunpack.c.l.b16 %v227
      %v389 = vunpack.c.l.b16 %v228
      %v390 = vpack.c.b16 %v389, %v388
      %v398 = vsel %vm298, %v390, 0
      %400 = vmatprep.subr.bf16.mxu0 0
      %401 = vmatpush1.bf16.msra.mxu0 0
      %402 = vmatprep.subr.bf16.mxu0 0
      %403 = vmatpush1.bf16.msra.mxu0 0
      %404 = vmatprep.subr.bf16.mxu0 0
      %405 = vmatpush1.bf16.msra.mxu0 0
      %406 = vmatprep.subr.bf16.mxu0 0
      %407 = vmatpush1.bf16.msra.mxu0 0
      %408 = vmatprep.subr.bf16.mxu0 0
      %409 = vmatpush1.bf16.msra.mxu0 0
      %410 = vmatprep.subr.bf16.mxu0 0
      %411 = vmatpush1.bf16.msra.mxu0 0
      %412 = vmatprep.subr.bf16.mxu0 %v266
      %413 = vmatpush1.bf16.msra.mxu0 %v265
      %414 = vmatprep.subr.bf16.mxu0 %v262
      %415 = vmatpush1.bf16.msra.mxu0 %v261
      %416 = vmatprep.subr.bf16.mxu0 0
      %417 = vmatpush2.bf16.msra.mxu0 0
      %418 = vmatprep.subr.bf16.mxu0 0
      %419 = vmatpush2.bf16.msra.mxu0 0
      %420 = vmatprep.subr.bf16.mxu0 0
      %421 = vmatpush2.bf16.msra.mxu0 0
      %422 = vmatprep.subr.bf16.mxu0 0
      %423 = vmatpush2.bf16.msra.mxu0 0
      %424 = vmatprep.subr.bf16.mxu0 0
      %425 = vmatpush2.bf16.msra.mxu0 0
      %426 = vmatprep.subr.bf16.mxu0 0
      %427 = vmatpush2.bf16.msra.mxu0 0
      %428 = vmatprep.subr.bf16.mxu0 0
      %429 = vmatpush2.bf16.msra.mxu0 0
      %430 = vmatprep.subr.bf16.mxu0 0
      %431 = vmatpush2.bf16.msra.mxu0 0
      %432 = vmatprep.mubr.bf16.mxu0 0
      %433 = vmatmul.mubr.bf16.gmra.mxu0 %v398
      %v434 = vpop.f32.mrf.mxu0
      %v435 = vadd.f32 %v337, %v434
      %v436 = vpop.f32.mrf.mxu0
      %v437 = vadd.f32 %v339, %v436
      %v438 = vpop.f32.mrf.mxu0
      %v439 = vadd.f32 %v341, %v438
      %v440 = vpop.f32.mrf.mxu0
      %v441 = vadd.f32 %v343, %v440
      %442 = vdwg.mxu0
      %443 = vmatprep.subr.bf16.mxu0 0
      %444 = vmatpush1.bf16.msra.mxu0 0
      %445 = vmatprep.subr.bf16.mxu0 0
      %446 = vmatpush1.bf16.msra.mxu0 0
      %447 = vmatprep.subr.bf16.mxu0 0
      %448 = vmatpush1.bf16.msra.mxu0 0
      %449 = vmatprep.subr.bf16.mxu0 0
      %450 = vmatpush1.bf16.msra.mxu0 0
      %451 = vmatprep.subr.bf16.mxu0 0
      %452 = vmatpush1.bf16.msra.mxu0 0
      %453 = vmatprep.subr.bf16.mxu0 0
      %454 = vmatpush1.bf16.msra.mxu0 0
      %455 = vmatprep.subr.bf16.mxu0 0
      %456 = vmatpush1.bf16.msra.mxu0 %v267
      %457 = vmatprep.subr.bf16.mxu0 0
      %458 = vmatpush1.bf16.msra.mxu0 %v263
      %459 = vmatprep.subr.bf16.mxu0 0
      %460 = vmatpush2.bf16.msra.mxu0 0
      %461 = vmatprep.subr.bf16.mxu0 0
      %462 = vmatpush2.bf16.msra.mxu0 0
      %463 = vmatprep.subr.bf16.mxu0 0
      %464 = vmatpush2.bf16.msra.mxu0 0
      %465 = vmatprep.subr.bf16.mxu0 0
      %466 = vmatpush2.bf16.msra.mxu0 0
      %467 = vmatprep.subr.bf16.mxu0 0
      %468 = vmatpush2.bf16.msra.mxu0 0
      %469 = vmatprep.subr.bf16.mxu0 0
      %470 = vmatpush2.bf16.msra.mxu0 0
      %471 = vmatprep.subr.bf16.mxu0 0
      %472 = vmatpush2.bf16.msra.mxu0 0
      %473 = vmatprep.subr.bf16.mxu0 0
      %474 = vmatpush2.bf16.msra.mxu0 0
      %475 = vmatprep.mubr.bf16.mxu0 0
      %476 = vmatmul.mubr.bf16.gmra.mxu0 %v398
      %v477 = vpop.f32.mrf.mxu0
      %v478 = vadd.f32 %v380, %v477
      %v479 = vpop.f32.mrf.mxu0
      %v480 = vpop.f32.mrf.mxu0
      %v481 = vadd.f32 %v383, %v480
      %v482 = vpop.f32.mrf.mxu0
      %483 = vdwg.mxu0
      %s484 = scalar_lea.vmem %s200, 16
      %v485 = vld [vmem:[%s484] sm:$0xf]
      %v486 = vld [vmem:[%s484 + $0x4] sm:$0xf]
      %v489 = vunpack.c.l.b16 %v485
      %v490 = vunpack.c.l.b16 %v486
      %v491 = vpack.c.b16 %v490, %v489
      %492 = vrot.lane.b32.xlu0 %v261, 111
      %v493 = vpop.permute.xlu0 %492
      %494 = vrot.lane.b32.xlu0 %v262, 111
      %v495 = vpop.permute.xlu0 %494
      %496 = vrot.lane.b32.xlu0 %v263, 111
      %v497 = vpop.permute.xlu0 %496
      %498 = vrot.lane.b32.xlu0 %v264, 111
      %v499 = vpop.permute.xlu0 %498
      %500 = vrot.lane.b32.xlu0 %v265, 111
      %v501 = vpop.permute.xlu0 %500
      %502 = vrot.lane.b32.xlu0 %v266, 111
      %v503 = vpop.permute.xlu0 %502
      %504 = vrot.lane.b32.xlu0 %v267, 111
      %v505 = vpop.permute.xlu0 %504
      %506 = vrot.lane.b32.xlu0 %v268, 111
      %v507 = vpop.permute.xlu0 %506
      %vm508 = vcmask 908288
      %v509 = vsel %vm508, %v493, %v495
      %v510 = vsel %vm508, %v495, %v497
      %v511 = vsel %vm508, %v497, %v499
      %v512 = vsel %vm508, %v501, %v503
      %v513 = vsel %vm508, %v503, %v505
      %v514 = vsel %vm508, %v505, %v507
      %v522 = vsel %vm298, %v491, 0
      %524 = vmatprep.subr.bf16.mxu0 0
      %525 = vmatpush1.bf16.msra.mxu0 0
      %526 = vmatprep.subr.bf16.mxu0 0
      %527 = vmatpush1.bf16.msra.mxu0 0
      %528 = vmatprep.subr.bf16.mxu0 0
      %529 = vmatpush1.bf16.msra.mxu0 0
      %530 = vmatprep.subr.bf16.mxu0 0
      %531 = vmatpush1.bf16.msra.mxu0 0
      %532 = vmatprep.subr.bf16.mxu0 0
      %533 = vmatpush1.bf16.msra.mxu0 0
      %534 = vmatprep.subr.bf16.mxu0 0
      %535 = vmatpush1.bf16.msra.mxu0 0
      %536 = vmatprep.subr.bf16.mxu0 %v513
      %537 = vmatpush1.bf16.msra.mxu0 %v512
      %538 = vmatprep.subr.bf16.mxu0 %v510
      %539 = vmatpush1.bf16.msra.mxu0 %v509
      %540 = vmatprep.subr.bf16.mxu0 0
      %541 = vmatpush2.bf16.msra.mxu0 0
      %542 = vmatprep.subr.bf16.mxu0 0
      %543 = vmatpush2.bf16.msra.mxu0 0
      %544 = vmatprep.subr.bf16.mxu0 0
      %545 = vmatpush2.bf16.msra.mxu0 0
      %546 = vmatprep.subr.bf16.mxu0 0
      %547 = vmatpush2.bf16.msra.mxu0 0
      %548 = vmatprep.subr.bf16.mxu0 0
      %549 = vmatpush2.bf16.msra.mxu0 0
      %550 = vmatprep.subr.bf16.mxu0 0
      %551 = vmatpush2.bf16.msra.mxu0 0
      %552 = vmatprep.subr.bf16.mxu0 0
      %553 = vmatpush2.bf16.msra.mxu0 0
      %554 = vmatprep.subr.bf16.mxu0 0
      %555 = vmatpush2.bf16.msra.mxu0 0
      %556 = vmatprep.mubr.bf16.mxu0 0
      %557 = vmatmul.mubr.bf16.gmra.mxu0 %v522
      %v558 = vpop.f32.mrf.mxu0
      %v559 = vadd.f32 0.0, %v558
      %v560 = vpop.f32.mrf.mxu0
      %v561 = vadd.f32 0.0, %v560
      %v562 = vpop.f32.mrf.mxu0
      %v563 = vadd.f32 0.0, %v562
      %v564 = vpop.f32.mrf.mxu0
      %v565 = vadd.f32 0.0, %v564
      %566 = vdwg.mxu0
      %567 = vmatprep.subr.bf16.mxu0 0
      %568 = vmatpush1.bf16.msra.mxu0 0
      %569 = vmatprep.subr.bf16.mxu0 0
      %570 = vmatpush1.bf16.msra.mxu0 0
      %571 = vmatprep.subr.bf16.mxu0 0
      %572 = vmatpush1.bf16.msra.mxu0 0
      %573 = vmatprep.subr.bf16.mxu0 0
      %574 = vmatpush1.bf16.msra.mxu0 0
      %575 = vmatprep.subr.bf16.mxu0 0
      %576 = vmatpush1.bf16.msra.mxu0 0
      %577 = vmatprep.subr.bf16.mxu0 0
      %578 = vmatpush1.bf16.msra.mxu0 0
      %579 = vmatprep.subr.bf16.mxu0 0
      %580 = vmatpush1.bf16.msra.mxu0 %v514
      %581 = vmatprep.subr.bf16.mxu0 0
      %582 = vmatpush1.bf16.msra.mxu0 %v511
      %583 = vmatprep.subr.bf16.mxu0 0
      %584 = vmatpush2.bf16.msra.mxu0 0
      %585 = vmatprep.subr.bf16.mxu0 0
      %586 = vmatpush2.bf16.msra.mxu0 0
      %587 = vmatprep.subr.bf16.mxu0 0
      %588 = vmatpush2.bf16.msra.mxu0 0
      %589 = vmatprep.subr.bf16.mxu0 0
      %590 = vmatpush2.bf16.msra.mxu0 0
      %591 = vmatprep.subr.bf16.mxu0 0
      %592 = vmatpush2.bf16.msra.mxu0 0
      %593 = vmatprep.subr.bf16.mxu0 0
      %594 = vmatpush2.bf16.msra.mxu0 0
      %595 = vmatprep.subr.bf16.mxu0 0
      %596 = vmatpush2.bf16.msra.mxu0 0
      %597 = vmatprep.subr.bf16.mxu0 0
      %598 = vmatpush2.bf16.msra.mxu0 0
      %599 = vmatprep.mubr.bf16.mxu0 0
      %600 = vmatmul.mubr.bf16.gmra.mxu0 %v522
      %v601 = vpop.f32.mrf.mxu0
      %v602 = vadd.f32 0.0, %v601
      %v603 = vpop.f32.mrf.mxu0
      %v604 = vpop.f32.mrf.mxu0
      %v605 = vadd.f32 0.0, %v604
      %v606 = vpop.f32.mrf.mxu0
      %607 = vdwg.mxu0
      %v608 = vadd.f32 %v435, %v559
      %v609 = vadd.f32 %v437, %v561
      %v610 = vadd.f32 %v478, %v602
      %v611 = vadd.f32 %v439, %v563
      %v612 = vadd.f32 %v441, %v565
      %v613 = vadd.f32 %v481, %v605
      %s614 = scalar_lea.vmem %s200, 24
      %v615 = vld [vmem:[%s614] sm:$0xf]
      %v616 = vld [vmem:[%s614 + $0x4] sm:$0xf]
      %v619 = vunpack.c.l.b16 %v615
      %v620 = vunpack.c.l.b16 %v616
      %v621 = vpack.c.b16 %v620, %v619
      %622 = vrot.lane.b32.xlu0 %v261, 110
      %v623 = vpop.permute.xlu0 %622
      %624 = vrot.lane.b32.xlu0 %v262, 110
      %v625 = vpop.permute.xlu0 %624
      %626 = vrot.lane.b32.xlu0 %v263, 110
      %v627 = vpop.permute.xlu0 %626
      %628 = vrot.lane.b32.xlu0 %v264, 110
      %v629 = vpop.permute.xlu0 %628
      %630 = vrot.lane.b32.xlu0 %v265, 110
      %v631 = vpop.permute.xlu0 %630
      %632 = vrot.lane.b32.xlu0 %v266, 110
      %v633 = vpop.permute.xlu0 %632
      %634 = vrot.lane.b32.xlu0 %v267, 110
      %v635 = vpop.permute.xlu0 %634
      %636 = vrot.lane.b32.xlu0 %v268, 110
      %v637 = vpop.permute.xlu0 %636
      %vm638 = vcmask 900096
      %v639 = vsel %vm638, %v623, %v625
      %v640 = vsel %vm638, %v625, %v627
      %v641 = vsel %vm638, %v627, %v629
      %v642 = vsel %vm638, %v631, %v633
      %v643 = vsel %vm638, %v633, %v635
      %v644 = vsel %vm638, %v635, %v637
      %v652 = vsel %vm298, %v621, 0
      %654 = vmatprep.subr.bf16.mxu0 0
      %655 = vmatpush1.bf16.msra.mxu0 0
      %656 = vmatprep.subr.bf16.mxu0 0
      %657 = vmatpush1.bf16.msra.mxu0 0
      %658 = vmatprep.subr.bf16.mxu0 0
      %659 = vmatpush1.bf16.msra.mxu0 0
      %660 = vmatprep.subr.bf16.mxu0 0
      %661 = vmatpush1.bf16.msra.mxu0 0
      %662 = vmatprep.subr.bf16.mxu0 0
      %663 = vmatpush1.bf16.msra.mxu0 0
      %664 = vmatprep.subr.bf16.mxu0 0
      %665 = vmatpush1.bf16.msra.mxu0 0
      %666 = vmatprep.subr.bf16.mxu0 %v643
      %667 = vmatpush1.bf16.msra.mxu0 %v642
      %668 = vmatprep.subr.bf16.mxu0 %v640
      %669 = vmatpush1.bf16.msra.mxu0 %v639
      %670 = vmatprep.subr.bf16.mxu0 0
      %671 = vmatpush2.bf16.msra.mxu0 0
      %672 = vmatprep.subr.bf16.mxu0 0
      %673 = vmatpush2.bf16.msra.mxu0 0
      %674 = vmatprep.subr.bf16.mxu0 0
      %675 = vmatpush2.bf16.msra.mxu0 0
      %676 = vmatprep.subr.bf16.mxu0 0
      %677 = vmatpush2.bf16.msra.mxu0 0
      %678 = vmatprep.subr.bf16.mxu0 0
      %679 = vmatpush2.bf16.msra.mxu0 0
      %680 = vmatprep.subr.bf16.mxu0 0
      %681 = vmatpush2.bf16.msra.mxu0 0
      %682 = vmatprep.subr.bf16.mxu0 0
      %683 = vmatpush2.bf16.msra.mxu0 0
      %684 = vmatprep.subr.bf16.mxu0 0
      %685 = vmatpush2.bf16.msra.mxu0 0
      %686 = vmatprep.mubr.bf16.mxu0 0
      %687 = vmatmul.mubr.bf16.gmra.mxu0 %v652
      %v688 = vpop.f32.mrf.mxu0
      %v689 = vadd.f32 0.0, %v688
      %v690 = vpop.f32.mrf.mxu0
      %v691 = vadd.f32 0.0, %v690
      %v692 = vpop.f32.mrf.mxu0
      %v693 = vadd.f32 0.0, %v692
      %v694 = vpop.f32.mrf.mxu0
      %v695 = vadd.f32 0.0, %v694
      %696 = vdwg.mxu0
      %697 = vmatprep.subr.bf16.mxu0 0
      %698 = vmatpush1.bf16.msra.mxu0 0
      %699 = vmatprep.subr.bf16.mxu0 0
      %700 = vmatpush1.bf16.msra.mxu0 0
      %701 = vmatprep.subr.bf16.mxu0 0
      %702 = vmatpush1.bf16.msra.mxu0 0
      %703 = vmatprep.subr.bf16.mxu0 0
      %704 = vmatpush1.bf16.msra.mxu0 0
      %705 = vmatprep.subr.bf16.mxu0 0
      %706 = vmatpush1.bf16.msra.mxu0 0
      %707 = vmatprep.subr.bf16.mxu0 0
      %708 = vmatpush1.bf16.msra.mxu0 0
      %709 = vmatprep.subr.bf16.mxu0 0
      %710 = vmatpush1.bf16.msra.mxu0 %v644
      %711 = vmatprep.subr.bf16.mxu0 0
      %712 = vmatpush1.bf16.msra.mxu0 %v641
      %713 = vmatprep.subr.bf16.mxu0 0
      %714 = vmatpush2.bf16.msra.mxu0 0
      %715 = vmatprep.subr.bf16.mxu0 0
      %716 = vmatpush2.bf16.msra.mxu0 0
      %717 = vmatprep.subr.bf16.mxu0 0
      %718 = vmatpush2.bf16.msra.mxu0 0
      %719 = vmatprep.subr.bf16.mxu0 0
      %720 = vmatpush2.bf16.msra.mxu0 0
      %721 = vmatprep.subr.bf16.mxu0 0
      %722 = vmatpush2.bf16.msra.mxu0 0
      %723 = vmatprep.subr.bf16.mxu0 0
      %724 = vmatpush2.bf16.msra.mxu0 0
      %725 = vmatprep.subr.bf16.mxu0 0
      %726 = vmatpush2.bf16.msra.mxu0 0
      %727 = vmatprep.subr.bf16.mxu0 0
      %728 = vmatpush2.bf16.msra.mxu0 0
      %729 = vmatprep.mubr.bf16.mxu0 0
      %730 = vmatmul.mubr.bf16.gmra.mxu0 %v652
      %v731 = vpop.f32.mrf.mxu0
      %v732 = vadd.f32 0.0, %v731
      %v733 = vpop.f32.mrf.mxu0
      %v734 = vpop.f32.mrf.mxu0
      %v735 = vadd.f32 0.0, %v734
      %v736 = vpop.f32.mrf.mxu0
      %737 = vdwg.mxu0
      %v738 = vadd.f32 %v608, %v689
      %v739 = vadd.f32 %v609, %v691
      %v740 = vadd.f32 %v610, %v732
      %v741 = vadd.f32 %v611, %v693
      %v742 = vadd.f32 %v612, %v695
      %v743 = vadd.f32 %v613, %v735
      %v744 = vld [vmem:[%s2] sm:$0x7]
      %v746 = vlaneseq
      %v747 = vshrl.u32 %v746, 7
      %v748 = vsub.s32 0, %v747
      %v749 = vrot.slane %v744, %v748
      %v750 = vlaneseq
      %v751 = vshrl.u32 %v750, 7
      %v752 = vsub.s32 1, %v751
      %v753 = vrot.slane %v744, %v752
      %v754 = vlaneseq
      %v755 = vshrl.u32 %v754, 7
      %v756 = vsub.s32 2, %v755
      %v757 = vrot.slane %v744, %v756
      %v761 = vmul.f32 %v738, %v749
      %v762 = vmul.f32 %v739, %v753
      %v763 = vmul.f32 %v740, %v757
      %v764 = vmul.f32 %v741, %v749
      %v765 = vmul.f32 %v742, %v753
      %v766 = vmul.f32 %v743, %v757
      %v767 = vadd.f32 %v761, %v762
      %v768 = vadd.f32 %v767, %v763
      %769 = vadd.xlane.f32.xlu0 %v768
      %v770 = vpop.xlane.xlu0 %769
      %v771 = vadd.f32 %v764, %v765
      %v772 = vadd.f32 %v771, %v766
      %773 = vadd.xlane.f32.xlu0 %v772
      %v774 = vpop.xlane.xlu0 %773
      %v775 = vmul.f32 %v770, 0.00390625
      %v776 = vmul.f32 %v774, 0.00390625
      %v777 = vmul.f32 %v761, %v761
      %v778 = vmul.f32 %v762, %v762
      %v779 = vmul.f32 %v763, %v763
      %v780 = vmul.f32 %v764, %v764
      %v781 = vmul.f32 %v765, %v765
      %v782 = vmul.f32 %v766, %v766
      %v783 = vadd.f32 %v777, %v778
      %v784 = vadd.f32 %v783, %v779
      %785 = vadd.xlane.f32.xlu0 %v784
      %v786 = vpop.xlane.xlu0 %785
      %v787 = vadd.f32 %v780, %v781
      %v788 = vadd.f32 %v787, %v782
      %789 = vadd.xlane.f32.xlu0 %v788
      %v790 = vpop.xlane.xlu0 %789
      %v791 = vmul.f32 %v786, 0.00390625
      %v792 = vmul.f32 %v790, 0.00390625
      %v793 = vmul.f32 %v775, %v775
      %v794 = vmul.f32 %v776, %v776
      %v795 = vsub.f32 %v791, %v793
      %v796 = vsub.f32 %v792, %v794
      %v797 = vmax.f32 %v795, 0.0
      %v798 = vmax.f32 %v796, 0.0
      %v799 = vadd.f32 %v797, 1e-05
      %v800 = vadd.f32 %v798, 1e-05
      %v801 = vrsqrt.pop %v799
      %v802 = vrsqrt.pop %v800
      %v803 = vmul.f32 %v761, %v801
      %v804 = vmul.f32 %v762, %v801
      %v805 = vmul.f32 %v763, %v801
      %v806 = vmul.f32 %v764, %v802
      %v807 = vmul.f32 %v765, %v802
      %v808 = vmul.f32 %v766, %v802
      %v809 = vsub.f32 0.0, %v775
      %v810 = vsub.f32 0.0, %v776
      %v811 = vmul.f32 %v809, %v801
      %v812 = vmul.f32 %v810, %v802
      %v813 = vadd.f32 %v803, %v811
      %v814 = vadd.f32 %v804, %v811
      %v815 = vadd.f32 %v805, %v811
      %v816 = vadd.f32 %v806, %v812
      %v817 = vadd.f32 %v807, %v812
      %v818 = vadd.f32 %v808, %v812
      %v819 = vmul.f32 %v813, 0.2
      %v820 = vmul.f32 %v814, 0.2
      %v821 = vmul.f32 %v815, 0.2
      %v822 = vmul.f32 %v816, 0.2
      %v823 = vmul.f32 %v817, 0.2
      %v824 = vmul.f32 %v818, 0.2
      %v825 = vmax.f32 %v813, %v819
      %v826 = vmax.f32 %v814, %v820
      %v827 = vmax.f32 %v815, %v821
      %v828 = vmax.f32 %v816, %v822
      %v829 = vmax.f32 %v817, %v823
      %v830 = vmax.f32 %v818, %v824
      %v831 = vpack.c.bf16 %v828, %v825
      %v832 = vpack.c.bf16 %v829, %v826
      %v833 = vpack.c.bf16 %v830, %v827
      %v837 = vunpack.c.l.b16 %v831
      %v838 = vunpack.c.l.b16 %v832
      %v839 = vunpack.c.l.b16 %v833
      %v840 = vunpack.c.h.b16 %v831
      %v841 = vunpack.c.h.b16 %v832
      %v842 = vunpack.c.h.b16 %v833
      %v843 = vpack.c.b16 %v838, %v837
      %v844 = vpack.c.b16 %v839, %v839
      %v845 = vpack.c.b16 %v841, %v840
      %v846 = vpack.c.b16 %v842, %v842
      %851 = vst [vmem:[%s216] sm:$0xff] %v843
      %852 = vst [vmem:[%s216 + $0x8] sm:$0xf] %v844
      %853 = vst [vmem:[%s216 + $0xc] sm:$0xff] %v845
      %854 = vst [vmem:[%s216 + $0x14] sm:$0xf] %v846
      %s855 = smul.u32 2, %s19
      %p856 = scmp.lt.s32.totalorder %s18, 1
      %s857 = scalar_select %p856, %s18, 1
      %p858 = scmp.lt.s32.totalorder %s855, 1
      %s859 = scalar_select %p858, %s855, 1
      %s860 = smul.addr %s859, 3
      %s861 = smul.addr %s857, 6
      %s862 = sadd.s32 %s860, %s861
      %s863 = smul.addr %s862, 4
      %s864 = scalar_lea.vmem %s3, %s863
      // Predicated region
      $region33: #{dnpf_forward.6} parent=31 // pred_check
        %p865 = pneg %p119
      $region34: #{dnpf_forward.6} parent=31 // pred_check_branch
        %867 = sbr.rel (%p865) target = $region36
      $region35: #{dnpf_forward.6} parent=31 // pred_region
        %s868 = smul.u32 2, %s19
      $region36: #{dnpf_forward.6} parent=31 // pred_fallthru
        _
    $region32: #{dnpf_forward.6} parent=5 // pred_fallthru
      _
    %p869 = scmp.le.s32.totalorder 2, %s9
    // Predicated region
    $region37: #{dnpf_forward.6} parent=5 // pred_check
      %p870 = pneg %p869
    $region38: #{dnpf_forward.6} parent=5 // pred_check_branch
      %872 = sbr.rel (%p870) target = $region40
    $region39: #{dnpf_forward.6} parent=5 // pred_region
      %s873 = ssub.s32 %s9, 2
      // Predicated region
      $region41: #{dnpf_forward.6} parent=39 // pred_check
        %p874 = pneg %p125
      $region42: #{dnpf_forward.6} parent=39 // pred_check_branch
        %876 = sbr.rel (%p874) target = $region44
      $region43: #{dnpf_forward.6} parent=39 // pred_region
        %s877 = smul.u32 2, %s21
        %p878 = scmp.lt.s32.totalorder %s20, 1
        %s879 = scalar_select %p878, %s20, 1
        %p880 = scmp.lt.s32.totalorder %s877, 1
        %s881 = scalar_select %p880, %s877, 1
        %s882 = smul.addr %s881, 3
        %s883 = smul.addr %s879, 6
        %s884 = sadd.s32 %s882, %s883
        %s885 = smul.addr %s884, 4
        %s886 = scalar_lea.vmem %s3, %s885
      $region44: #{dnpf_forward.6} parent=39 // pred_fallthru
        _
    $region40: #{dnpf_forward.6} parent=5 // pred_fallthru
      _
  $region6: #{dnpf_forward.6} parent=0 // loop_footer
    %s13 = sadd.s32 1, %s9
  $region7: #{dnpf_forward.6} parent=0 // loop_footer_branch
    %8 = sbr.rel target = $region3
  $region8: #{dnpf_forward.6} parent=0 // loop_exit
    _

// kernel: dnpf_forward.7
$region0: #{dnpf_forward.7}
  #allocation0 [shape = 'u32[]', space=smem, size = 0x4, offset = 0x4, fixed_abs, tag = 'smem constant byte address 0x4 - core index']
  #allocation1 [shape = 'u32[144,128]{1,0:T(1,128)}', space=vmem, size = 0x12000, scoped, tag = 'internal scratch']
  %s0 = inlined_call_operand.vmem [shape: bf16[4,32,64], index: 0, kind: input, shape index: {}]
  %s1 = inlined_call_operand.vmem [shape: bf16[2,64,256], index: 1, kind: input, shape index: {}]
  %s2 = inlined_call_operand.vmem [shape: f32[1,128], index: 2, kind: input, shape index: {}]
  %s3 = inlined_call_operand.vmem [shape: bf16[2,32,128], index: 3, kind: output, shape index: {}]
  %s4 = sld [smem:[#allocation0]]
  $region45: #{dnpf_forward.7} parent=0
    _
  %s6 = ssub.s32 1, %s4
  %s7 = scalar_select 0, %s6, %s4
  loop: start=0, step=1, limit=4
  $region2: #{dnpf_forward.7} parent=0 // loop_pre_header
    _
  $region3: #{dnpf_forward.7} parent=0 // loop_header
    %s9 = sphi 0, %s13
    %p10 = scmp.ge.s32.totalorder %s9, 4
    %s16 = sphi 0, %s28
    %s17 = sphi 0, %s24
    %s18 = sphi 0, %s16
    %s19 = sphi 0, %s17
    %s20 = sphi 0, %s18
    %s21 = sphi 0, %s19
    %s31 = sphi 0, %s33
    %s34 = sphi 0, %s31
    %s35 = sphi 0, %s34
    %s51 = sphi 0, %s35
    %s57 = sphi 0, %s59
    %s60 = sphi 0, %s57
    %s61 = sphi 0, %s60
    %s77 = sphi 0, %s61
    %s81 = sphi 0, %s81
    %s83 = sphi 0, %s81
    %s84 = sphi 0, %s83
    %s98 = sphi 0, %s84
    %s106 = sphi 0, %s108
    %s109 = sphi 0, %s106
    %s110 = sphi 0, %s109
    %s126 = sphi 0, %s110
  $region4: #{dnpf_forward.7} parent=0 // loop_header_branch
    %12 = sbr.rel (%p10) target = $region8
  $region5: #{dnpf_forward.7} parent=0 // loop_body
    %s14 = ssub.s32 %s9, 1
    %s15 = ssub.s32 %s9, 2
    %s22 = sadd.s32 1, %s17
    %p23 = scmp.ge.s32.totalorder %s22, 1
    %s24 = scalar_select %p23, 0, %s22
    %s25 = sadd.s32 1, %s16
    %s26 = scalar_select %p23, %s25, %s16
    %p27 = scmp.ge.s32.totalorder %s26, 2
    %s28 = scalar_select %p27, 0, %s26
    %s29 = ssub.s32 %s17, %s24
    %p30 = scmp.eq.s32.totalorder %s29, 0
    %s32 = sadd.s32 %s31, 1
    %s33 = scalar_select %p30, %s31, %s32
    %p36 = pneg %p30
    %p37 = scmp.eq.s32.totalorder %s9, 1
    %p38 = por %p36, %p37
    %p39 = scmp.ne.s32.totalorder %s31, %s34
    %p40 = scmp.eq.s32.totalorder %s9, 0
    %p41 = por %p39, %p40
    %p42 = scmp.ne.s32.totalorder %s31, %s34
    %p43 = scmp.eq.s32.totalorder %s14, 1
    %p44 = por %p42, %p43
    %p45 = scmp.ne.s32.totalorder %s34, %s35
    %p46 = scmp.eq.s32.totalorder %s14, 0
    %p47 = por %p45, %p46
    %p48 = scmp.ne.s32.totalorder %s34, %s35
    %p49 = scmp.eq.s32.totalorder %s15, 1
    %p50 = por %p48, %p49
    %p52 = scmp.ne.s32.totalorder %s35, %s51
    %p53 = scmp.eq.s32.totalorder %s15, 0
    %p54 = por %p52, %p53
    %s55 = ssub.s32 %s16, %s28
    %p56 = scmp.eq.s32.totalorder %s55, 0
    %s58 = sadd.s32 %s57, 1
    %s59 = scalar_select %p56, %s57, %s58
    %p62 = pneg %p56
    %p63 = scmp.eq.s32.totalorder %s9, 1
    %p64 = por %p62, %p63
    %p65 = scmp.ne.s32.totalorder %s57, %s60
    %p66 = scmp.eq.s32.totalorder %s9, 0
    %p67 = por %p65, %p66
    %p68 = scmp.ne.s32.totalorder %s57, %s60
    %p69 = scmp.eq.s32.totalorder %s14, 1
    %p70 = por %p68, %p69
    %p71 = scmp.ne.s32.totalorder %s60, %s61
    %p72 = scmp.eq.s32.totalorder %s14, 0
    %p73 = por %p71, %p72
    %p74 = scmp.ne.s32.totalorder %s60, %s61
    %p75 = scmp.eq.s32.totalorder %s15, 1
    %p76 = por %p74, %p75
    %p78 = scmp.ne.s32.totalorder %s61, %s77
    %p79 = scmp.eq.s32.totalorder %s15, 0
    %p80 = por %p78, %p79
    %s82 = sadd.s32 %s81, 1
    %p85 = scmp.eq.s32.totalorder %s9, 1
    %p86 = scmp.ne.s32.totalorder %s81, %s83
    %p87 = scmp.eq.s32.totalorder %s9, 0
    %p88 = por %p86, %p87
    %p89 = scmp.ne.s32.totalorder %s81, %s83
    %p90 = scmp.eq.s32.totalorder %s14, 1
    %p91 = por %p89, %p90
    %p92 = scmp.ne.s32.totalorder %s83, %s84
    %p93 = scmp.eq.s32.totalorder %s14, 0
    %p94 = por %p92, %p93
    %p95 = scmp.ne.s32.totalorder %s83, %s84
    %p96 = scmp.eq.s32.totalorder %s15, 1
    %p97 = por %p95, %p96
    %p99 = scmp.ne.s32.totalorder %s84, %s98
    %p100 = scmp.eq.s32.totalorder %s15, 0
    %p101 = por %p99, %p100
    %s102 = ssub.s32 %s16, %s28
    %s103 = ssub.s32 %s17, %s24
    %s104 = sor.u32 %s102, %s103
    %p105 = scmp.eq.s32.totalorder %s104, 0
    %s107 = sadd.s32 %s106, 1
    %s108 = scalar_select %p105, %s106, %s107
    %p111 = pneg %p105
    %p112 = scmp.eq.s32.totalorder %s9, 1
    %p113 = por %p111, %p112
    %p114 = scmp.ne.s32.totalorder %s106, %s109
    %p115 = scmp.eq.s32.totalorder %s9, 0
    %p116 = por %p114, %p115
    %p117 = scmp.ne.s32.totalorder %s106, %s109
    %p118 = scmp.eq.s32.totalorder %s14, 1
    %p119 = por %p117, %p118
    %p120 = scmp.ne.s32.totalorder %s109, %s110
    %p121 = scmp.eq.s32.totalorder %s14, 0
    %p122 = por %p120, %p121
    %p123 = scmp.ne.s32.totalorder %s109, %s110
    %p124 = scmp.eq.s32.totalorder %s15, 1
    %p125 = por %p123, %p124
    %p127 = scmp.ne.s32.totalorder %s110, %s126
    %p128 = scmp.eq.s32.totalorder %s15, 0
    %p129 = por %p127, %p128
    %p130 = scmp.le.s32.totalorder 1, %s9
    %p131 = scmp.lt.s32.totalorder %s9, 3
    %p132 = pnand %p130, %p131
    %p133 = pneg %p132
    // Predicated region
    $region9: #{dnpf_forward.7} parent=5 // pred_check
      _
    $region10: #{dnpf_forward.7} parent=5 // pred_check_branch
      %135 = sbr.rel (%p132) target = $region12
    $region11: #{dnpf_forward.7} parent=5 // pred_region
      %s136 = ssub.s32 %s9, 1
      // Predicated region
      $region13: #{dnpf_forward.7} parent=11 // pred_check
        %p137 = pneg %p47
      $region14: #{dnpf_forward.7} parent=11 // pred_check_branch
        %139 = sbr.rel (%p137) target = $region16
      $region15: #{dnpf_forward.7} parent=11 // pred_region
        %s140 = smul.u32 4, %s19
        %p141 = scmp.lt.s32.totalorder %s140, 3
        %s142 = scalar_select %p141, %s140, 3
        %s143 = smul.addr %s142, 4
        %s144 = scalar_lea.vmem %s0, %s143
        %s145 = smul.u32 4, %s19
      $region16: #{dnpf_forward.7} parent=11 // pred_fallthru
        _
      // Predicated region
      $region17: #{dnpf_forward.7} parent=11 // pred_check
        %p146 = pneg %p94
      $region18: #{dnpf_forward.7} parent=11 // pred_check_branch
        %148 = sbr.rel (%p146) target = $region20
      $region19: #{dnpf_forward.7} parent=11 // pred_region
        _
      $region20: #{dnpf_forward.7} parent=11 // pred_fallthru
        _
    $region12: #{dnpf_forward.7} parent=5 // pred_fallthru
      _
    %p149 = scmp.lt.s32.totalorder %s9, 2
    // Predicated region
    $region21: #{dnpf_forward.7} parent=5 // pred_check
      %p150 = pneg %p149
    $region22: #{dnpf_forward.7} parent=5 // pred_check_branch
      %152 = sbr.rel (%p150) target = $region24
    $region23: #{dnpf_forward.7} parent=5 // pred_region
      // Predicated region
      $region25: #{dnpf_forward.7} parent=23 // pred_check
        %p153 = pneg %p67
      $region26: #{dnpf_forward.7} parent=23 // pred_check_branch
        %155 = sbr.rel (%p153) target = $region28
      $region27: #{dnpf_forward.7} parent=23 // pred_region
        %p156 = scmp.lt.s32.totalorder %s16, 1
        %s157 = scalar_select %p156, %s16, 1
        %s158 = smul.addr %s157, 16
        %s159 = smul.addr %s158, 4
        %s160 = scalar_lea.vmem %s1, %s159
      $region28: #{dnpf_forward.7} parent=23 // pred_fallthru
        _
    $region24: #{dnpf_forward.7} parent=5 // pred_fallthru
      _
    %p161 = scmp.le.s32.totalorder 1, %s9
    %p162 = scmp.lt.s32.totalorder %s9, 3
    %p163 = pnand %p161, %p162
    %p164 = pneg %p163
    // Predicated region
    $region29: #{dnpf_forward.7} parent=5 // pred_check
      _
    $region30: #{dnpf_forward.7} parent=5 // pred_check_branch
      %166 = sbr.rel (%p163) target = $region32
    $region31: #{dnpf_forward.7} parent=5 // pred_region
      %s167 = ssub.s32 %s9, 1
      %s168 = smul.u32 4, %s19
      %p169 = scmp.lt.s32.totalorder %s168, 3
      %s170 = scalar_select %p169, %s168, 3
      %s171 = smul.addr %s170, 4
      %s172 = scalar_lea.vmem %s0, %s171
      %p173 = pneg %p47
      %p174 = pneg %p44
      %p175 = scmp.lt.s32.totalorder %s18, 1
      %s176 = scalar_select %p175, %s18, 1
      %s177 = smul.addr %s176, 16
      %s178 = smul.addr %s177, 4
      %s179 = scalar_lea.vmem %s1, %s178
      %p180 = pneg %p73
      %p181 = pneg %p70
      %p182 = pneg %p94
      %p183 = pneg %p91
      %p184 = pneg %p122
      %p185 = pneg %p119
      %s186 = smul.u32 4, %s19
      %p187 = scmp.lt.s32.totalorder %s18, 1
      %s188 = scalar_select %p187, %s18, 1
      %p189 = scmp.lt.s32.totalorder %s186, 3
      %s190 = scalar_select %p189, %s186, 3
      %s191 = smul.addr %s188, 4
      %s192 = sadd.s32 %s190, %s191
      %s193 = smul.addr %s192, 4
      %s194 = scalar_lea.vmem %s3, %s193
      %s195 = smul.u32 4, %s19
      %p196 = scmp.lt.s32.totalorder %s195, 3
      %s197 = scalar_select %p196, %s195, 3
      %s198 = smul.addr %s197, 4
      %s199 = scalar_lea.vmem %s0, %s198
      %s200 = smul.u32 4, %s19
      %p201 = scmp.lt.s32.totalorder %s18, 1
      %s202 = scalar_select %p201, %s18, 1
      %s203 = smul.addr %s202, 16
      %s204 = smul.addr %s203, 4
      %s205 = scalar_lea.vmem %s1, %s204
      %s206 = smul.u32 4, %s19
      %p207 = scmp.lt.s32.totalorder %s18, 1
      %s208 = scalar_select %p207, %s18, 1
      %p209 = scmp.lt.s32.totalorder %s206, 3
      %s210 = scalar_select %p209, %s206, 3
      %s211 = smul.addr %s208, 4
      %s212 = sadd.s32 %s210, %s211
      %s213 = smul.addr %s212, 4
      %s214 = scalar_lea.vmem %s3, %s213
      %s215 = smul.u32 4, %s19
      %v217 = vld [vmem:[%s205] sm:$0xff]
      %v218 = vld [vmem:[%s205 + $0x8] sm:$0xff]
      %v219 = vld [vmem:[%s205 + $0x10] sm:$0xff]
      %v220 = vld [vmem:[%s205 + $0x18] sm:$0xff]
      %v221 = vld [vmem:[%s205 + $0x20] sm:$0xff]
      %v222 = vld [vmem:[%s205 + $0x28] sm:$0xff]
      %v223 = vld [vmem:[%s205 + $0x30] sm:$0xff]
      %v224 = vld [vmem:[%s205 + $0x38] sm:$0xff]
      %v225 = vld [vmem:[%s199] sm:$0xf]
      %v226 = vld [vmem:[%s199 + $0x4] sm:$0xf]
      %v227 = vld [vmem:[%s199 + $0x8] sm:$0xf]
      %v228 = vld [vmem:[%s199 + $0xc] sm:$0xf]
      %s229 = scalar_lea.vmem %s199, 16
      %v230 = vld [vmem:[%s229] sm:$0xf]
      %v231 = vld [vmem:[%s229 + $0x4] sm:$0xf]
      %v232 = vld [vmem:[%s229 + $0x8] sm:$0xf]
      %v233 = vld [vmem:[%s229 + $0xc] sm:$0xf]
      %v238 = vunpack.c.l.b16 %v230
      %v239 = vunpack.c.l.b16 %v231
      %v240 = vunpack.c.l.b16 %v232
      %v241 = vunpack.c.l.b16 %v233
      %v242 = vpack.c.b16 %v239, %v238
      %v243 = vpack.c.b16 %v241, %v240
      %v252 = vunpack.c.l.b16 %v217
      %v253 = vunpack.c.h.b16 %v217
      %v254 = vunpack.c.l.b16 %v218
      %v255 = vunpack.c.h.b16 %v218
      %v256 = vunpack.c.l.b16 %v219
      %v257 = vunpack.c.h.b16 %v219
      %v258 = vunpack.c.l.b16 %v220
      %v259 = vunpack.c.h.b16 %v220
      %v260 = vunpack.c.l.b16 %v221
      %v261 = vunpack.c.h.b16 %v221
      %v262 = vunpack.c.l.b16 %v222
      %v263 = vunpack.c.h.b16 %v222
      %v264 = vunpack.c.l.b16 %v223
      %v265 = vunpack.c.h.b16 %v223
      %v266 = vunpack.c.l.b16 %v224
      %v267 = vunpack.c.h.b16 %v224
      %v268 = vpack.c.b16 %v254, %v252
      %v269 = vpack.c.b16 %v255, %v253
      %v270 = vpack.c.b16 %v258, %v256
      %v271 = vpack.c.b16 %v259, %v257
      %v272 = vpack.c.b16 %v262, %v260
      %v273 = vpack.c.b16 %v263, %v261
      %v274 = vpack.c.b16 %v266, %v264
      %v275 = vpack.c.b16 %v267, %v265
      %276 = vrot.lane.b32.xlu0 %v268, 127
      %v277 = vpop.permute.xlu0 %276
      %278 = vrot.lane.b32.xlu0 %v269, 127
      %v279 = vpop.permute.xlu0 %278
      %280 = vrot.lane.b32.xlu0 %v270, 127
      %v281 = vpop.permute.xlu0 %280
      %282 = vrot.lane.b32.xlu0 %v271, 127
      %v283 = vpop.permute.xlu0 %282
      %284 = vrot.lane.b32.xlu0 %v272, 127
      %v285 = vpop.permute.xlu0 %284
      %286 = vrot.lane.b32.xlu0 %v273, 127
      %v287 = vpop.permute.xlu0 %286
      %288 = vrot.lane.b32.xlu0 %v274, 127
      %v289 = vpop.permute.xlu0 %288
      %290 = vrot.lane.b32.xlu0 %v275, 127
      %v291 = vpop.permute.xlu0 %290
      %vm292 = vcmask 1039360
      %v293 = vsel %vm292, %v277, %v279
      %v294 = vsel %vm292, %v281, %v283
      %v295 = vsel %vm292, %v285, %v287
      %v296 = vsel %vm292, %v289, %v291
      %vm301 = vcmask 523264
      %v303 = vsel %vm301, %v242, 0
      %v306 = vsel %vm301, %v243, 0
      %308 = vmatprep.subr.bf16.mxu0 0
      %309 = vmatpush1.bf16.msra.mxu0 0
      %310 = vmatprep.subr.bf16.mxu0 0
      %311 = vmatpush1.bf16.msra.mxu0 0
      %312 = vmatprep.subr.bf16.mxu0 0
      %313 = vmatpush1.bf16.msra.mxu0 0
      %314 = vmatprep.subr.bf16.mxu0 0
      %315 = vmatpush1.bf16.msra.mxu0 0
      %316 = vmatprep.subr.bf16.mxu0 0
      %317 = vmatpush1.bf16.msra.mxu0 %v296
      %318 = vmatprep.subr.bf16.mxu0 0
      %319 = vmatpush1.bf16.msra.mxu0 %v295
      %320 = vmatprep.subr.bf16.mxu0 0
      %321 = vmatpush1.bf16.msra.mxu0 %v294
      %322 = vmatprep.subr.bf16.mxu0 0
      %323 = vmatpush1.bf16.msra.mxu0 %v293
      %324 = vmatprep.subr.bf16.mxu0 0
      %325 = vmatpush2.bf16.msra.mxu0 0
      %326 = vmatprep.subr.bf16.mxu0 0
      %327 = vmatpush2.bf16.msra.mxu0 0
      %328 = vmatprep.subr.bf16.mxu0 0
      %329 = vmatpush2.bf16.msra.mxu0 0
      %330 = vmatprep.subr.bf16.mxu0 0
      %331 = vmatpush2.bf16.msra.mxu0 0
      %332 = vmatprep.subr.bf16.mxu0 0
      %333 = vmatpush2.bf16.msra.mxu0 0
      %334 = vmatprep.subr.bf16.mxu0 0
      %335 = vmatpush2.bf16.msra.mxu0 0
      %336 = vmatprep.subr.bf16.mxu0 0
      %337 = vmatpush2.bf16.msra.mxu0 0
      %338 = vmatprep.subr.bf16.mxu0 0
      %339 = vmatpush2.bf16.msra.mxu0 0
      %340 = vmatprep.mubr.bf16.mxu0 0
      %341 = vmatmul.mubr.bf16.gmra.mxu0 %v303
      %v342 = vpop.f32.mrf.mxu0
      %v343 = vadd.f32 0.0, %v342
      %v344 = vpop.f32.mrf.mxu0
      %v345 = vpop.f32.mrf.mxu0
      %v346 = vadd.f32 0.0, %v345
      %v347 = vpop.f32.mrf.mxu0
      %348 = vmatprep.mubr.bf16.mxu0 0
      %349 = vmatmul.mubr.bf16.gmra.mxu0 %v306
      %v350 = vpop.f32.mrf.mxu0
      %v351 = vadd.f32 0.0, %v350
      %v352 = vpop.f32.mrf.mxu0
      %v353 = vpop.f32.mrf.mxu0
      %v354 = vadd.f32 0.0, %v353
      %v355 = vpop.f32.mrf.mxu0
      %356 = vdwg.mxu0
      %v361 = vunpack.c.l.b16 %v225
      %v362 = vunpack.c.l.b16 %v226
      %v363 = vunpack.c.l.b16 %v227
      %v364 = vunpack.c.l.b16 %v228
      %v365 = vpack.c.b16 %v362, %v361
      %v366 = vpack.c.b16 %v364, %v363
      %v372 = vsel %vm301, %v365, 0
      %v375 = vsel %vm301, %v366, 0
      %377 = vmatprep.subr.bf16.mxu0 0
      %378 = vmatpush1.bf16.msra.mxu0 0
      %379 = vmatprep.subr.bf16.mxu0 0
      %380 = vmatpush1.bf16.msra.mxu0 0
      %381 = vmatprep.subr.bf16.mxu0 0
      %382 = vmatpush1.bf16.msra.mxu0 0
      %383 = vmatprep.subr.bf16.mxu0 0
      %384 = vmatpush1.bf16.msra.mxu0 0
      %385 = vmatprep.subr.bf16.mxu0 0
      %386 = vmatpush1.bf16.msra.mxu0 %v274
      %387 = vmatprep.subr.bf16.mxu0 0
      %388 = vmatpush1.bf16.msra.mxu0 %v272
      %389 = vmatprep.subr.bf16.mxu0 0
      %390 = vmatpush1.bf16.msra.mxu0 %v270
      %391 = vmatprep.subr.bf16.mxu0 0
      %392 = vmatpush1.bf16.msra.mxu0 %v268
      %393 = vmatprep.subr.bf16.mxu0 0
      %394 = vmatpush2.bf16.msra.mxu0 0
      %395 = vmatprep.subr.bf16.mxu0 0
      %396 = vmatpush2.bf16.msra.mxu0 0
      %397 = vmatprep.subr.bf16.mxu0 0
      %398 = vmatpush2.bf16.msra.mxu0 0
      %399 = vmatprep.subr.bf16.mxu0 0
      %400 = vmatpush2.bf16.msra.mxu0 0
      %401 = vmatprep.subr.bf16.mxu0 0
      %402 = vmatpush2.bf16.msra.mxu0 0
      %403 = vmatprep.subr.bf16.mxu0 0
      %404 = vmatpush2.bf16.msra.mxu0 0
      %405 = vmatprep.subr.bf16.mxu0 0
      %406 = vmatpush2.bf16.msra.mxu0 0
      %407 = vmatprep.subr.bf16.mxu0 0
      %408 = vmatpush2.bf16.msra.mxu0 0
      %409 = vmatprep.mubr.bf16.mxu0 0
      %410 = vmatmul.mubr.bf16.gmra.mxu0 %v372
      %v411 = vpop.f32.mrf.mxu0
      %v412 = vadd.f32 %v343, %v411
      %v413 = vpop.f32.mrf.mxu0
      %v414 = vpop.f32.mrf.mxu0
      %v415 = vadd.f32 %v346, %v414
      %v416 = vpop.f32.mrf.mxu0
      %417 = vmatprep.mubr.bf16.mxu0 0
      %418 = vmatmul.mubr.bf16.gmra.mxu0 %v375
      %v419 = vpop.f32.mrf.mxu0
      %v420 = vadd.f32 %v351, %v419
      %v421 = vpop.f32.mrf.mxu0
      %v422 = vpop.f32.mrf.mxu0
      %v423 = vadd.f32 %v354, %v422
      %v424 = vpop.f32.mrf.mxu0
      %425 = vdwg.mxu0
      %s426 = scalar_lea.vmem %s199, 32
      %v427 = vld [vmem:[%s426] sm:$0xf]
      %v428 = vld [vmem:[%s426 + $0x4] sm:$0xf]
      %v429 = vld [vmem:[%s426 + $0x8] sm:$0xf]
      %v430 = vld [vmem:[%s426 + $0xc] sm:$0xf]
      %v435 = vunpack.c.l.b16 %v427
      %v436 = vunpack.c.l.b16 %v428
      %v437 = vunpack.c.l.b16 %v429
      %v438 = vunpack.c.l.b16 %v430
      %v439 = vpack.c.b16 %v436, %v435
      %v440 = vpack.c.b16 %v438, %v437
      %441 = vrot.lane.b32.xlu0 %v268, 119
      %v442 = vpop.permute.xlu0 %441
      %443 = vrot.lane.b32.xlu0 %v269, 119
      %v444 = vpop.permute.xlu0 %443
      %445 = vrot.lane.b32.xlu0 %v270, 119
      %v446 = vpop.permute.xlu0 %445
      %447 = vrot.lane.b32.xlu0 %v271, 119
      %v448 = vpop.permute.xlu0 %447
      %449 = vrot.lane.b32.xlu0 %v272, 119
      %v450 = vpop.permute.xlu0 %449
      %451 = vrot.lane.b32.xlu0 %v273, 119
      %v452 = vpop.permute.xlu0 %451
      %453 = vrot.lane.b32.xlu0 %v274, 119
      %v454 = vpop.permute.xlu0 %453
      %455 = vrot.lane.b32.xlu0 %v275, 119
      %v456 = vpop.permute.xlu0 %455
      %vm457 = vcmask 973824
      %v458 = vsel %vm457, %v442, %v444
      %v459 = vsel %vm457, %v446, %v448
      %v460 = vsel %vm457, %v450, %v452
      %v461 = vsel %vm457, %v454, %v456
      %v467 = vsel %vm301, %v439, 0
      %v470 = vsel %vm301, %v440, 0
      %472 = vmatprep.subr.bf16.mxu0 0
      %473 = vmatpush1.bf16.msra.mxu0 0
      %474 = vmatprep.subr.bf16.mxu0 0
      %475 = vmatpush1.bf16.msra.mxu0 0
      %476 = vmatprep.subr.bf16.mxu0 0
      %477 = vmatpush1.bf16.msra.mxu0 0
      %478 = vmatprep.subr.bf16.mxu0 0
      %479 = vmatpush1.bf16.msra.mxu0 0
      %480 = vmatprep.subr.bf16.mxu0 0
      %481 = vmatpush1.bf16.msra.mxu0 %v461
      %482 = vmatprep.subr.bf16.mxu0 0
      %483 = vmatpush1.bf16.msra.mxu0 %v460
      %484 = vmatprep.subr.bf16.mxu0 0
      %485 = vmatpush1.bf16.msra.mxu0 %v459
      %486 = vmatprep.subr.bf16.mxu0 0
      %487 = vmatpush1.bf16.msra.mxu0 %v458
      %488 = vmatprep.subr.bf16.mxu0 0
      %489 = vmatpush2.bf16.msra.mxu0 0
      %490 = vmatprep.subr.bf16.mxu0 0
      %491 = vmatpush2.bf16.msra.mxu0 0
      %492 = vmatprep.subr.bf16.mxu0 0
      %493 = vmatpush2.bf16.msra.mxu0 0
      %494 = vmatprep.subr.bf16.mxu0 0
      %495 = vmatpush2.bf16.msra.mxu0 0
      %496 = vmatprep.subr.bf16.mxu0 0
      %497 = vmatpush2.bf16.msra.mxu0 0
      %498 = vmatprep.subr.bf16.mxu0 0
      %499 = vmatpush2.bf16.msra.mxu0 0
      %500 = vmatprep.subr.bf16.mxu0 0
      %501 = vmatpush2.bf16.msra.mxu0 0
      %502 = vmatprep.subr.bf16.mxu0 0
      %503 = vmatpush2.bf16.msra.mxu0 0
      %504 = vmatprep.mubr.bf16.mxu0 0
      %505 = vmatmul.mubr.bf16.gmra.mxu0 %v467
      %v506 = vpop.f32.mrf.mxu0
      %v507 = vadd.f32 0.0, %v506
      %v508 = vpop.f32.mrf.mxu0
      %v509 = vpop.f32.mrf.mxu0
      %v510 = vadd.f32 0.0, %v509
      %v511 = vpop.f32.mrf.mxu0
      %512 = vmatprep.mubr.bf16.mxu0 0
      %513 = vmatmul.mubr.bf16.gmra.mxu0 %v470
      %v514 = vpop.f32.mrf.mxu0
      %v515 = vadd.f32 0.0, %v514
      %v516 = vpop.f32.mrf.mxu0
      %v517 = vpop.f32.mrf.mxu0
      %v518 = vadd.f32 0.0, %v517
      %v519 = vpop.f32.mrf.mxu0
      %520 = vdwg.mxu0
      %v521 = vadd.f32 %v412, %v507
      %v522 = vadd.f32 %v415, %v510
      %v523 = vadd.f32 %v420, %v515
      %v524 = vadd.f32 %v423, %v518
      %s525 = scalar_lea.vmem %s199, 48
      %v526 = vld [vmem:[%s525] sm:$0xf]
      %v527 = vld [vmem:[%s525 + $0x4] sm:$0xf]
      %v528 = vld [vmem:[%s525 + $0x8] sm:$0xf]
      %v529 = vld [vmem:[%s525 + $0xc] sm:$0xf]
      %v534 = vunpack.c.l.b16 %v526
      %v535 = vunpack.c.l.b16 %v527
      %v536 = vunpack.c.l.b16 %v528
      %v537 = vunpack.c.l.b16 %v529
      %v538 = vpack.c.b16 %v535, %v534
      %v539 = vpack.c.b16 %v537, %v536
      %540 = vrot.lane.b32.xlu0 %v268, 118
      %v541 = vpop.permute.xlu0 %540
      %542 = vrot.lane.b32.xlu0 %v269, 118
      %v543 = vpop.permute.xlu0 %542
      %544 = vrot.lane.b32.xlu0 %v270, 118
      %v545 = vpop.permute.xlu0 %544
      %546 = vrot.lane.b32.xlu0 %v271, 118
      %v547 = vpop.permute.xlu0 %546
      %548 = vrot.lane.b32.xlu0 %v272, 118
      %v549 = vpop.permute.xlu0 %548
      %550 = vrot.lane.b32.xlu0 %v273, 118
      %v551 = vpop.permute.xlu0 %550
      %552 = vrot.lane.b32.xlu0 %v274, 118
      %v553 = vpop.permute.xlu0 %552
      %554 = vrot.lane.b32.xlu0 %v275, 118
      %v555 = vpop.permute.xlu0 %554
      %vm556 = vcmask 965632
      %v557 = vsel %vm556, %v541, %v543
      %v558 = vsel %vm556, %v545, %v547
      %v559 = vsel %vm556, %v549, %v551
      %v560 = vsel %vm556, %v553, %v555
      %v566 = vsel %vm301, %v538, 0
      %v569 = vsel %vm301, %v539, 0
      %571 = vmatprep.subr.bf16.mxu0 0
      %572 = vmatpush1.bf16.msra.mxu0 0
      %573 = vmatprep.subr.bf16.mxu0 0
      %574 = vmatpush1.bf16.msra.mxu0 0
      %575 = vmatprep.subr.bf16.mxu0 0
      %576 = vmatpush1.bf16.msra.mxu0 0
      %577 = vmatprep.subr.bf16.mxu0 0
      %578 = vmatpush1.bf16.msra.mxu0 0
      %579 = vmatprep.subr.bf16.mxu0 0
      %580 = vmatpush1.bf16.msra.mxu0 %v560
      %581 = vmatprep.subr.bf16.mxu0 0
      %582 = vmatpush1.bf16.msra.mxu0 %v559
      %583 = vmatprep.subr.bf16.mxu0 0
      %584 = vmatpush1.bf16.msra.mxu0 %v558
      %585 = vmatprep.subr.bf16.mxu0 0
      %586 = vmatpush1.bf16.msra.mxu0 %v557
      %587 = vmatprep.subr.bf16.mxu0 0
      %588 = vmatpush2.bf16.msra.mxu0 0
      %589 = vmatprep.subr.bf16.mxu0 0
      %590 = vmatpush2.bf16.msra.mxu0 0
      %591 = vmatprep.subr.bf16.mxu0 0
      %592 = vmatpush2.bf16.msra.mxu0 0
      %593 = vmatprep.subr.bf16.mxu0 0
      %594 = vmatpush2.bf16.msra.mxu0 0
      %595 = vmatprep.subr.bf16.mxu0 0
      %596 = vmatpush2.bf16.msra.mxu0 0
      %597 = vmatprep.subr.bf16.mxu0 0
      %598 = vmatpush2.bf16.msra.mxu0 0
      %599 = vmatprep.subr.bf16.mxu0 0
      %600 = vmatpush2.bf16.msra.mxu0 0
      %601 = vmatprep.subr.bf16.mxu0 0
      %602 = vmatpush2.bf16.msra.mxu0 0
      %603 = vmatprep.mubr.bf16.mxu0 0
      %604 = vmatmul.mubr.bf16.gmra.mxu0 %v566
      %v605 = vpop.f32.mrf.mxu0
      %v606 = vadd.f32 0.0, %v605
      %v607 = vpop.f32.mrf.mxu0
      %v608 = vpop.f32.mrf.mxu0
      %v609 = vadd.f32 0.0, %v608
      %v610 = vpop.f32.mrf.mxu0
      %611 = vmatprep.mubr.bf16.mxu0 0
      %612 = vmatmul.mubr.bf16.gmra.mxu0 %v569
      %v613 = vpop.f32.mrf.mxu0
      %v614 = vadd.f32 0.0, %v613
      %v615 = vpop.f32.mrf.mxu0
      %v616 = vpop.f32.mrf.mxu0
      %v617 = vadd.f32 0.0, %v616
      %v618 = vpop.f32.mrf.mxu0
      %619 = vdwg.mxu0
      %v620 = vadd.f32 %v521, %v606
      %v621 = vadd.f32 %v522, %v609
      %v622 = vadd.f32 %v523, %v614
      %v623 = vadd.f32 %v524, %v617
      %v624 = vld [vmem:[%s2] sm:$0x1]
      %v626 = vlaneseq
      %v627 = vshrl.u32 %v626, 7
      %v628 = vsub.s32 0, %v627
      %v629 = vrot.slane %v624, %v628
      %v631 = vmul.f32 %v620, %v629
      %v632 = vmul.f32 %v621, %v629
      %v633 = vmul.f32 %v622, %v629
      %v634 = vmul.f32 %v623, %v629
      %635 = vadd.xlane.f32.xlu0 %v631
      %v636 = vpop.xlane.xlu0 %635
      %637 = vadd.xlane.f32.xlu0 %v632
      %v638 = vpop.xlane.xlu0 %637
      %639 = vadd.xlane.f32.xlu0 %v633
      %v640 = vpop.xlane.xlu0 %639
      %641 = vadd.xlane.f32.xlu0 %v634
      %v642 = vpop.xlane.xlu0 %641
      %v643 = vmul.f32 %v636, 0.015625
      %v644 = vmul.f32 %v638, 0.015625
      %v645 = vmul.f32 %v640, 0.015625
      %v646 = vmul.f32 %v642, 0.015625
      %v647 = vmul.f32 %v631, %v631
      %v648 = vmul.f32 %v632, %v632
      %v649 = vmul.f32 %v633, %v633
      %v650 = vmul.f32 %v634, %v634
      %651 = vadd.xlane.f32.xlu0 %v647
      %v652 = vpop.xlane.xlu0 %651
      %653 = vadd.xlane.f32.xlu0 %v648
      %v654 = vpop.xlane.xlu0 %653
      %655 = vadd.xlane.f32.xlu0 %v649
      %v656 = vpop.xlane.xlu0 %655
      %657 = vadd.xlane.f32.xlu0 %v650
      %v658 = vpop.xlane.xlu0 %657
      %v659 = vmul.f32 %v652, 0.015625
      %v660 = vmul.f32 %v654, 0.015625
      %v661 = vmul.f32 %v656, 0.015625
      %v662 = vmul.f32 %v658, 0.015625
      %v663 = vmul.f32 %v643, %v643
      %v664 = vmul.f32 %v644, %v644
      %v665 = vmul.f32 %v645, %v645
      %v666 = vmul.f32 %v646, %v646
      %v667 = vsub.f32 %v659, %v663
      %v668 = vsub.f32 %v660, %v664
      %v669 = vsub.f32 %v661, %v665
      %v670 = vsub.f32 %v662, %v666
      %v671 = vmax.f32 %v667, 0.0
      %v672 = vmax.f32 %v668, 0.0
      %v673 = vmax.f32 %v669, 0.0
      %v674 = vmax.f32 %v670, 0.0
      %v675 = vadd.f32 %v671, 1e-05
      %v676 = vadd.f32 %v672, 1e-05
      %v677 = vadd.f32 %v673, 1e-05
      %v678 = vadd.f32 %v674, 1e-05
      %v679 = vrsqrt.pop %v675
      %v680 = vrsqrt.pop %v676
      %v681 = vrsqrt.pop %v677
      %v682 = vrsqrt.pop %v678
      %v683 = vmul.f32 %v631, %v679
      %v684 = vmul.f32 %v632, %v680
      %v685 = vmul.f32 %v633, %v681
      %v686 = vmul.f32 %v634, %v682
      %v687 = vsub.f32 0.0, %v643
      %v688 = vsub.f32 0.0, %v644
      %v689 = vsub.f32 0.0, %v645
      %v690 = vsub.f32 0.0, %v646
      %v691 = vmul.f32 %v687, %v679
      %v692 = vmul.f32 %v688, %v680
      %v693 = vmul.f32 %v689, %v681
      %v694 = vmul.f32 %v690, %v682
      %v695 = vadd.f32 %v683, %v691
      %v696 = vadd.f32 %v684, %v692
      %v697 = vadd.f32 %v685, %v693
      %v698 = vadd.f32 %v686, %v694
      %v699 = vmul.f32 %v695, 0.2
      %v700 = vmul.f32 %v696, 0.2
      %v701 = vmul.f32 %v697, 0.2
      %v702 = vmul.f32 %v698, 0.2
      %v703 = vmax.f32 %v695, %v699
      %v704 = vmax.f32 %v696, %v700
      %v705 = vmax.f32 %v697, %v701
      %v706 = vmax.f32 %v698, %v702
      %v707 = vpack.c.bf16 %v704, %v703
      %v708 = vpack.c.bf16 %v706, %v705
      %v711 = vunpack.c.l.b16 %v707
      %v712 = vunpack.c.h.b16 %v707
      %v713 = vunpack.c.l.b16 %v708
      %v714 = vunpack.c.h.b16 %v708
      %v715 = vpack.c.b16 %v711, %v711
      %v716 = vpack.c.b16 %v712, %v712
      %v717 = vpack.c.b16 %v713, %v713
      %v718 = vpack.c.b16 %v714, %v714
      %723 = vst [vmem:[%s214] sm:$0xf] %v715
      %724 = vst [vmem:[%s214 + $0x4] sm:$0xf] %v716
      %725 = vst [vmem:[%s214 + $0x8] sm:$0xf] %v717
      %726 = vst [vmem:[%s214 + $0xc] sm:$0xf] %v718
      %s727 = smul.u32 4, %s19
      %p728 = scmp.lt.s32.totalorder %s18, 1
      %s729 = scalar_select %p728, %s18, 1
      %p730 = scmp.lt.s32.totalorder %s727, 3
      %s731 = scalar_select %p730, %s727, 3
      %s732 = smul.addr %s729, 4
      %s733 = sadd.s32 %s731, %s732
      %s734 = smul.addr %s733, 4
      %s735 = scalar_lea.vmem %s3, %s734
      // Predicated region
      $region33: #{dnpf_forward.7} parent=31 // pred_check
        %p736 = pneg %p119
      $region34: #{dnpf_forward.7} parent=31 // pred_check_branch
        %738 = sbr.rel (%p736) target = $region36
      $region35: #{dnpf_forward.7} parent=31 // pred_region
        %s739 = smul.u32 4, %s19
      $region36: #{dnpf_forward.7} parent=31 // pred_fallthru
        _
    $region32: #{dnpf_forward.7} parent=5 // pred_fallthru
      _
    %p740 = scmp.le.s32.totalorder 2, %s9
    // Predicated region
    $region37: #{dnpf_forward.7} parent=5 // pred_check
      %p741 = pneg %p740
    $region38: #{dnpf_forward.7} parent=5 // pred_check_branch
      %743 = sbr.rel (%p741) target = $region40
    $region39: #{dnpf_forward.7} parent=5 // pred_region
      %s744 = ssub.s32 %s9, 2
      // Predicated region
      $region41: #{dnpf_forward.7} parent=39 // pred_check
        %p745 = pneg %p125
      $region42: #{dnpf_forward.7} parent=39 // pred_check_branch
        %747 = sbr.rel (%p745) target = $region44
      $region43: #{dnpf_forward.7} parent=39 // pred_region
        %s748 = smul.u32 4, %s21
        %p749 = scmp.lt.s32.totalorder %s20, 1
        %s750 = scalar_select %p749, %s20, 1
        %p751 = scmp.lt.s32.totalorder %s748, 3
        %s752 = scalar_select %p751, %s748, 3
        %s753 = smul.addr %s750, 4
        %s754 = sadd.s32 %s752, %s753
        %s755 = smul.addr %s754, 4
        %s756 = scalar_lea.vmem %s3, %s755
      $region44: #{dnpf_forward.7} parent=39 // pred_fallthru
        _
    $region40: #{dnpf_forward.7} parent=5 // pred_fallthru
      _
  $region6: #{dnpf_forward.7} parent=0 // loop_footer
    %s13 = sadd.s32 1, %s9
  $region7: #{dnpf_forward.7} parent=0 // loop_footer_branch
    %8 = sbr.rel target = $region3
  $region8: #{dnpf_forward.7} parent=0 // loop_exit
    _

// kernel: dnpf_forward.8
$region0: #{dnpf_forward.8}
  #allocation0 [shape = 'u32[]', space=smem, size = 0x4, offset = 0x4, fixed_abs, tag = 'smem constant byte address 0x4 - core index']
  #allocation1 [shape = 'u32[144,128]{1,0:T(1,128)}', space=vmem, size = 0x12000, scoped, tag = 'internal scratch']
  %s0 = inlined_call_operand.vmem [shape: bf16[4,64,128], index: 0, kind: input, shape index: {}]
  %s1 = inlined_call_operand.vmem [shape: bf16[2,128,256], index: 1, kind: input, shape index: {}]
  %s2 = inlined_call_operand.vmem [shape: f32[1,128], index: 2, kind: input, shape index: {}]
  %s3 = inlined_call_operand.vmem [shape: bf16[2,64,128], index: 3, kind: output, shape index: {}]
  %s4 = sld [smem:[#allocation0]]
  $region45: #{dnpf_forward.8} parent=0
    _
  %s6 = ssub.s32 1, %s4
  %s7 = scalar_select 0, %s6, %s4
  loop: start=0, step=1, limit=4
  $region2: #{dnpf_forward.8} parent=0 // loop_pre_header
    _
  $region3: #{dnpf_forward.8} parent=0 // loop_header
    %s9 = sphi 0, %s13
    %p10 = scmp.ge.s32.totalorder %s9, 4
    %s16 = sphi 0, %s28
    %s17 = sphi 0, %s24
    %s18 = sphi 0, %s16
    %s19 = sphi 0, %s17
    %s20 = sphi 0, %s18
    %s21 = sphi 0, %s19
    %s31 = sphi 0, %s33
    %s34 = sphi 0, %s31
    %s35 = sphi 0, %s34
    %s51 = sphi 0, %s35
    %s57 = sphi 0, %s59
    %s60 = sphi 0, %s57
    %s61 = sphi 0, %s60
    %s77 = sphi 0, %s61
    %s81 = sphi 0, %s81
    %s83 = sphi 0, %s81
    %s84 = sphi 0, %s83
    %s98 = sphi 0, %s84
    %s106 = sphi 0, %s108
    %s109 = sphi 0, %s106
    %s110 = sphi 0, %s109
    %s126 = sphi 0, %s110
  $region4: #{dnpf_forward.8} parent=0 // loop_header_branch
    %12 = sbr.rel (%p10) target = $region8
  $region5: #{dnpf_forward.8} parent=0 // loop_body
    %s14 = ssub.s32 %s9, 1
    %s15 = ssub.s32 %s9, 2
    %s22 = sadd.s32 1, %s17
    %p23 = scmp.ge.s32.totalorder %s22, 1
    %s24 = scalar_select %p23, 0, %s22
    %s25 = sadd.s32 1, %s16
    %s26 = scalar_select %p23, %s25, %s16
    %p27 = scmp.ge.s32.totalorder %s26, 2
    %s28 = scalar_select %p27, 0, %s26
    %s29 = ssub.s32 %s17, %s24
    %p30 = scmp.eq.s32.totalorder %s29, 0
    %s32 = sadd.s32 %s31, 1
    %s33 = scalar_select %p30, %s31, %s32
    %p36 = pneg %p30
    %p37 = scmp.eq.s32.totalorder %s9, 1
    %p38 = por %p36, %p37
    %p39 = scmp.ne.s32.totalorder %s31, %s34
    %p40 = scmp.eq.s32.totalorder %s9, 0
    %p41 = por %p39, %p40
    %p42 = scmp.ne.s32.totalorder %s31, %s34
    %p43 = scmp.eq.s32.totalorder %s14, 1
    %p44 = por %p42, %p43
    %p45 = scmp.ne.s32.totalorder %s34, %s35
    %p46 = scmp.eq.s32.totalorder %s14, 0
    %p47 = por %p45, %p46
    %p48 = scmp.ne.s32.totalorder %s34, %s35
    %p49 = scmp.eq.s32.totalorder %s15, 1
    %p50 = por %p48, %p49
    %p52 = scmp.ne.s32.totalorder %s35, %s51
    %p53 = scmp.eq.s32.totalorder %s15, 0
    %p54 = por %p52, %p53
    %s55 = ssub.s32 %s16, %s28
    %p56 = scmp.eq.s32.totalorder %s55, 0
    %s58 = sadd.s32 %s57, 1
    %s59 = scalar_select %p56, %s57, %s58
    %p62 = pneg %p56
    %p63 = scmp.eq.s32.totalorder %s9, 1
    %p64 = por %p62, %p63
    %p65 = scmp.ne.s32.totalorder %s57, %s60
    %p66 = scmp.eq.s32.totalorder %s9, 0
    %p67 = por %p65, %p66
    %p68 = scmp.ne.s32.totalorder %s57, %s60
    %p69 = scmp.eq.s32.totalorder %s14, 1
    %p70 = por %p68, %p69
    %p71 = scmp.ne.s32.totalorder %s60, %s61
    %p72 = scmp.eq.s32.totalorder %s14, 0
    %p73 = por %p71, %p72
    %p74 = scmp.ne.s32.totalorder %s60, %s61
    %p75 = scmp.eq.s32.totalorder %s15, 1
    %p76 = por %p74, %p75
    %p78 = scmp.ne.s32.totalorder %s61, %s77
    %p79 = scmp.eq.s32.totalorder %s15, 0
    %p80 = por %p78, %p79
    %s82 = sadd.s32 %s81, 1
    %p85 = scmp.eq.s32.totalorder %s9, 1
    %p86 = scmp.ne.s32.totalorder %s81, %s83
    %p87 = scmp.eq.s32.totalorder %s9, 0
    %p88 = por %p86, %p87
    %p89 = scmp.ne.s32.totalorder %s81, %s83
    %p90 = scmp.eq.s32.totalorder %s14, 1
    %p91 = por %p89, %p90
    %p92 = scmp.ne.s32.totalorder %s83, %s84
    %p93 = scmp.eq.s32.totalorder %s14, 0
    %p94 = por %p92, %p93
    %p95 = scmp.ne.s32.totalorder %s83, %s84
    %p96 = scmp.eq.s32.totalorder %s15, 1
    %p97 = por %p95, %p96
    %p99 = scmp.ne.s32.totalorder %s84, %s98
    %p100 = scmp.eq.s32.totalorder %s15, 0
    %p101 = por %p99, %p100
    %s102 = ssub.s32 %s16, %s28
    %s103 = ssub.s32 %s17, %s24
    %s104 = sor.u32 %s102, %s103
    %p105 = scmp.eq.s32.totalorder %s104, 0
    %s107 = sadd.s32 %s106, 1
    %s108 = scalar_select %p105, %s106, %s107
    %p111 = pneg %p105
    %p112 = scmp.eq.s32.totalorder %s9, 1
    %p113 = por %p111, %p112
    %p114 = scmp.ne.s32.totalorder %s106, %s109
    %p115 = scmp.eq.s32.totalorder %s9, 0
    %p116 = por %p114, %p115
    %p117 = scmp.ne.s32.totalorder %s106, %s109
    %p118 = scmp.eq.s32.totalorder %s14, 1
    %p119 = por %p117, %p118
    %p120 = scmp.ne.s32.totalorder %s109, %s110
    %p121 = scmp.eq.s32.totalorder %s14, 0
    %p122 = por %p120, %p121
    %p123 = scmp.ne.s32.totalorder %s109, %s110
    %p124 = scmp.eq.s32.totalorder %s15, 1
    %p125 = por %p123, %p124
    %p127 = scmp.ne.s32.totalorder %s110, %s126
    %p128 = scmp.eq.s32.totalorder %s15, 0
    %p129 = por %p127, %p128
    %p130 = scmp.le.s32.totalorder 1, %s9
    %p131 = scmp.lt.s32.totalorder %s9, 3
    %p132 = pnand %p130, %p131
    %p133 = pneg %p132
    // Predicated region
    $region9: #{dnpf_forward.8} parent=5 // pred_check
      _
    $region10: #{dnpf_forward.8} parent=5 // pred_check_branch
      %135 = sbr.rel (%p132) target = $region12
    $region11: #{dnpf_forward.8} parent=5 // pred_region
      %s136 = ssub.s32 %s9, 1
      // Predicated region
      $region13: #{dnpf_forward.8} parent=11 // pred_check
        %p137 = pneg %p47
      $region14: #{dnpf_forward.8} parent=11 // pred_check_branch
        %139 = sbr.rel (%p137) target = $region16
      $region15: #{dnpf_forward.8} parent=11 // pred_region
        %s140 = smul.u32 8, %s19
        %p141 = scmp.lt.s32.totalorder %s140, 7
        %s142 = scalar_select %p141, %s140, 7
        %s143 = smul.addr %s142, 4
        %s144 = scalar_lea.vmem %s0, %s143
        %s145 = smul.u32 8, %s19
      $region16: #{dnpf_forward.8} parent=11 // pred_fallthru
        _
      // Predicated region
      $region17: #{dnpf_forward.8} parent=11 // pred_check
        %p146 = pneg %p94
      $region18: #{dnpf_forward.8} parent=11 // pred_check_branch
        %148 = sbr.rel (%p146) target = $region20
      $region19: #{dnpf_forward.8} parent=11 // pred_region
        _
      $region20: #{dnpf_forward.8} parent=11 // pred_fallthru
        _
    $region12: #{dnpf_forward.8} parent=5 // pred_fallthru
      _
    %p149 = scmp.lt.s32.totalorder %s9, 2
    // Predicated region
    $region21: #{dnpf_forward.8} parent=5 // pred_check
      %p150 = pneg %p149
    $region22: #{dnpf_forward.8} parent=5 // pred_check_branch
      %152 = sbr.rel (%p150) target = $region24
    $region23: #{dnpf_forward.8} parent=5 // pred_region
      // Predicated region
      $region25: #{dnpf_forward.8} parent=23 // pred_check
        %p153 = pneg %p67
      $region26: #{dnpf_forward.8} parent=23 // pred_check_branch
        %155 = sbr.rel (%p153) target = $region28
      $region27: #{dnpf_forward.8} parent=23 // pred_region
        %p156 = scmp.lt.s32.totalorder %s16, 1
        %s157 = scalar_select %p156, %s16, 1
        %s158 = smul.addr %s157, 32
        %s159 = smul.addr %s158, 4
        %s160 = scalar_lea.vmem %s1, %s159
      $region28: #{dnpf_forward.8} parent=23 // pred_fallthru
        _
    $region24: #{dnpf_forward.8} parent=5 // pred_fallthru
      _
    %p161 = scmp.le.s32.totalorder 1, %s9
    %p162 = scmp.lt.s32.totalorder %s9, 3
    %p163 = pnand %p161, %p162
    %p164 = pneg %p163
    // Predicated region
    $region29: #{dnpf_forward.8} parent=5 // pred_check
      _
    $region30: #{dnpf_forward.8} parent=5 // pred_check_branch
      %166 = sbr.rel (%p163) target = $region32
    $region31: #{dnpf_forward.8} parent=5 // pred_region
      %s167 = ssub.s32 %s9, 1
      %s168 = smul.u32 8, %s19
      %p169 = scmp.lt.s32.totalorder %s168, 7
      %s170 = scalar_select %p169, %s168, 7
      %s171 = smul.addr %s170, 4
      %s172 = scalar_lea.vmem %s0, %s171
      %p173 = pneg %p47
      %p174 = pneg %p44
      %p175 = scmp.lt.s32.totalorder %s18, 1
      %s176 = scalar_select %p175, %s18, 1
      %s177 = smul.addr %s176, 32
      %s178 = smul.addr %s177, 4
      %s179 = scalar_lea.vmem %s1, %s178
      %p180 = pneg %p73
      %p181 = pneg %p70
      %p182 = pneg %p94
      %p183 = pneg %p91
      %p184 = pneg %p122
      %p185 = pneg %p119
      %s186 = smul.u32 8, %s19
      %p187 = scmp.lt.s32.totalorder %s18, 1
      %s188 = scalar_select %p187, %s18, 1
      %p189 = scmp.lt.s32.totalorder %s186, 7
      %s190 = scalar_select %p189, %s186, 7
      %s191 = smul.addr %s188, 8
      %s192 = sadd.s32 %s190, %s191
      %s193 = smul.addr %s192, 4
      %s194 = scalar_lea.vmem %s3, %s193
      %s195 = smul.u32 8, %s19
      %p196 = scmp.lt.s32.totalorder %s195, 7
      %s197 = scalar_select %p196, %s195, 7
      %s198 = smul.addr %s197, 4
      %s199 = scalar_lea.vmem %s0, %s198
      %s200 = smul.u32 8, %s19
      %p201 = scmp.lt.s32.totalorder %s18, 1
      %s202 = scalar_select %p201, %s18, 1
      %s203 = smul.addr %s202, 32
      %s204 = smul.addr %s203, 4
      %s205 = scalar_lea.vmem %s1, %s204
      %s206 = smul.u32 8, %s19
      %p207 = scmp.lt.s32.totalorder %s18, 1
      %s208 = scalar_select %p207, %s18, 1
      %p209 = scmp.lt.s32.totalorder %s206, 7
      %s210 = scalar_select %p209, %s206, 7
      %s211 = smul.addr %s208, 8
      %s212 = sadd.s32 %s210, %s211
      %s213 = smul.addr %s212, 4
      %s214 = scalar_lea.vmem %s3, %s213
      %s215 = smul.u32 8, %s19
      %v217 = vld [vmem:[%s205] sm:$0xff]
      %v218 = vld [vmem:[%s205 + $0x8] sm:$0xff]
      %v219 = vld [vmem:[%s205 + $0x10] sm:$0xff]
      %v220 = vld [vmem:[%s205 + $0x18] sm:$0xff]
      %v221 = vld [vmem:[%s205 + $0x20] sm:$0xff]
      %v222 = vld [vmem:[%s205 + $0x28] sm:$0xff]
      %v223 = vld [vmem:[%s205 + $0x30] sm:$0xff]
      %v224 = vld [vmem:[%s205 + $0x38] sm:$0xff]
      %v225 = vld [vmem:[%s205 + $0x40] sm:$0xff]
      %v226 = vld [vmem:[%s205 + $0x48] sm:$0xff]
      %v227 = vld [vmem:[%s205 + $0x50] sm:$0xff]
      %v228 = vld [vmem:[%s205 + $0x58] sm:$0xff]
      %v229 = vld [vmem:[%s205 + $0x60] sm:$0xff]
      %v230 = vld [vmem:[%s205 + $0x68] sm:$0xff]
      %v231 = vld [vmem:[%s205 + $0x70] sm:$0xff]
      %v232 = vld [vmem:[%s205 + $0x78] sm:$0xff]
      %v233 = vld [vmem:[%s199] sm:$0xf]
      %v234 = vld [vmem:[%s199 + $0x4] sm:$0xf]
      %v235 = vld [vmem:[%s199 + $0x8] sm:$0xf]
      %v236 = vld [vmem:[%s199 + $0xc] sm:$0xf]
      %v237 = vld [vmem:[%s199 + $0x10] sm:$0xf]
      %v238 = vld [vmem:[%s199 + $0x14] sm:$0xf]
      %v239 = vld [vmem:[%s199 + $0x18] sm:$0xf]
      %v240 = vld [vmem:[%s199 + $0x1c] sm:$0xf]
      %s241 = scalar_lea.vmem %s199, 32
      %v242 = vld [vmem:[%s241] sm:$0xf]
      %v243 = vld [vmem:[%s241 + $0x4] sm:$0xf]
      %v244 = vld [vmem:[%s241 + $0x8] sm:$0xf]
      %v245 = vld [vmem:[%s241 + $0xc] sm:$0xf]
      %v246 = vld [vmem:[%s241 + $0x10] sm:$0xf]
      %v247 = vld [vmem:[%s241 + $0x14] sm:$0xf]
      %v248 = vld [vmem:[%s241 + $0x18] sm:$0xf]
      %v249 = vld [vmem:[%s241 + $0x1c] sm:$0xf]
      %v258 = vunpack.c.l.b16 %v242
      %v259 = vunpack.c.l.b16 %v243
      %v260 = vunpack.c.l.b16 %v244
      %v261 = vunpack.c.l.b16 %v245
      %v262 = vunpack.c.l.b16 %v246
      %v263 = vunpack.c.l.b16 %v247
      %v264 = vunpack.c.l.b16 %v248
      %v265 = vunpack.c.l.b16 %v249
      %v266 = vpack.c.b16 %v259, %v258
      %v267 = vpack.c.b16 %v261, %v260
      %v268 = vpack.c.b16 %v263, %v262
      %v269 = vpack.c.b16 %v265, %v264
      %v290 = vunpack.c.l.b16 %v217
      %v291 = vunpack.c.h.b16 %v217
      %v292 = vunpack.c.l.b16 %v218
      %v293 = vunpack.c.h.b16 %v218
      %v294 = vunpack.c.l.b16 %v219
      %v295 = vunpack.c.h.b16 %v219
      %v296 = vunpack.c.l.b16 %v220
      %v297 = vunpack.c.h.b16 %v220
      %v298 = vunpack.c.l.b16 %v221
      %v299 = vunpack.c.h.b16 %v221
      %v300 = vunpack.c.l.b16 %v222
      %v301 = vunpack.c.h.b16 %v222
      %v302 = vunpack.c.l.b16 %v223
      %v303 = vunpack.c.h.b16 %v223
      %v304 = vunpack.c.l.b16 %v224
      %v305 = vunpack.c.h.b16 %v224
      %v306 = vunpack.c.l.b16 %v225
      %v307 = vunpack.c.h.b16 %v225
      %v308 = vunpack.c.l.b16 %v226
      %v309 = vunpack.c.h.b16 %v226
      %v310 = vunpack.c.l.b16 %v227
      %v311 = vunpack.c.h.b16 %v227
      %v312 = vunpack.c.l.b16 %v228
      %v313 = vunpack.c.h.b16 %v228
      %v314 = vunpack.c.l.b16 %v229
      %v315 = vunpack.c.h.b16 %v229
      %v316 = vunpack.c.l.b16 %v230
      %v317 = vunpack.c.h.b16 %v230
      %v318 = vunpack.c.l.b16 %v231
      %v319 = vunpack.c.h.b16 %v231
      %v320 = vunpack.c.l.b16 %v232
      %v321 = vunpack.c.h.b16 %v232
      %v322 = vpack.c.b16 %v292, %v290
      %v323 = vpack.c.b16 %v293, %v291
      %v324 = vpack.c.b16 %v296, %v294
      %v325 = vpack.c.b16 %v297, %v295
      %v326 = vpack.c.b16 %v300, %v298
      %v327 = vpack.c.b16 %v301, %v299
      %v328 = vpack.c.b16 %v304, %v302
      %v329 = vpack.c.b16 %v305, %v303
      %v330 = vpack.c.b16 %v308, %v306
      %v331 = vpack.c.b16 %v309, %v307
      %v332 = vpack.c.b16 %v312, %v310
      %v333 = vpack.c.b16 %v313, %v311
      %v334 = vpack.c.b16 %v316, %v314
      %v335 = vpack.c.b16 %v317, %v315
      %v336 = vpack.c.b16 %v320, %v318
      %v337 = vpack.c.b16 %v321, %v319
      %338 = vrot.lane.b32.xlu0 %v322, 127
      %v339 = vpop.permute.xlu0 %338
      %340 = vrot.lane.b32.xlu0 %v323, 127
      %v341 = vpop.permute.xlu0 %340
      %342 = vrot.lane.b32.xlu0 %v324, 127
      %v343 = vpop.permute.xlu0 %342
      %344 = vrot.lane.b32.xlu0 %v325, 127
      %v345 = vpop.permute.xlu0 %344
      %346 = vrot.lane.b32.xlu0 %v326, 127
      %v347 = vpop.permute.xlu0 %346
      %348 = vrot.lane.b32.xlu0 %v327, 127
      %v349 = vpop.permute.xlu0 %348
      %350 = vrot.lane.b32.xlu0 %v328, 127
      %v351 = vpop.permute.xlu0 %350
      %352 = vrot.lane.b32.xlu0 %v329, 127
      %v353 = vpop.permute.xlu0 %352
      %354 = vrot.lane.b32.xlu0 %v330, 127
      %v355 = vpop.permute.xlu0 %354
      %356 = vrot.lane.b32.xlu0 %v331, 127
      %v357 = vpop.permute.xlu0 %356
      %358 = vrot.lane.b32.xlu0 %v332, 127
      %v359 = vpop.permute.xlu0 %358
      %360 = vrot.lane.b32.xlu0 %v333, 127
      %v361 = vpop.permute.xlu0 %360
      %362 = vrot.lane.b32.xlu0 %v334, 127
      %v363 = vpop.permute.xlu0 %362
      %364 = vrot.lane.b32.xlu0 %v335, 127
      %v365 = vpop.permute.xlu0 %364
      %366 = vrot.lane.b32.xlu0 %v336, 127
      %v367 = vpop.permute.xlu0 %366
      %368 = vrot.lane.b32.xlu0 %v337, 127
      %v369 = vpop.permute.xlu0 %368
      %vm370 = vcmask 1039360
      %v371 = vsel %vm370, %v339, %v341
      %v372 = vsel %vm370, %v343, %v345
      %v373 = vsel %vm370, %v347, %v349
      %v374 = vsel %vm370, %v351, %v353
      %v375 = vsel %vm370, %v355, %v357
      %v376 = vsel %vm370, %v359, %v361
      %v377 = vsel %vm370, %v363, %v365
      %v378 = vsel %vm370, %v367, %v369
      %387 = vmatprep.subr.bf16.mxu0 0
      %388 = vmatpush1.bf16.msra.mxu0 %v378
      %389 = vmatprep.subr.bf16.mxu0 0
      %390 = vmatpush1.bf16.msra.mxu0 %v377
      %391 = vmatprep.subr.bf16.mxu0 0
      %392 = vmatpush1.bf16.msra.mxu0 %v376
      %393 = vmatprep.subr.bf16.mxu0 0
      %394 = vmatpush1.bf16.msra.mxu0 %v375
      %395 = vmatprep.subr.bf16.mxu0 0
      %396 = vmatpush1.bf16.msra.mxu0 %v374
      %397 = vmatprep.subr.bf16.mxu0 0
      %398 = vmatpush1.bf16.msra.mxu0 %v373
      %399 = vmatprep.subr.bf16.mxu0 0
      %400 = vmatpush1.bf16.msra.mxu0 %v372
      %401 = vmatprep.subr.bf16.mxu0 0
      %402 = vmatpush1.bf16.msra.mxu0 %v371
      %403 = vmatprep.subr.bf16.mxu0 0
      %404 = vmatpush2.bf16.msra.mxu0 0
      %405 = vmatprep.subr.bf16.mxu0 0
      %406 = vmatpush2.bf16.msra.mxu0 0
      %407 = vmatprep.subr.bf16.mxu0 0
      %408 = vmatpush2.bf16.msra.mxu0 0
      %409 = vmatprep.subr.bf16.mxu0 0
      %410 = vmatpush2.bf16.msra.mxu0 0
      %411 = vmatprep.subr.bf16.mxu0 0
      %412 = vmatpush2.bf16.msra.mxu0 0
      %413 = vmatprep.subr.bf16.mxu0 0
      %414 = vmatpush2.bf16.msra.mxu0 0
      %415 = vmatprep.subr.bf16.mxu0 0
      %416 = vmatpush2.bf16.msra.mxu0 0
      %417 = vmatprep.subr.bf16.mxu0 0
      %418 = vmatpush2.bf16.msra.mxu0 0
      %419 = vmatprep.mubr.bf16.mxu0 0
      %420 = vmatmul.mubr.bf16.gmra.mxu0 %v266
      %v421 = vpop.f32.mrf.mxu0
      %v422 = vadd.f32 0.0, %v421
      %v423 = vpop.f32.mrf.mxu0
      %v424 = vpop.f32.mrf.mxu0
      %v425 = vadd.f32 0.0, %v424
      %v426 = vpop.f32.mrf.mxu0
      %427 = vmatprep.mubr.bf16.mxu0 0
      %428 = vmatmul.mubr.bf16.gmra.mxu0 %v267
      %v429 = vpop.f32.mrf.mxu0
      %v430 = vadd.f32 0.0, %v429
      %v431 = vpop.f32.mrf.mxu0
      %v432 = vpop.f32.mrf.mxu0
      %v433 = vadd.f32 0.0, %v432
      %v434 = vpop.f32.mrf.mxu0
      %435 = vmatprep.mubr.bf16.mxu0 0
      %436 = vmatmul.mubr.bf16.gmra.mxu0 %v268
      %v437 = vpop.f32.mrf.mxu0
      %v438 = vadd.f32 0.0, %v437
      %v439 = vpop.f32.mrf.mxu0
      %v440 = vpop.f32.mrf.mxu0
      %v441 = vadd.f32 0.0, %v440
      %v442 = vpop.f32.mrf.mxu0
      %443 = vmatprep.mubr.bf16.mxu0 0
      %444 = vmatmul.mubr.bf16.gmra.mxu0 %v269
      %v445 = vpop.f32.mrf.mxu0
      %v446 = vadd.f32 0.0, %v445
      %v447 = vpop.f32.mrf.mxu0
      %v448 = vpop.f32.mrf.mxu0
      %v449 = vadd.f32 0.0, %v448
      %v450 = vpop.f32.mrf.mxu0
      %451 = vdwg.mxu0
      %v460 = vunpack.c.l.b16 %v233
      %v461 = vunpack.c.l.b16 %v234
      %v462 = vunpack.c.l.b16 %v235
      %v463 = vunpack.c.l.b16 %v236
      %v464 = vunpack.c.l.b16 %v237
      %v465 = vunpack.c.l.b16 %v238
      %v466 = vunpack.c.l.b16 %v239
      %v467 = vunpack.c.l.b16 %v240
      %v468 = vpack.c.b16 %v461, %v460
      %v469 = vpack.c.b16 %v463, %v462
      %v470 = vpack.c.b16 %v465, %v464
      %v471 = vpack.c.b16 %v467, %v466
      %484 = vmatprep.subr.bf16.mxu0 0
      %485 = vmatpush1.bf16.msra.mxu0 %v336
      %486 = vmatprep.subr.bf16.mxu0 0
      %487 = vmatpush1.bf16.msra.mxu0 %v334
      %488 = vmatprep.subr.bf16.mxu0 0
      %489 = vmatpush1.bf16.msra.mxu0 %v332
      %490 = vmatprep.subr.bf16.mxu0 0
      %491 = vmatpush1.bf16.msra.mxu0 %v330
      %492 = vmatprep.subr.bf16.mxu0 0
      %493 = vmatpush1.bf16.msra.mxu0 %v328
      %494 = vmatprep.subr.bf16.mxu0 0
      %495 = vmatpush1.bf16.msra.mxu0 %v326
      %496 = vmatprep.subr.bf16.mxu0 0
      %497 = vmatpush1.bf16.msra.mxu0 %v324
      %498 = vmatprep.subr.bf16.mxu0 0
      %499 = vmatpush1.bf16.msra.mxu0 %v322
      %500 = vmatprep.subr.bf16.mxu0 0
      %501 = vmatpush2.bf16.msra.mxu0 0
      %502 = vmatprep.subr.bf16.mxu0 0
      %503 = vmatpush2.bf16.msra.mxu0 0
      %504 = vmatprep.subr.bf16.mxu0 0
      %505 = vmatpush2.bf16.msra.mxu0 0
      %506 = vmatprep.subr.bf16.mxu0 0
      %507 = vmatpush2.bf16.msra.mxu0 0
      %508 = vmatprep.subr.bf16.mxu0 0
      %509 = vmatpush2.bf16.msra.mxu0 0
      %510 = vmatprep.subr.bf16.mxu0 0
      %511 = vmatpush2.bf16.msra.mxu0 0
      %512 = vmatprep.subr.bf16.mxu0 0
      %513 = vmatpush2.bf16.msra.mxu0 0
      %514 = vmatprep.subr.bf16.mxu0 0
      %515 = vmatpush2.bf16.msra.mxu0 0
      %516 = vmatprep.mubr.bf16.mxu0 0
      %517 = vmatmul.mubr.bf16.gmra.mxu0 %v468
      %v518 = vpop.f32.mrf.mxu0
      %v519 = vadd.f32 %v422, %v518
      %v520 = vpop.f32.mrf.mxu0
      %v521 = vpop.f32.mrf.mxu0
      %v522 = vadd.f32 %v425, %v521
      %v523 = vpop.f32.mrf.mxu0
      %524 = vmatprep.mubr.bf16.mxu0 0
      %525 = vmatmul.mubr.bf16.gmra.mxu0 %v469
      %v526 = vpop.f32.mrf.mxu0
      %v527 = vadd.f32 %v430, %v526
      %v528 = vpop.f32.mrf.mxu0
      %v529 = vpop.f32.mrf.mxu0
      %v530 = vadd.f32 %v433, %v529
      %v531 = vpop.f32.mrf.mxu0
      %532 = vmatprep.mubr.bf16.mxu0 0
      %533 = vmatmul.mubr.bf16.gmra.mxu0 %v470
      %v534 = vpop.f32.mrf.mxu0
      %v535 = vadd.f32 %v438, %v534
      %v536 = vpop.f32.mrf.mxu0
      %v537 = vpop.f32.mrf.mxu0
      %v538 = vadd.f32 %v441, %v537
      %v539 = vpop.f32.mrf.mxu0
      %540 = vmatprep.mubr.bf16.mxu0 0
      %541 = vmatmul.mubr.bf16.gmra.mxu0 %v471
      %v542 = vpop.f32.mrf.mxu0
      %v543 = vadd.f32 %v446, %v542
      %v544 = vpop.f32.mrf.mxu0
      %v545 = vpop.f32.mrf.mxu0
      %v546 = vadd.f32 %v449, %v545
      %v547 = vpop.f32.mrf.mxu0
      %548 = vdwg.mxu0
      %s549 = scalar_lea.vmem %s199, 64
      %v550 = vld [vmem:[%s549] sm:$0xf]
      %v551 = vld [vmem:[%s549 + $0x4] sm:$0xf]
      %v552 = vld [vmem:[%s549 + $0x8] sm:$0xf]
      %v553 = vld [vmem:[%s549 + $0xc] sm:$0xf]
      %v554 = vld [vmem:[%s549 + $0x10] sm:$0xf]
      %v555 = vld [vmem:[%s549 + $0x14] sm:$0xf]
      %v556 = vld [vmem:[%s549 + $0x18] sm:$0xf]
      %v557 = vld [vmem:[%s549 + $0x1c] sm:$0xf]
      %v566 = vunpack.c.l.b16 %v550
      %v567 = vunpack.c.l.b16 %v551
      %v568 = vunpack.c.l.b16 %v552
      %v569 = vunpack.c.l.b16 %v553
      %v570 = vunpack.c.l.b16 %v554
      %v571 = vunpack.c.l.b16 %v555
      %v572 = vunpack.c.l.b16 %v556
      %v573 = vunpack.c.l.b16 %v557
      %v574 = vpack.c.b16 %v567, %v566
      %v575 = vpack.c.b16 %v569, %v568
      %v576 = vpack.c.b16 %v571, %v570
      %v577 = vpack.c.b16 %v573, %v572
      %582 = vrot.lane.b32.xlu0 %v322, 123
      %v583 = vpop.permute.xlu0 %582
      %584 = vrot.lane.b32.xlu0 %v323, 123
      %v585 = vpop.permute.xlu0 %584
      %586 = vrot.lane.b32.xlu0 %v324, 123
      %v587 = vpop.permute.xlu0 %586
      %588 = vrot.lane.b32.xlu0 %v325, 123
      %v589 = vpop.permute.xlu0 %588
      %590 = vrot.lane.b32.xlu0 %v326, 123
      %v591 = vpop.permute.xlu0 %590
      %592 = vrot.lane.b32.xlu0 %v327, 123
      %v593 = vpop.permute.xlu0 %592
      %594 = vrot.lane.b32.xlu0 %v328, 123
      %v595 = vpop.permute.xlu0 %594
      %596 = vrot.lane.b32.xlu0 %v329, 123
      %v597 = vpop.permute.xlu0 %596
      %598 = vrot.lane.b32.xlu0 %v330, 123
      %v599 = vpop.permute.xlu0 %598
      %600 = vrot.lane.b32.xlu0 %v331, 123
      %v601 = vpop.permute.xlu0 %600
      %602 = vrot.lane.b32.xlu0 %v332, 123
      %v603 = vpop.permute.xlu0 %602
      %604 = vrot.lane.b32.xlu0 %v333, 123
      %v605 = vpop.permute.xlu0 %604
      %606 = vrot.lane.b32.xlu0 %v334, 123
      %v607 = vpop.permute.xlu0 %606
      %608 = vrot.lane.b32.xlu0 %v335, 123
      %v609 = vpop.permute.xlu0 %608
      %610 = vrot.lane.b32.xlu0 %v336, 123
      %v611 = vpop.permute.xlu0 %610
      %612 = vrot.lane.b32.xlu0 %v337, 123
      %v613 = vpop.permute.xlu0 %612
      %vm614 = vcmask 1006592
      %v615 = vsel %vm614, %v583, %v585
      %v616 = vsel %vm614, %v587, %v589
      %v617 = vsel %vm614, %v591, %v593
      %v618 = vsel %vm614, %v595, %v597
      %v619 = vsel %vm614, %v599, %v601
      %v620 = vsel %vm614, %v603, %v605
      %v621 = vsel %vm614, %v607, %v609
      %v622 = vsel %vm614, %v611, %v613
      %631 = vmatprep.subr.bf16.mxu0 0
      %632 = vmatpush1.bf16.msra.mxu0 %v622
      %633 = vmatprep.subr.bf16.mxu0 0
      %634 = vmatpush1.bf16.msra.mxu0 %v621
      %635 = vmatprep.subr.bf16.mxu0 0
      %636 = vmatpush1.bf16.msra.mxu0 %v620
      %637 = vmatprep.subr.bf16.mxu0 0
      %638 = vmatpush1.bf16.msra.mxu0 %v619
      %639 = vmatprep.subr.bf16.mxu0 0
      %640 = vmatpush1.bf16.msra.mxu0 %v618
      %641 = vmatprep.subr.bf16.mxu0 0
      %642 = vmatpush1.bf16.msra.mxu0 %v617
      %643 = vmatprep.subr.bf16.mxu0 0
      %644 = vmatpush1.bf16.msra.mxu0 %v616
      %645 = vmatprep.subr.bf16.mxu0 0
      %646 = vmatpush1.bf16.msra.mxu0 %v615
      %647 = vmatprep.subr.bf16.mxu0 0
      %648 = vmatpush2.bf16.msra.mxu0 0
      %649 = vmatprep.subr.bf16.mxu0 0
      %650 = vmatpush2.bf16.msra.mxu0 0
      %651 = vmatprep.subr.bf16.mxu0 0
      %652 = vmatpush2.bf16.msra.mxu0 0
      %653 = vmatprep.subr.bf16.mxu0 0
      %654 = vmatpush2.bf16.msra.mxu0 0
      %655 = vmatprep.subr.bf16.mxu0 0
      %656 = vmatpush2.bf16.msra.mxu0 0
      %657 = vmatprep.subr.bf16.mxu0 0
      %658 = vmatpush2.bf16.msra.mxu0 0
      %659 = vmatprep.subr.bf16.mxu0 0
      %660 = vmatpush2.bf16.msra.mxu0 0
      %661 = vmatprep.subr.bf16.mxu0 0
      %662 = vmatpush2.bf16.msra.mxu0 0
      %663 = vmatprep.mubr.bf16.mxu0 0
      %664 = vmatmul.mubr.bf16.gmra.mxu0 %v574
      %v665 = vpop.f32.mrf.mxu0
      %v666 = vadd.f32 0.0, %v665
      %v667 = vpop.f32.mrf.mxu0
      %v668 = vpop.f32.mrf.mxu0
      %v669 = vadd.f32 0.0, %v668
      %v670 = vpop.f32.mrf.mxu0
      %671 = vmatprep.mubr.bf16.mxu0 0
      %672 = vmatmul.mubr.bf16.gmra.mxu0 %v575
      %v673 = vpop.f32.mrf.mxu0
      %v674 = vadd.f32 0.0, %v673
      %v675 = vpop.f32.mrf.mxu0
      %v676 = vpop.f32.mrf.mxu0
      %v677 = vadd.f32 0.0, %v676
      %v678 = vpop.f32.mrf.mxu0
      %679 = vmatprep.mubr.bf16.mxu0 0
      %680 = vmatmul.mubr.bf16.gmra.mxu0 %v576
      %v681 = vpop.f32.mrf.mxu0
      %v682 = vadd.f32 0.0, %v681
      %v683 = vpop.f32.mrf.mxu0
      %v684 = vpop.f32.mrf.mxu0
      %v685 = vadd.f32 0.0, %v684
      %v686 = vpop.f32.mrf.mxu0
      %687 = vmatprep.mubr.bf16.mxu0 0
      %688 = vmatmul.mubr.bf16.gmra.mxu0 %v577
      %v689 = vpop.f32.mrf.mxu0
      %v690 = vadd.f32 0.0, %v689
      %v691 = vpop.f32.mrf.mxu0
      %v692 = vpop.f32.mrf.mxu0
      %v693 = vadd.f32 0.0, %v692
      %v694 = vpop.f32.mrf.mxu0
      %695 = vdwg.mxu0
      %v696 = vadd.f32 %v519, %v666
      %v697 = vadd.f32 %v522, %v669
      %v698 = vadd.f32 %v527, %v674
      %v699 = vadd.f32 %v530, %v677
      %v700 = vadd.f32 %v535, %v682
      %v701 = vadd.f32 %v538, %v685
      %v702 = vadd.f32 %v543, %v690
      %v703 = vadd.f32 %v546, %v693
      %s704 = scalar_lea.vmem %s199, 96
      %v705 = vld [vmem:[%s704] sm:$0xf]
      %v706 = vld [vmem:[%s704 + $0x4] sm:$0xf]
      %v707 = vld [vmem:[%s704 + $0x8] sm:$0xf]
      %v708 = vld [vmem:[%s704 + $0xc] sm:$0xf]
      %v709 = vld [vmem:[%s704 + $0x10] sm:$0xf]
      %v710 = vld [vmem:[%s704 + $0x14] sm:$0xf]
      %v711 = vld [vmem:[%s704 + $0x18] sm:$0xf]
      %v712 = vld [vmem:[%s704 + $0x1c] sm:$0xf]
      %v721 = vunpack.c.l.b16 %v705
      %v722 = vunpack.c.l.b16 %v706
      %v723 = vunpack.c.l.b16 %v707
      %v724 = vunpack.c.l.b16 %v708
      %v725 = vunpack.c.l.b16 %v709
      %v726 = vunpack.c.l.b16 %v710
      %v727 = vunpack.c.l.b16 %v711
      %v728 = vunpack.c.l.b16 %v712
      %v729 = vpack.c.b16 %v722, %v721
      %v730 = vpack.c.b16 %v724, %v723
      %v731 = vpack.c.b16 %v726, %v725
      %v732 = vpack.c.b16 %v728, %v727
      %737 = vrot.lane.b32.xlu0 %v322, 122
      %v738 = vpop.permute.xlu0 %737
      %739 = vrot.lane.b32.xlu0 %v323, 122
      %v740 = vpop.permute.xlu0 %739
      %741 = vrot.lane.b32.xlu0 %v324, 122
      %v742 = vpop.permute.xlu0 %741
      %743 = vrot.lane.b32.xlu0 %v325, 122
      %v744 = vpop.permute.xlu0 %743
      %745 = vrot.lane.b32.xlu0 %v326, 122
      %v746 = vpop.permute.xlu0 %745
      %747 = vrot.lane.b32.xlu0 %v327, 122
      %v748 = vpop.permute.xlu0 %747
      %749 = vrot.lane.b32.xlu0 %v328, 122
      %v750 = vpop.permute.xlu0 %749
      %751 = vrot.lane.b32.xlu0 %v329, 122
      %v752 = vpop.permute.xlu0 %751
      %753 = vrot.lane.b32.xlu0 %v330, 122
      %v754 = vpop.permute.xlu0 %753
      %755 = vrot.lane.b32.xlu0 %v331, 122
      %v756 = vpop.permute.xlu0 %755
      %757 = vrot.lane.b32.xlu0 %v332, 122
      %v758 = vpop.permute.xlu0 %757
      %759 = vrot.lane.b32.xlu0 %v333, 122
      %v760 = vpop.permute.xlu0 %759
      %761 = vrot.lane.b32.xlu0 %v334, 122
      %v762 = vpop.permute.xlu0 %761
      %763 = vrot.lane.b32.xlu0 %v335, 122
      %v764 = vpop.permute.xlu0 %763
      %765 = vrot.lane.b32.xlu0 %v336, 122
      %v766 = vpop.permute.xlu0 %765
      %767 = vrot.lane.b32.xlu0 %v337, 122
      %v768 = vpop.permute.xlu0 %767
      %vm769 = vcmask 998400
      %v770 = vsel %vm769, %v738, %v740
      %v771 = vsel %vm769, %v742, %v744
      %v772 = vsel %vm769, %v746, %v748
      %v773 = vsel %vm769, %v750, %v752
      %v774 = vsel %vm769, %v754, %v756
      %v775 = vsel %vm769, %v758, %v760
      %v776 = vsel %vm769, %v762, %v764
      %v777 = vsel %vm769, %v766, %v768
      %786 = vmatprep.subr.bf16.mxu0 0
      %787 = vmatpush1.bf16.msra.mxu0 %v777
      %788 = vmatprep.subr.bf16.mxu0 0
      %789 = vmatpush1.bf16.msra.mxu0 %v776
      %790 = vmatprep.subr.bf16.mxu0 0
      %791 = vmatpush1.bf16.msra.mxu0 %v775
      %792 = vmatprep.subr.bf16.mxu0 0
      %793 = vmatpush1.bf16.msra.mxu0 %v774
      %794 = vmatprep.subr.bf16.mxu0 0
      %795 = vmatpush1.bf16.msra.mxu0 %v773
      %796 = vmatprep.subr.bf16.mxu0 0
      %797 = vmatpush1.bf16.msra.mxu0 %v772
      %798 = vmatprep.subr.bf16.mxu0 0
      %799 = vmatpush1.bf16.msra.mxu0 %v771
      %800 = vmatprep.subr.bf16.mxu0 0
      %801 = vmatpush1.bf16.msra.mxu0 %v770
      %802 = vmatprep.subr.bf16.mxu0 0
      %803 = vmatpush2.bf16.msra.mxu0 0
      %804 = vmatprep.subr.bf16.mxu0 0
      %805 = vmatpush2.bf16.msra.mxu0 0
      %806 = vmatprep.subr.bf16.mxu0 0
      %807 = vmatpush2.bf16.msra.mxu0 0
      %808 = vmatprep.subr.bf16.mxu0 0
      %809 = vmatpush2.bf16.msra.mxu0 0
      %810 = vmatprep.subr.bf16.mxu0 0
      %811 = vmatpush2.bf16.msra.mxu0 0
      %812 = vmatprep.subr.bf16.mxu0 0
      %813 = vmatpush2.bf16.msra.mxu0 0
      %814 = vmatprep.subr.bf16.mxu0 0
      %815 = vmatpush2.bf16.msra.mxu0 0
      %816 = vmatprep.subr.bf16.mxu0 0
      %817 = vmatpush2.bf16.msra.mxu0 0
      %818 = vmatprep.mubr.bf16.mxu0 0
      %819 = vmatmul.mubr.bf16.gmra.mxu0 %v729
      %v820 = vpop.f32.mrf.mxu0
      %v821 = vadd.f32 0.0, %v820
      %v822 = vpop.f32.mrf.mxu0
      %v823 = vpop.f32.mrf.mxu0
      %v824 = vadd.f32 0.0, %v823
      %v825 = vpop.f32.mrf.mxu0
      %826 = vmatprep.mubr.bf16.mxu0 0
      %827 = vmatmul.mubr.bf16.gmra.mxu0 %v730
      %v828 = vpop.f32.mrf.mxu0
      %v829 = vadd.f32 0.0, %v828
      %v830 = vpop.f32.mrf.mxu0
      %v831 = vpop.f32.mrf.mxu0
      %v832 = vadd.f32 0.0, %v831
      %v833 = vpop.f32.mrf.mxu0
      %834 = vmatprep.mubr.bf16.mxu0 0
      %835 = vmatmul.mubr.bf16.gmra.mxu0 %v731
      %v836 = vpop.f32.mrf.mxu0
      %v837 = vadd.f32 0.0, %v836
      %v838 = vpop.f32.mrf.mxu0
      %v839 = vpop.f32.mrf.mxu0
      %v840 = vadd.f32 0.0, %v839
      %v841 = vpop.f32.mrf.mxu0
      %842 = vmatprep.mubr.bf16.mxu0 0
      %843 = vmatmul.mubr.bf16.gmra.mxu0 %v732
      %v844 = vpop.f32.mrf.mxu0
      %v845 = vadd.f32 0.0, %v844
      %v846 = vpop.f32.mrf.mxu0
      %v847 = vpop.f32.mrf.mxu0
      %v848 = vadd.f32 0.0, %v847
      %v849 = vpop.f32.mrf.mxu0
      %850 = vdwg.mxu0
      %v851 = vadd.f32 %v696, %v821
      %v852 = vadd.f32 %v697, %v824
      %v853 = vadd.f32 %v698, %v829
      %v854 = vadd.f32 %v699, %v832
      %v855 = vadd.f32 %v700, %v837
      %v856 = vadd.f32 %v701, %v840
      %v857 = vadd.f32 %v702, %v845
      %v858 = vadd.f32 %v703, %v848
      %v859 = vld [vmem:[%s2] sm:$0x1]
      %v861 = vlaneseq
      %v862 = vshrl.u32 %v861, 7
      %v863 = vsub.s32 0, %v862
      %v864 = vrot.slane %v859, %v863
      %v866 = vmul.f32 %v851, %v864
      %v867 = vmul.f32 %v852, %v864
      %v868 = vmul.f32 %v853, %v864
      %v869 = vmul.f32 %v854, %v864
      %v870 = vmul.f32 %v855, %v864
      %v871 = vmul.f32 %v856, %v864
      %v872 = vmul.f32 %v857, %v864
      %v873 = vmul.f32 %v858, %v864
      %874 = vadd.xlane.f32.xlu0 %v866
      %v875 = vpop.xlane.xlu0 %874
      %876 = vadd.xlane.f32.xlu0 %v867
      %v877 = vpop.xlane.xlu0 %876
      %878 = vadd.xlane.f32.xlu0 %v868
      %v879 = vpop.xlane.xlu0 %878
      %880 = vadd.xlane.f32.xlu0 %v869
      %v881 = vpop.xlane.xlu0 %880
      %882 = vadd.xlane.f32.xlu0 %v870
      %v883 = vpop.xlane.xlu0 %882
      %884 = vadd.xlane.f32.xlu0 %v871
      %v885 = vpop.xlane.xlu0 %884
      %886 = vadd.xlane.f32.xlu0 %v872
      %v887 = vpop.xlane.xlu0 %886
      %888 = vadd.xlane.f32.xlu0 %v873
      %v889 = vpop.xlane.xlu0 %888
      %v890 = vmul.f32 %v875, 0.0625
      %v891 = vmul.f32 %v877, 0.0625
      %v892 = vmul.f32 %v879, 0.0625
      %v893 = vmul.f32 %v881, 0.0625
      %v894 = vmul.f32 %v883, 0.0625
      %v895 = vmul.f32 %v885, 0.0625
      %v896 = vmul.f32 %v887, 0.0625
      %v897 = vmul.f32 %v889, 0.0625
      %v898 = vmul.f32 %v866, %v866
      %v899 = vmul.f32 %v867, %v867
      %v900 = vmul.f32 %v868, %v868
      %v901 = vmul.f32 %v869, %v869
      %v902 = vmul.f32 %v870, %v870
      %v903 = vmul.f32 %v871, %v871
      %v904 = vmul.f32 %v872, %v872
      %v905 = vmul.f32 %v873, %v873
      %906 = vadd.xlane.f32.xlu0 %v898
      %v907 = vpop.xlane.xlu0 %906
      %908 = vadd.xlane.f32.xlu0 %v899
      %v909 = vpop.xlane.xlu0 %908
      %910 = vadd.xlane.f32.xlu0 %v900
      %v911 = vpop.xlane.xlu0 %910
      %912 = vadd.xlane.f32.xlu0 %v901
      %v913 = vpop.xlane.xlu0 %912
      %914 = vadd.xlane.f32.xlu0 %v902
      %v915 = vpop.xlane.xlu0 %914
      %916 = vadd.xlane.f32.xlu0 %v903
      %v917 = vpop.xlane.xlu0 %916
      %918 = vadd.xlane.f32.xlu0 %v904
      %v919 = vpop.xlane.xlu0 %918
      %920 = vadd.xlane.f32.xlu0 %v905
      %v921 = vpop.xlane.xlu0 %920
      %v922 = vmul.f32 %v907, 0.0625
      %v923 = vmul.f32 %v909, 0.0625
      %v924 = vmul.f32 %v911, 0.0625
      %v925 = vmul.f32 %v913, 0.0625
      %v926 = vmul.f32 %v915, 0.0625
      %v927 = vmul.f32 %v917, 0.0625
      %v928 = vmul.f32 %v919, 0.0625
      %v929 = vmul.f32 %v921, 0.0625
      %v930 = vmul.f32 %v890, %v890
      %v931 = vmul.f32 %v891, %v891
      %v932 = vmul.f32 %v892, %v892
      %v933 = vmul.f32 %v893, %v893
      %v934 = vmul.f32 %v894, %v894
      %v935 = vmul.f32 %v895, %v895
      %v936 = vmul.f32 %v896, %v896
      %v937 = vmul.f32 %v897, %v897
      %v938 = vsub.f32 %v922, %v930
      %v939 = vsub.f32 %v923, %v931
      %v940 = vsub.f32 %v924, %v932
      %v941 = vsub.f32 %v925, %v933
      %v942 = vsub.f32 %v926, %v934
      %v943 = vsub.f32 %v927, %v935
      %v944 = vsub.f32 %v928, %v936
      %v945 = vsub.f32 %v929, %v937
      %v946 = vmax.f32 %v938, 0.0
      %v947 = vmax.f32 %v939, 0.0
      %v948 = vmax.f32 %v940, 0.0
      %v949 = vmax.f32 %v941, 0.0
      %v950 = vmax.f32 %v942, 0.0
      %v951 = vmax.f32 %v943, 0.0
      %v952 = vmax.f32 %v944, 0.0
      %v953 = vmax.f32 %v945, 0.0
      %v954 = vadd.f32 %v946, 1e-05
      %v955 = vadd.f32 %v947, 1e-05
      %v956 = vadd.f32 %v948, 1e-05
      %v957 = vadd.f32 %v949, 1e-05
      %v958 = vadd.f32 %v950, 1e-05
      %v959 = vadd.f32 %v951, 1e-05
      %v960 = vadd.f32 %v952, 1e-05
      %v961 = vadd.f32 %v953, 1e-05
      %v962 = vrsqrt.pop %v954
      %v963 = vrsqrt.pop %v955
      %v964 = vrsqrt.pop %v956
      %v965 = vrsqrt.pop %v957
      %v966 = vrsqrt.pop %v958
      %v967 = vrsqrt.pop %v959
      %v968 = vrsqrt.pop %v960
      %v969 = vrsqrt.pop %v961
      %v970 = vmul.f32 %v866, %v962
      %v971 = vmul.f32 %v867, %v963
      %v972 = vmul.f32 %v868, %v964
      %v973 = vmul.f32 %v869, %v965
      %v974 = vmul.f32 %v870, %v966
      %v975 = vmul.f32 %v871, %v967
      %v976 = vmul.f32 %v872, %v968
      %v977 = vmul.f32 %v873, %v969
      %v978 = vsub.f32 0.0, %v890
      %v979 = vsub.f32 0.0, %v891
      %v980 = vsub.f32 0.0, %v892
      %v981 = vsub.f32 0.0, %v893
      %v982 = vsub.f32 0.0, %v894
      %v983 = vsub.f32 0.0, %v895
      %v984 = vsub.f32 0.0, %v896
      %v985 = vsub.f32 0.0, %v897
      %v986 = vmul.f32 %v978, %v962
      %v987 = vmul.f32 %v979, %v963
      %v988 = vmul.f32 %v980, %v964
      %v989 = vmul.f32 %v981, %v965
      %v990 = vmul.f32 %v982, %v966
      %v991 = vmul.f32 %v983, %v967
      %v992 = vmul.f32 %v984, %v968
      %v993 = vmul.f32 %v985, %v969
      %v994 = vadd.f32 %v970, %v986
      %v995 = vadd.f32 %v971, %v987
      %v996 = vadd.f32 %v972, %v988
      %v997 = vadd.f32 %v973, %v989
      %v998 = vadd.f32 %v974, %v990
      %v999 = vadd.f32 %v975, %v991
      %v1000 = vadd.f32 %v976, %v992
      %v1001 = vadd.f32 %v977, %v993
      %v1002 = vmul.f32 %v994, 0.2
      %v1003 = vmul.f32 %v995, 0.2
      %v1004 = vmul.f32 %v996, 0.2
      %v1005 = vmul.f32 %v997, 0.2
      %v1006 = vmul.f32 %v998, 0.2
      %v1007 = vmul.f32 %v999, 0.2
      %v1008 = vmul.f32 %v1000, 0.2
      %v1009 = vmul.f32 %v1001, 0.2
      %v1010 = vmax.f32 %v994, %v1002
      %v1011 = vmax.f32 %v995, %v1003
      %v1012 = vmax.f32 %v996, %v1004
      %v1013 = vmax.f32 %v997, %v1005
      %v1014 = vmax.f32 %v998, %v1006
      %v1015 = vmax.f32 %v999, %v1007
      %v1016 = vmax.f32 %v1000, %v1008
      %v1017 = vmax.f32 %v1001, %v1009
      %v1018 = vpack.c.bf16 %v1011, %v1010
      %v1019 = vpack.c.bf16 %v1013, %v1012
      %v1020 = vpack.c.bf16 %v1015, %v1014
      %v1021 = vpack.c.bf16 %v1017, %v1016
      %v1026 = vunpack.c.l.b16 %v1018
      %v1027 = vunpack.c.h.b16 %v1018
      %v1028 = vunpack.c.l.b16 %v1019
      %v1029 = vunpack.c.h.b16 %v1019
      %v1030 = vunpack.c.l.b16 %v1020
      %v1031 = vunpack.c.h.b16 %v1020
      %v1032 = vunpack.c.l.b16 %v1021
      %v1033 = vunpack.c.h.b16 %v1021
      %v1034 = vpack.c.b16 %v1026, %v1026
      %v1035 = vpack.c.b16 %v1027, %v1027
      %v1036 = vpack.c.b16 %v1028, %v1028
      %v1037 = vpack.c.b16 %v1029, %v1029
      %v1038 = vpack.c.b16 %v1030, %v1030
      %v1039 = vpack.c.b16 %v1031, %v1031
      %v1040 = vpack.c.b16 %v1032, %v1032
      %v1041 = vpack.c.b16 %v1033, %v1033
      %1050 = vst [vmem:[%s214] sm:$0xf] %v1034
      %1051 = vst [vmem:[%s214 + $0x4] sm:$0xf] %v1035
      %1052 = vst [vmem:[%s214 + $0x8] sm:$0xf] %v1036
      %1053 = vst [vmem:[%s214 + $0xc] sm:$0xf] %v1037
      %1054 = vst [vmem:[%s214 + $0x10] sm:$0xf] %v1038
      %1055 = vst [vmem:[%s214 + $0x14] sm:$0xf] %v1039
      %1056 = vst [vmem:[%s214 + $0x18] sm:$0xf] %v1040
      %1057 = vst [vmem:[%s214 + $0x1c] sm:$0xf] %v1041
      %s1058 = smul.u32 8, %s19
      %p1059 = scmp.lt.s32.totalorder %s18, 1
      %s1060 = scalar_select %p1059, %s18, 1
      %p1061 = scmp.lt.s32.totalorder %s1058, 7
      %s1062 = scalar_select %p1061, %s1058, 7
      %s1063 = smul.addr %s1060, 8
      %s1064 = sadd.s32 %s1062, %s1063
      %s1065 = smul.addr %s1064, 4
      %s1066 = scalar_lea.vmem %s3, %s1065
      // Predicated region
      $region33: #{dnpf_forward.8} parent=31 // pred_check
        %p1067 = pneg %p119
      $region34: #{dnpf_forward.8} parent=31 // pred_check_branch
        %1069 = sbr.rel (%p1067) target = $region36
      $region35: #{dnpf_forward.8} parent=31 // pred_region
        %s1070 = smul.u32 8, %s19
      $region36: #{dnpf_forward.8} parent=31 // pred_fallthru
        _
    $region32: #{dnpf_forward.8} parent=5 // pred_fallthru
      _
    %p1071 = scmp.le.s32.totalorder 2, %s9
    // Predicated region
    $region37: #{dnpf_forward.8} parent=5 // pred_check
      %p1072 = pneg %p1071
    $region38: #{dnpf_forward.8} parent=5 // pred_check_branch
      %1074 = sbr.rel (%p1072) target = $region40
    $region39: #{dnpf_forward.8} parent=5 // pred_region
      %s1075 = ssub.s32 %s9, 2
      // Predicated region
      $region41: #{dnpf_forward.8} parent=39 // pred_check
        %p1076 = pneg %p125
      $region42: #{dnpf_forward.8} parent=39 // pred_check_branch
        %1078 = sbr.rel (%p1076) target = $region44
      $region43: #{dnpf_forward.8} parent=39 // pred_region
        %s1079 = smul.u32 8, %s21
        %p1080 = scmp.lt.s32.totalorder %s20, 1
        %s1081 = scalar_select %p1080, %s20, 1
        %p1082 = scmp.lt.s32.totalorder %s1079, 7
        %s1083 = scalar_select %p1082, %s1079, 7
        %s1084 = smul.addr %s1081, 8
        %s1085 = sadd.s32 %s1083, %s1084
        %s1086 = smul.addr %s1085, 4
        %s1087 = scalar_lea.vmem %s3, %s1086
      $region44: #{dnpf_forward.8} parent=39 // pred_fallthru
        _
    $region40: #{dnpf_forward.8} parent=5 // pred_fallthru
      _
  $region6: #{dnpf_forward.8} parent=0 // loop_footer
    %s13 = sadd.s32 1, %s9
  $region7: #{dnpf_forward.8} parent=0 // loop_footer_branch
    %8 = sbr.rel target = $region3
  $region8: #{dnpf_forward.8} parent=0 // loop_exit
    _

// kernel: dnpf_forward.9
$region0: #{dnpf_forward.9}
  #allocation0 [shape = 'u32[]', space=smem, size = 0x4, offset = 0x4, fixed_abs, tag = 'smem constant byte address 0x4 - core index']
  #allocation1 [shape = 'u32[144,128]{1,0:T(1,128)}', space=vmem, size = 0x12000, scoped, tag = 'internal scratch']
  %s0 = inlined_call_operand.vmem [shape: bf16[8,16,128], index: 0, kind: input, shape index: {}]
  %s1 = inlined_call_operand.vmem [shape: bf16[2,128,256], index: 1, kind: input, shape index: {}]
  %s2 = inlined_call_operand.vmem [shape: f32[1,128], index: 2, kind: input, shape index: {}]
  %s3 = inlined_call_operand.vmem [shape: f32[2,16,128], index: 3, kind: output, shape index: {}]
  %s4 = sld [smem:[#allocation0]]
  $region45: #{dnpf_forward.9} parent=0
    _
  %s6 = ssub.s32 1, %s4
  %s7 = scalar_select 0, %s6, %s4
  loop: start=0, step=1, limit=4
  $region2: #{dnpf_forward.9} parent=0 // loop_pre_header
    _
  $region3: #{dnpf_forward.9} parent=0 // loop_header
    %s9 = sphi 0, %s13
    %p10 = scmp.ge.s32.totalorder %s9, 4
    %s16 = sphi 0, %s28
    %s17 = sphi 0, %s24
    %s18 = sphi 0, %s16
    %s19 = sphi 0, %s17
    %s20 = sphi 0, %s18
    %s21 = sphi 0, %s19
    %s31 = sphi 0, %s33
    %s34 = sphi 0, %s31
    %s35 = sphi 0, %s34
    %s51 = sphi 0, %s35
    %s57 = sphi 0, %s59
    %s60 = sphi 0, %s57
    %s61 = sphi 0, %s60
    %s77 = sphi 0, %s61
    %s81 = sphi 0, %s81
    %s83 = sphi 0, %s81
    %s84 = sphi 0, %s83
    %s98 = sphi 0, %s84
    %s106 = sphi 0, %s108
    %s109 = sphi 0, %s106
    %s110 = sphi 0, %s109
    %s126 = sphi 0, %s110
  $region4: #{dnpf_forward.9} parent=0 // loop_header_branch
    %12 = sbr.rel (%p10) target = $region8
  $region5: #{dnpf_forward.9} parent=0 // loop_body
    %s14 = ssub.s32 %s9, 1
    %s15 = ssub.s32 %s9, 2
    %s22 = sadd.s32 1, %s17
    %p23 = scmp.ge.s32.totalorder %s22, 1
    %s24 = scalar_select %p23, 0, %s22
    %s25 = sadd.s32 1, %s16
    %s26 = scalar_select %p23, %s25, %s16
    %p27 = scmp.ge.s32.totalorder %s26, 2
    %s28 = scalar_select %p27, 0, %s26
    %s29 = ssub.s32 %s17, %s24
    %p30 = scmp.eq.s32.totalorder %s29, 0
    %s32 = sadd.s32 %s31, 1
    %s33 = scalar_select %p30, %s31, %s32
    %p36 = pneg %p30
    %p37 = scmp.eq.s32.totalorder %s9, 1
    %p38 = por %p36, %p37
    %p39 = scmp.ne.s32.totalorder %s31, %s34
    %p40 = scmp.eq.s32.totalorder %s9, 0
    %p41 = por %p39, %p40
    %p42 = scmp.ne.s32.totalorder %s31, %s34
    %p43 = scmp.eq.s32.totalorder %s14, 1
    %p44 = por %p42, %p43
    %p45 = scmp.ne.s32.totalorder %s34, %s35
    %p46 = scmp.eq.s32.totalorder %s14, 0
    %p47 = por %p45, %p46
    %p48 = scmp.ne.s32.totalorder %s34, %s35
    %p49 = scmp.eq.s32.totalorder %s15, 1
    %p50 = por %p48, %p49
    %p52 = scmp.ne.s32.totalorder %s35, %s51
    %p53 = scmp.eq.s32.totalorder %s15, 0
    %p54 = por %p52, %p53
    %s55 = ssub.s32 %s16, %s28
    %p56 = scmp.eq.s32.totalorder %s55, 0
    %s58 = sadd.s32 %s57, 1
    %s59 = scalar_select %p56, %s57, %s58
    %p62 = pneg %p56
    %p63 = scmp.eq.s32.totalorder %s9, 1
    %p64 = por %p62, %p63
    %p65 = scmp.ne.s32.totalorder %s57, %s60
    %p66 = scmp.eq.s32.totalorder %s9, 0
    %p67 = por %p65, %p66
    %p68 = scmp.ne.s32.totalorder %s57, %s60
    %p69 = scmp.eq.s32.totalorder %s14, 1
    %p70 = por %p68, %p69
    %p71 = scmp.ne.s32.totalorder %s60, %s61
    %p72 = scmp.eq.s32.totalorder %s14, 0
    %p73 = por %p71, %p72
    %p74 = scmp.ne.s32.totalorder %s60, %s61
    %p75 = scmp.eq.s32.totalorder %s15, 1
    %p76 = por %p74, %p75
    %p78 = scmp.ne.s32.totalorder %s61, %s77
    %p79 = scmp.eq.s32.totalorder %s15, 0
    %p80 = por %p78, %p79
    %s82 = sadd.s32 %s81, 1
    %p85 = scmp.eq.s32.totalorder %s9, 1
    %p86 = scmp.ne.s32.totalorder %s81, %s83
    %p87 = scmp.eq.s32.totalorder %s9, 0
    %p88 = por %p86, %p87
    %p89 = scmp.ne.s32.totalorder %s81, %s83
    %p90 = scmp.eq.s32.totalorder %s14, 1
    %p91 = por %p89, %p90
    %p92 = scmp.ne.s32.totalorder %s83, %s84
    %p93 = scmp.eq.s32.totalorder %s14, 0
    %p94 = por %p92, %p93
    %p95 = scmp.ne.s32.totalorder %s83, %s84
    %p96 = scmp.eq.s32.totalorder %s15, 1
    %p97 = por %p95, %p96
    %p99 = scmp.ne.s32.totalorder %s84, %s98
    %p100 = scmp.eq.s32.totalorder %s15, 0
    %p101 = por %p99, %p100
    %s102 = ssub.s32 %s16, %s28
    %s103 = ssub.s32 %s17, %s24
    %s104 = sor.u32 %s102, %s103
    %p105 = scmp.eq.s32.totalorder %s104, 0
    %s107 = sadd.s32 %s106, 1
    %s108 = scalar_select %p105, %s106, %s107
    %p111 = pneg %p105
    %p112 = scmp.eq.s32.totalorder %s9, 1
    %p113 = por %p111, %p112
    %p114 = scmp.ne.s32.totalorder %s106, %s109
    %p115 = scmp.eq.s32.totalorder %s9, 0
    %p116 = por %p114, %p115
    %p117 = scmp.ne.s32.totalorder %s106, %s109
    %p118 = scmp.eq.s32.totalorder %s14, 1
    %p119 = por %p117, %p118
    %p120 = scmp.ne.s32.totalorder %s109, %s110
    %p121 = scmp.eq.s32.totalorder %s14, 0
    %p122 = por %p120, %p121
    %p123 = scmp.ne.s32.totalorder %s109, %s110
    %p124 = scmp.eq.s32.totalorder %s15, 1
    %p125 = por %p123, %p124
    %p127 = scmp.ne.s32.totalorder %s110, %s126
    %p128 = scmp.eq.s32.totalorder %s15, 0
    %p129 = por %p127, %p128
    %p130 = scmp.le.s32.totalorder 1, %s9
    %p131 = scmp.lt.s32.totalorder %s9, 3
    %p132 = pnand %p130, %p131
    %p133 = pneg %p132
    // Predicated region
    $region9: #{dnpf_forward.9} parent=5 // pred_check
      _
    $region10: #{dnpf_forward.9} parent=5 // pred_check_branch
      %135 = sbr.rel (%p132) target = $region12
    $region11: #{dnpf_forward.9} parent=5 // pred_region
      %s136 = ssub.s32 %s9, 1
      // Predicated region
      $region13: #{dnpf_forward.9} parent=11 // pred_check
        %p137 = pneg %p47
      $region14: #{dnpf_forward.9} parent=11 // pred_check_branch
        %139 = sbr.rel (%p137) target = $region16
      $region15: #{dnpf_forward.9} parent=11 // pred_region
        %s140 = smul.u32 2, %s19
        %p141 = scmp.lt.s32.totalorder %s140, 1
        %s142 = scalar_select %p141, %s140, 1
        %s143 = smul.addr %s142, 4
        %s144 = scalar_lea.vmem %s0, %s143
        %s145 = smul.u32 2, %s19
      $region16: #{dnpf_forward.9} parent=11 // pred_fallthru
        _
      // Predicated region
      $region17: #{dnpf_forward.9} parent=11 // pred_check
        %p146 = pneg %p94
      $region18: #{dnpf_forward.9} parent=11 // pred_check_branch
        %148 = sbr.rel (%p146) target = $region20
      $region19: #{dnpf_forward.9} parent=11 // pred_region
        _
      $region20: #{dnpf_forward.9} parent=11 // pred_fallthru
        _
    $region12: #{dnpf_forward.9} parent=5 // pred_fallthru
      _
    %p149 = scmp.lt.s32.totalorder %s9, 2
    // Predicated region
    $region21: #{dnpf_forward.9} parent=5 // pred_check
      %p150 = pneg %p149
    $region22: #{dnpf_forward.9} parent=5 // pred_check_branch
      %152 = sbr.rel (%p150) target = $region24
    $region23: #{dnpf_forward.9} parent=5 // pred_region
      // Predicated region
      $region25: #{dnpf_forward.9} parent=23 // pred_check
        %p153 = pneg %p67
      $region26: #{dnpf_forward.9} parent=23 // pred_check_branch
        %155 = sbr.rel (%p153) target = $region28
      $region27: #{dnpf_forward.9} parent=23 // pred_region
        %p156 = scmp.lt.s32.totalorder %s16, 1
        %s157 = scalar_select %p156, %s16, 1
        %s158 = smul.addr %s157, 32
        %s159 = smul.addr %s158, 4
        %s160 = scalar_lea.vmem %s1, %s159
      $region28: #{dnpf_forward.9} parent=23 // pred_fallthru
        _
    $region24: #{dnpf_forward.9} parent=5 // pred_fallthru
      _
    %p161 = scmp.le.s32.totalorder 1, %s9
    %p162 = scmp.lt.s32.totalorder %s9, 3
    %p163 = pnand %p161, %p162
    %p164 = pneg %p163
    // Predicated region
    $region29: #{dnpf_forward.9} parent=5 // pred_check
      _
    $region30: #{dnpf_forward.9} parent=5 // pred_check_branch
      %166 = sbr.rel (%p163) target = $region32
    $region31: #{dnpf_forward.9} parent=5 // pred_region
      %s167 = ssub.s32 %s9, 1
      %s168 = smul.u32 2, %s19
      %p169 = scmp.lt.s32.totalorder %s168, 1
      %s170 = scalar_select %p169, %s168, 1
      %s171 = smul.addr %s170, 4
      %s172 = scalar_lea.vmem %s0, %s171
      %p173 = pneg %p47
      %p174 = pneg %p44
      %p175 = scmp.lt.s32.totalorder %s18, 1
      %s176 = scalar_select %p175, %s18, 1
      %s177 = smul.addr %s176, 32
      %s178 = smul.addr %s177, 4
      %s179 = scalar_lea.vmem %s1, %s178
      %p180 = pneg %p73
      %p181 = pneg %p70
      %p182 = pneg %p94
      %p183 = pneg %p91
      %p184 = pneg %p122
      %p185 = pneg %p119
      %s186 = smul.u32 2, %s19
      %p187 = scmp.lt.s32.totalorder %s18, 1
      %s188 = scalar_select %p187, %s18, 1
      %p189 = scmp.lt.s32.totalorder %s186, 1
      %s190 = scalar_select %p189, %s186, 1
      %s191 = smul.addr %s188, 2
      %s192 = sadd.s32 %s190, %s191
      %s193 = smul.addr %s192, 8
      %s194 = scalar_lea.vmem %s3, %s193
      %s195 = smul.u32 2, %s19
      %p196 = scmp.lt.s32.totalorder %s195, 1
      %s197 = scalar_select %p196, %s195, 1
      %s198 = smul.addr %s197, 4
      %s199 = scalar_lea.vmem %s0, %s198
      %s200 = smul.u32 2, %s19
      %p201 = scmp.lt.s32.totalorder %s18, 1
      %s202 = scalar_select %p201, %s18, 1
      %s203 = smul.addr %s202, 32
      %s204 = smul.addr %s203, 4
      %s205 = scalar_lea.vmem %s1, %s204
      %s206 = smul.u32 2, %s19
      %p207 = scmp.lt.s32.totalorder %s18, 1
      %s208 = scalar_select %p207, %s18, 1
      %p209 = scmp.lt.s32.totalorder %s206, 1
      %s210 = scalar_select %p209, %s206, 1
      %s211 = smul.addr %s208, 2
      %s212 = sadd.s32 %s210, %s211
      %s213 = smul.addr %s212, 8
      %s214 = scalar_lea.vmem %s3, %s213
      %s215 = smul.u32 2, %s19
      %v217 = vld [vmem:[%s205] sm:$0xff]
      %v218 = vld [vmem:[%s205 + $0x8] sm:$0xff]
      %v219 = vld [vmem:[%s205 + $0x10] sm:$0xff]
      %v220 = vld [vmem:[%s205 + $0x18] sm:$0xff]
      %v221 = vld [vmem:[%s205 + $0x20] sm:$0xff]
      %v222 = vld [vmem:[%s205 + $0x28] sm:$0xff]
      %v223 = vld [vmem:[%s205 + $0x30] sm:$0xff]
      %v224 = vld [vmem:[%s205 + $0x38] sm:$0xff]
      %v225 = vld [vmem:[%s205 + $0x40] sm:$0xff]
      %v226 = vld [vmem:[%s205 + $0x48] sm:$0xff]
      %v227 = vld [vmem:[%s205 + $0x50] sm:$0xff]
      %v228 = vld [vmem:[%s205 + $0x58] sm:$0xff]
      %v229 = vld [vmem:[%s205 + $0x60] sm:$0xff]
      %v230 = vld [vmem:[%s205 + $0x68] sm:$0xff]
      %v231 = vld [vmem:[%s205 + $0x70] sm:$0xff]
      %v232 = vld [vmem:[%s205 + $0x78] sm:$0xff]
      %v233 = vld [vmem:[%s199] sm:$0xf]
      %v234 = vld [vmem:[%s199 + $0x4] sm:$0xf]
      %s235 = scalar_lea.vmem %s199, 8
      %v236 = vld [vmem:[%s235] sm:$0xf]
      %v237 = vld [vmem:[%s235 + $0x4] sm:$0xf]
      %v240 = vunpack.c.l.b16 %v236
      %v241 = vunpack.c.l.b16 %v237
      %v242 = vpack.c.b16 %v241, %v240
      %v260 = vunpack.c.l.b16 %v217
      %v261 = vunpack.c.h.b16 %v217
      %v262 = vunpack.c.l.b16 %v218
      %v263 = vunpack.c.h.b16 %v218
      %v264 = vunpack.c.l.b16 %v219
      %v265 = vunpack.c.h.b16 %v219
      %v266 = vunpack.c.l.b16 %v220
      %v267 = vunpack.c.h.b16 %v220
      %v268 = vunpack.c.l.b16 %v221
      %v269 = vunpack.c.h.b16 %v221
      %v270 = vunpack.c.l.b16 %v222
      %v271 = vunpack.c.h.b16 %v222
      %v272 = vunpack.c.l.b16 %v223
      %v273 = vunpack.c.h.b16 %v223
      %v274 = vunpack.c.l.b16 %v224
      %v275 = vunpack.c.h.b16 %v224
      %v276 = vunpack.c.l.b16 %v225
      %v277 = vunpack.c.h.b16 %v225
      %v278 = vunpack.c.l.b16 %v226
      %v279 = vunpack.c.h.b16 %v226
      %v280 = vunpack.c.l.b16 %v227
      %v281 = vunpack.c.h.b16 %v227
      %v282 = vunpack.c.l.b16 %v228
      %v283 = vunpack.c.h.b16 %v228
      %v284 = vunpack.c.l.b16 %v229
      %v285 = vunpack.c.h.b16 %v229
      %v286 = vunpack.c.l.b16 %v230
      %v287 = vunpack.c.h.b16 %v230
      %v288 = vunpack.c.l.b16 %v231
      %v289 = vunpack.c.h.b16 %v231
      %v290 = vunpack.c.l.b16 %v232
      %v291 = vunpack.c.h.b16 %v232
      %v292 = vpack.c.b16 %v262, %v260
      %v293 = vpack.c.b16 %v263, %v261
      %v294 = vpack.c.b16 %v266, %v264
      %v295 = vpack.c.b16 %v267, %v265
      %v296 = vpack.c.b16 %v270, %v268
      %v297 = vpack.c.b16 %v271, %v269
      %v298 = vpack.c.b16 %v274, %v272
      %v299 = vpack.c.b16 %v275, %v273
      %v300 = vpack.c.b16 %v278, %v276
      %v301 = vpack.c.b16 %v279, %v277
      %v302 = vpack.c.b16 %v282, %v280
      %v303 = vpack.c.b16 %v283, %v281
      %v304 = vpack.c.b16 %v286, %v284
      %v305 = vpack.c.b16 %v287, %v285
      %v306 = vpack.c.b16 %v290, %v288
      %v307 = vpack.c.b16 %v291, %v289
      %308 = vrot.lane.b32.xlu0 %v292, 127
      %v309 = vpop.permute.xlu0 %308
      %310 = vrot.lane.b32.xlu0 %v293, 127
      %v311 = vpop.permute.xlu0 %310
      %312 = vrot.lane.b32.xlu0 %v294, 127
      %v313 = vpop.permute.xlu0 %312
      %314 = vrot.lane.b32.xlu0 %v295, 127
      %v315 = vpop.permute.xlu0 %314
      %316 = vrot.lane.b32.xlu0 %v296, 127
      %v317 = vpop.permute.xlu0 %316
      %318 = vrot.lane.b32.xlu0 %v297, 127
      %v319 = vpop.permute.xlu0 %318
      %320 = vrot.lane.b32.xlu0 %v298, 127
      %v321 = vpop.permute.xlu0 %320
      %322 = vrot.lane.b32.xlu0 %v299, 127
      %v323 = vpop.permute.xlu0 %322
      %324 = vrot.lane.b32.xlu0 %v300, 127
      %v325 = vpop.permute.xlu0 %324
      %326 = vrot.lane.b32.xlu0 %v301, 127
      %v327 = vpop.permute.xlu0 %326
      %328 = vrot.lane.b32.xlu0 %v302, 127
      %v329 = vpop.permute.xlu0 %328
      %330 = vrot.lane.b32.xlu0 %v303, 127
      %v331 = vpop.permute.xlu0 %330
      %332 = vrot.lane.b32.xlu0 %v304, 127
      %v333 = vpop.permute.xlu0 %332
      %334 = vrot.lane.b32.xlu0 %v305, 127
      %v335 = vpop.permute.xlu0 %334
      %336 = vrot.lane.b32.xlu0 %v306, 127
      %v337 = vpop.permute.xlu0 %336
      %338 = vrot.lane.b32.xlu0 %v307, 127
      %v339 = vpop.permute.xlu0 %338
      %vm340 = vcmask 1039360
      %v341 = vsel %vm340, %v309, %v311
      %v342 = vsel %vm340, %v313, %v315
      %v343 = vsel %vm340, %v317, %v319
      %v344 = vsel %vm340, %v321, %v323
      %v345 = vsel %vm340, %v325, %v327
      %v346 = vsel %vm340, %v329, %v331
      %v347 = vsel %vm340, %v333, %v335
      %v348 = vsel %vm340, %v337, %v339
      %357 = vmatprep.subr.bf16.mxu0 0
      %358 = vmatpush1.bf16.msra.mxu0 %v348
      %359 = vmatprep.subr.bf16.mxu0 0
      %360 = vmatpush1.bf16.msra.mxu0 %v347
      %361 = vmatprep.subr.bf16.mxu0 0
      %362 = vmatpush1.bf16.msra.mxu0 %v346
      %363 = vmatprep.subr.bf16.mxu0 0
      %364 = vmatpush1.bf16.msra.mxu0 %v345
      %365 = vmatprep.subr.bf16.mxu0 0
      %366 = vmatpush1.bf16.msra.mxu0 %v344
      %367 = vmatprep.subr.bf16.mxu0 0
      %368 = vmatpush1.bf16.msra.mxu0 %v343
      %369 = vmatprep.subr.bf16.mxu0 0
      %370 = vmatpush1.bf16.msra.mxu0 %v342
      %371 = vmatprep.subr.bf16.mxu0 0
      %372 = vmatpush1.bf16.msra.mxu0 %v341
      %373 = vmatprep.subr.bf16.mxu0 0
      %374 = vmatpush2.bf16.msra.mxu0 0
      %375 = vmatprep.subr.bf16.mxu0 0
      %376 = vmatpush2.bf16.msra.mxu0 0
      %377 = vmatprep.subr.bf16.mxu0 0
      %378 = vmatpush2.bf16.msra.mxu0 0
      %379 = vmatprep.subr.bf16.mxu0 0
      %380 = vmatpush2.bf16.msra.mxu0 0
      %381 = vmatprep.subr.bf16.mxu0 0
      %382 = vmatpush2.bf16.msra.mxu0 0
      %383 = vmatprep.subr.bf16.mxu0 0
      %384 = vmatpush2.bf16.msra.mxu0 0
      %385 = vmatprep.subr.bf16.mxu0 0
      %386 = vmatpush2.bf16.msra.mxu0 0
      %387 = vmatprep.subr.bf16.mxu0 0
      %388 = vmatpush2.bf16.msra.mxu0 0
      %389 = vmatprep.mubr.bf16.mxu0 0
      %390 = vmatmul.mubr.bf16.gmra.mxu0 %v242
      %v391 = vpop.f32.mrf.mxu0
      %v392 = vadd.f32 0.0, %v391
      %v393 = vpop.f32.mrf.mxu0
      %v394 = vpop.f32.mrf.mxu0
      %v395 = vadd.f32 0.0, %v394
      %v396 = vpop.f32.mrf.mxu0
      %397 = vdwg.mxu0
      %v400 = vunpack.c.l.b16 %v233
      %v401 = vunpack.c.l.b16 %v234
      %v402 = vpack.c.b16 %v401, %v400
      %412 = vmatprep.subr.bf16.mxu0 0
      %413 = vmatpush1.bf16.msra.mxu0 %v306
      %414 = vmatprep.subr.bf16.mxu0 0
      %415 = vmatpush1.bf16.msra.mxu0 %v304
      %416 = vmatprep.subr.bf16.mxu0 0
      %417 = vmatpush1.bf16.msra.mxu0 %v302
      %418 = vmatprep.subr.bf16.mxu0 0
      %419 = vmatpush1.bf16.msra.mxu0 %v300
      %420 = vmatprep.subr.bf16.mxu0 0
      %421 = vmatpush1.bf16.msra.mxu0 %v298
      %422 = vmatprep.subr.bf16.mxu0 0
      %423 = vmatpush1.bf16.msra.mxu0 %v296
      %424 = vmatprep.subr.bf16.mxu0 0
      %425 = vmatpush1.bf16.msra.mxu0 %v294
      %426 = vmatprep.subr.bf16.mxu0 0
      %427 = vmatpush1.bf16.msra.mxu0 %v292
      %428 = vmatprep.subr.bf16.mxu0 0
      %429 = vmatpush2.bf16.msra.mxu0 0
      %430 = vmatprep.subr.bf16.mxu0 0
      %431 = vmatpush2.bf16.msra.mxu0 0
      %432 = vmatprep.subr.bf16.mxu0 0
      %433 = vmatpush2.bf16.msra.mxu0 0
      %434 = vmatprep.subr.bf16.mxu0 0
      %435 = vmatpush2.bf16.msra.mxu0 0
      %436 = vmatprep.subr.bf16.mxu0 0
      %437 = vmatpush2.bf16.msra.mxu0 0
      %438 = vmatprep.subr.bf16.mxu0 0
      %439 = vmatpush2.bf16.msra.mxu0 0
      %440 = vmatprep.subr.bf16.mxu0 0
      %441 = vmatpush2.bf16.msra.mxu0 0
      %442 = vmatprep.subr.bf16.mxu0 0
      %443 = vmatpush2.bf16.msra.mxu0 0
      %444 = vmatprep.mubr.bf16.mxu0 0
      %445 = vmatmul.mubr.bf16.gmra.mxu0 %v402
      %v446 = vpop.f32.mrf.mxu0
      %v447 = vadd.f32 %v392, %v446
      %v448 = vpop.f32.mrf.mxu0
      %v449 = vpop.f32.mrf.mxu0
      %v450 = vadd.f32 %v395, %v449
      %v451 = vpop.f32.mrf.mxu0
      %452 = vdwg.mxu0
      %s453 = scalar_lea.vmem %s199, 16
      %v454 = vld [vmem:[%s453] sm:$0xf]
      %v455 = vld [vmem:[%s453 + $0x4] sm:$0xf]
      %v458 = vunpack.c.l.b16 %v454
      %v459 = vunpack.c.l.b16 %v455
      %v460 = vpack.c.b16 %v459, %v458
      %462 = vrot.lane.b32.xlu0 %v292, 126
      %v463 = vpop.permute.xlu0 %462
      %464 = vrot.lane.b32.xlu0 %v293, 126
      %v465 = vpop.permute.xlu0 %464
      %466 = vrot.lane.b32.xlu0 %v294, 126
      %v467 = vpop.permute.xlu0 %466
      %468 = vrot.lane.b32.xlu0 %v295, 126
      %v469 = vpop.permute.xlu0 %468
      %470 = vrot.lane.b32.xlu0 %v296, 126
      %v471 = vpop.permute.xlu0 %470
      %472 = vrot.lane.b32.xlu0 %v297, 126
      %v473 = vpop.permute.xlu0 %472
      %474 = vrot.lane.b32.xlu0 %v298, 126
      %v475 = vpop.permute.xlu0 %474
      %476 = vrot.lane.b32.xlu0 %v299, 126
      %v477 = vpop.permute.xlu0 %476
      %478 = vrot.lane.b32.xlu0 %v300, 126
      %v479 = vpop.permute.xlu0 %478
      %480 = vrot.lane.b32.xlu0 %v301, 126
      %v481 = vpop.permute.xlu0 %480
      %482 = vrot.lane.b32.xlu0 %v302, 126
      %v483 = vpop.permute.xlu0 %482
      %484 = vrot.lane.b32.xlu0 %v303, 126
      %v485 = vpop.permute.xlu0 %484
      %486 = vrot.lane.b32.xlu0 %v304, 126
      %v487 = vpop.permute.xlu0 %486
      %488 = vrot.lane.b32.xlu0 %v305, 126
      %v489 = vpop.permute.xlu0 %488
      %490 = vrot.lane.b32.xlu0 %v306, 126
      %v491 = vpop.permute.xlu0 %490
      %492 = vrot.lane.b32.xlu0 %v307, 126
      %v493 = vpop.permute.xlu0 %492
      %vm494 = vcmask 1031168
      %v495 = vsel %vm494, %v463, %v465
      %v496 = vsel %vm494, %v467, %v469
      %v497 = vsel %vm494, %v471, %v473
      %v498 = vsel %vm494, %v475, %v477
      %v499 = vsel %vm494, %v479, %v481
      %v500 = vsel %vm494, %v483, %v485
      %v501 = vsel %vm494, %v487, %v489
      %v502 = vsel %vm494, %v491, %v493
      %511 = vmatprep.subr.bf16.mxu0 0
      %512 = vmatpush1.bf16.msra.mxu0 %v502
      %513 = vmatprep.subr.bf16.mxu0 0
      %514 = vmatpush1.bf16.msra.mxu0 %v501
      %515 = vmatprep.subr.bf16.mxu0 0
      %516 = vmatpush1.bf16.msra.mxu0 %v500
      %517 = vmatprep.subr.bf16.mxu0 0
      %518 = vmatpush1.bf16.msra.mxu0 %v499
      %519 = vmatprep.subr.bf16.mxu0 0
      %520 = vmatpush1.bf16.msra.mxu0 %v498
      %521 = vmatprep.subr.bf16.mxu0 0
      %522 = vmatpush1.bf16.msra.mxu0 %v497
      %523 = vmatprep.subr.bf16.mxu0 0
      %524 = vmatpush1.bf16.msra.mxu0 %v496
      %525 = vmatprep.subr.bf16.mxu0 0
      %526 = vmatpush1.bf16.msra.mxu0 %v495
      %527 = vmatprep.subr.bf16.mxu0 0
      %528 = vmatpush2.bf16.msra.mxu0 0
      %529 = vmatprep.subr.bf16.mxu0 0
      %530 = vmatpush2.bf16.msra.mxu0 0
      %531 = vmatprep.subr.bf16.mxu0 0
      %532 = vmatpush2.bf16.msra.mxu0 0
      %533 = vmatprep.subr.bf16.mxu0 0
      %534 = vmatpush2.bf16.msra.mxu0 0
      %535 = vmatprep.subr.bf16.mxu0 0
      %536 = vmatpush2.bf16.msra.mxu0 0
      %537 = vmatprep.subr.bf16.mxu0 0
      %538 = vmatpush2.bf16.msra.mxu0 0
      %539 = vmatprep.subr.bf16.mxu0 0
      %540 = vmatpush2.bf16.msra.mxu0 0
      %541 = vmatprep.subr.bf16.mxu0 0
      %542 = vmatpush2.bf16.msra.mxu0 0
      %543 = vmatprep.mubr.bf16.mxu0 0
      %544 = vmatmul.mubr.bf16.gmra.mxu0 %v460
      %v545 = vpop.f32.mrf.mxu0
      %v546 = vadd.f32 0.0, %v545
      %v547 = vpop.f32.mrf.mxu0
      %v548 = vpop.f32.mrf.mxu0
      %v549 = vadd.f32 0.0, %v548
      %v550 = vpop.f32.mrf.mxu0
      %551 = vdwg.mxu0
      %v552 = vadd.f32 %v447, %v546
      %v553 = vadd.f32 %v450, %v549
      %s554 = scalar_lea.vmem %s199, 24
      %v555 = vld [vmem:[%s554] sm:$0xf]
      %v556 = vld [vmem:[%s554 + $0x4] sm:$0xf]
      %v559 = vunpack.c.l.b16 %v555
      %v560 = vunpack.c.l.b16 %v556
      %v561 = vpack.c.b16 %v560, %v559
      %563 = vrot.lane.b32.xlu0 %v292, 125
      %v564 = vpop.permute.xlu0 %563
      %565 = vrot.lane.b32.xlu0 %v293, 125
      %v566 = vpop.permute.xlu0 %565
      %567 = vrot.lane.b32.xlu0 %v294, 125
      %v568 = vpop.permute.xlu0 %567
      %569 = vrot.lane.b32.xlu0 %v295, 125
      %v570 = vpop.permute.xlu0 %569
      %571 = vrot.lane.b32.xlu0 %v296, 125
      %v572 = vpop.permute.xlu0 %571
      %573 = vrot.lane.b32.xlu0 %v297, 125
      %v574 = vpop.permute.xlu0 %573
      %575 = vrot.lane.b32.xlu0 %v298, 125
      %v576 = vpop.permute.xlu0 %575
      %577 = vrot.lane.b32.xlu0 %v299, 125
      %v578 = vpop.permute.xlu0 %577
      %579 = vrot.lane.b32.xlu0 %v300, 125
      %v580 = vpop.permute.xlu0 %579
      %581 = vrot.lane.b32.xlu0 %v301, 125
      %v582 = vpop.permute.xlu0 %581
      %583 = vrot.lane.b32.xlu0 %v302, 125
      %v584 = vpop.permute.xlu0 %583
      %585 = vrot.lane.b32.xlu0 %v303, 125
      %v586 = vpop.permute.xlu0 %585
      %587 = vrot.lane.b32.xlu0 %v304, 125
      %v588 = vpop.permute.xlu0 %587
      %589 = vrot.lane.b32.xlu0 %v305, 125
      %v590 = vpop.permute.xlu0 %589
      %591 = vrot.lane.b32.xlu0 %v306, 125
      %v592 = vpop.permute.xlu0 %591
      %593 = vrot.lane.b32.xlu0 %v307, 125
      %v594 = vpop.permute.xlu0 %593
      %vm595 = vcmask 1022976
      %v596 = vsel %vm595, %v564, %v566
      %v597 = vsel %vm595, %v568, %v570
      %v598 = vsel %vm595, %v572, %v574
      %v599 = vsel %vm595, %v576, %v578
      %v600 = vsel %vm595, %v580, %v582
      %v601 = vsel %vm595, %v584, %v586
      %v602 = vsel %vm595, %v588, %v590
      %v603 = vsel %vm595, %v592, %v594
      %612 = vmatprep.subr.bf16.mxu0 0
      %613 = vmatpush1.bf16.msra.mxu0 %v603
      %614 = vmatprep.subr.bf16.mxu0 0
      %615 = vmatpush1.bf16.msra.mxu0 %v602
      %616 = vmatprep.subr.bf16.mxu0 0
      %617 = vmatpush1.bf16.msra.mxu0 %v601
      %618 = vmatprep.subr.bf16.mxu0 0
      %619 = vmatpush1.bf16.msra.mxu0 %v600
      %620 = vmatprep.subr.bf16.mxu0 0
      %621 = vmatpush1.bf16.msra.mxu0 %v599
      %622 = vmatprep.subr.bf16.mxu0 0
      %623 = vmatpush1.bf16.msra.mxu0 %v598
      %624 = vmatprep.subr.bf16.mxu0 0
      %625 = vmatpush1.bf16.msra.mxu0 %v597
      %626 = vmatprep.subr.bf16.mxu0 0
      %627 = vmatpush1.bf16.msra.mxu0 %v596
      %628 = vmatprep.subr.bf16.mxu0 0
      %629 = vmatpush2.bf16.msra.mxu0 0
      %630 = vmatprep.subr.bf16.mxu0 0
      %631 = vmatpush2.bf16.msra.mxu0 0
      %632 = vmatprep.subr.bf16.mxu0 0
      %633 = vmatpush2.bf16.msra.mxu0 0
      %634 = vmatprep.subr.bf16.mxu0 0
      %635 = vmatpush2.bf16.msra.mxu0 0
      %636 = vmatprep.subr.bf16.mxu0 0
      %637 = vmatpush2.bf16.msra.mxu0 0
      %638 = vmatprep.subr.bf16.mxu0 0
      %639 = vmatpush2.bf16.msra.mxu0 0
      %640 = vmatprep.subr.bf16.mxu0 0
      %641 = vmatpush2.bf16.msra.mxu0 0
      %642 = vmatprep.subr.bf16.mxu0 0
      %643 = vmatpush2.bf16.msra.mxu0 0
      %644 = vmatprep.mubr.bf16.mxu0 0
      %645 = vmatmul.mubr.bf16.gmra.mxu0 %v561
      %v646 = vpop.f32.mrf.mxu0
      %v647 = vadd.f32 0.0, %v646
      %v648 = vpop.f32.mrf.mxu0
      %v649 = vpop.f32.mrf.mxu0
      %v650 = vadd.f32 0.0, %v649
      %v651 = vpop.f32.mrf.mxu0
      %652 = vdwg.mxu0
      %v653 = vadd.f32 %v552, %v647
      %v654 = vadd.f32 %v553, %v650
      %s655 = scalar_lea.vmem %s199, 32
      %v656 = vld [vmem:[%s655] sm:$0xf]
      %v657 = vld [vmem:[%s655 + $0x4] sm:$0xf]
      %v660 = vunpack.c.l.b16 %v656
      %v661 = vunpack.c.l.b16 %v657
      %v662 = vpack.c.b16 %v661, %v660
      %664 = vrot.lane.b32.xlu0 %v292, 120
      %v665 = vpop.permute.xlu0 %664
      %666 = vrot.lane.b32.xlu0 %v293, 120
      %v667 = vpop.permute.xlu0 %666
      %668 = vrot.lane.b32.xlu0 %v294, 120
      %v669 = vpop.permute.xlu0 %668
      %670 = vrot.lane.b32.xlu0 %v295, 120
      %v671 = vpop.permute.xlu0 %670
      %672 = vrot.lane.b32.xlu0 %v296, 120
      %v673 = vpop.permute.xlu0 %672
      %674 = vrot.lane.b32.xlu0 %v297, 120
      %v675 = vpop.permute.xlu0 %674
      %676 = vrot.lane.b32.xlu0 %v298, 120
      %v677 = vpop.permute.xlu0 %676
      %678 = vrot.lane.b32.xlu0 %v299, 120
      %v679 = vpop.permute.xlu0 %678
      %680 = vrot.lane.b32.xlu0 %v300, 120
      %v681 = vpop.permute.xlu0 %680
      %682 = vrot.lane.b32.xlu0 %v301, 120
      %v683 = vpop.permute.xlu0 %682
      %684 = vrot.lane.b32.xlu0 %v302, 120
      %v685 = vpop.permute.xlu0 %684
      %686 = vrot.lane.b32.xlu0 %v303, 120
      %v687 = vpop.permute.xlu0 %686
      %688 = vrot.lane.b32.xlu0 %v304, 120
      %v689 = vpop.permute.xlu0 %688
      %690 = vrot.lane.b32.xlu0 %v305, 120
      %v691 = vpop.permute.xlu0 %690
      %692 = vrot.lane.b32.xlu0 %v306, 120
      %v693 = vpop.permute.xlu0 %692
      %694 = vrot.lane.b32.xlu0 %v307, 120
      %v695 = vpop.permute.xlu0 %694
      %vm696 = vcmask 982016
      %v697 = vsel %vm696, %v665, %v667
      %v698 = vsel %vm696, %v669, %v671
      %v699 = vsel %vm696, %v673, %v675
      %v700 = vsel %vm696, %v677, %v679
      %v701 = vsel %vm696, %v681, %v683
      %v702 = vsel %vm696, %v685, %v687
      %v703 = vsel %vm696, %v689, %v691
      %v704 = vsel %vm696, %v693, %v695
      %713 = vmatprep.subr.bf16.mxu0 0
      %714 = vmatpush1.bf16.msra.mxu0 %v704
      %715 = vmatprep.subr.bf16.mxu0 0
      %716 = vmatpush1.bf16.msra.mxu0 %v703
      %717 = vmatprep.subr.bf16.mxu0 0
      %718 = vmatpush1.bf16.msra.mxu0 %v702
      %719 = vmatprep.subr.bf16.mxu0 0
      %720 = vmatpush1.bf16.msra.mxu0 %v701
      %721 = vmatprep.subr.bf16.mxu0 0
      %722 = vmatpush1.bf16.msra.mxu0 %v700
      %723 = vmatprep.subr.bf16.mxu0 0
      %724 = vmatpush1.bf16.msra.mxu0 %v699
      %725 = vmatprep.subr.bf16.mxu0 0
      %726 = vmatpush1.bf16.msra.mxu0 %v698
      %727 = vmatprep.subr.bf16.mxu0 0
      %728 = vmatpush1.bf16.msra.mxu0 %v697
      %729 = vmatprep.subr.bf16.mxu0 0
      %730 = vmatpush2.bf16.msra.mxu0 0
      %731 = vmatprep.subr.bf16.mxu0 0
      %732 = vmatpush2.bf16.msra.mxu0 0
      %733 = vmatprep.subr.bf16.mxu0 0
      %734 = vmatpush2.bf16.msra.mxu0 0
      %735 = vmatprep.subr.bf16.mxu0 0
      %736 = vmatpush2.bf16.msra.mxu0 0
      %737 = vmatprep.subr.bf16.mxu0 0
      %738 = vmatpush2.bf16.msra.mxu0 0
      %739 = vmatprep.subr.bf16.mxu0 0
      %740 = vmatpush2.bf16.msra.mxu0 0
      %741 = vmatprep.subr.bf16.mxu0 0
      %742 = vmatpush2.bf16.msra.mxu0 0
      %743 = vmatprep.subr.bf16.mxu0 0
      %744 = vmatpush2.bf16.msra.mxu0 0
      %745 = vmatprep.mubr.bf16.mxu0 0
      %746 = vmatmul.mubr.bf16.gmra.mxu0 %v662
      %v747 = vpop.f32.mrf.mxu0
      %v748 = vadd.f32 0.0, %v747
      %v749 = vpop.f32.mrf.mxu0
      %v750 = vpop.f32.mrf.mxu0
      %v751 = vadd.f32 0.0, %v750
      %v752 = vpop.f32.mrf.mxu0
      %753 = vdwg.mxu0
      %v754 = vadd.f32 %v653, %v748
      %v755 = vadd.f32 %v654, %v751
      %s756 = scalar_lea.vmem %s199, 40
      %v757 = vld [vmem:[%s756] sm:$0xf]
      %v758 = vld [vmem:[%s756 + $0x4] sm:$0xf]
      %v761 = vunpack.c.l.b16 %v757
      %v762 = vunpack.c.l.b16 %v758
      %v763 = vpack.c.b16 %v762, %v761
      %765 = vrot.lane.b32.xlu0 %v292, 119
      %v766 = vpop.permute.xlu0 %765
      %767 = vrot.lane.b32.xlu0 %v293, 119
      %v768 = vpop.permute.xlu0 %767
      %769 = vrot.lane.b32.xlu0 %v294, 119
      %v770 = vpop.permute.xlu0 %769
      %771 = vrot.lane.b32.xlu0 %v295, 119
      %v772 = vpop.permute.xlu0 %771
      %773 = vrot.lane.b32.xlu0 %v296, 119
      %v774 = vpop.permute.xlu0 %773
      %775 = vrot.lane.b32.xlu0 %v297, 119
      %v776 = vpop.permute.xlu0 %775
      %777 = vrot.lane.b32.xlu0 %v298, 119
      %v778 = vpop.permute.xlu0 %777
      %779 = vrot.lane.b32.xlu0 %v299, 119
      %v780 = vpop.permute.xlu0 %779
      %781 = vrot.lane.b32.xlu0 %v300, 119
      %v782 = vpop.permute.xlu0 %781
      %783 = vrot.lane.b32.xlu0 %v301, 119
      %v784 = vpop.permute.xlu0 %783
      %785 = vrot.lane.b32.xlu0 %v302, 119
      %v786 = vpop.permute.xlu0 %785
      %787 = vrot.lane.b32.xlu0 %v303, 119
      %v788 = vpop.permute.xlu0 %787
      %789 = vrot.lane.b32.xlu0 %v304, 119
      %v790 = vpop.permute.xlu0 %789
      %791 = vrot.lane.b32.xlu0 %v305, 119
      %v792 = vpop.permute.xlu0 %791
      %793 = vrot.lane.b32.xlu0 %v306, 119
      %v794 = vpop.permute.xlu0 %793
      %795 = vrot.lane.b32.xlu0 %v307, 119
      %v796 = vpop.permute.xlu0 %795
      %vm797 = vcmask 973824
      %v798 = vsel %vm797, %v766, %v768
      %v799 = vsel %vm797, %v770, %v772
      %v800 = vsel %vm797, %v774, %v776
      %v801 = vsel %vm797, %v778, %v780
      %v802 = vsel %vm797, %v782, %v784
      %v803 = vsel %vm797, %v786, %v788
      %v804 = vsel %vm797, %v790, %v792
      %v805 = vsel %vm797, %v794, %v796
      %814 = vmatprep.subr.bf16.mxu0 0
      %815 = vmatpush1.bf16.msra.mxu0 %v805
      %816 = vmatprep.subr.bf16.mxu0 0
      %817 = vmatpush1.bf16.msra.mxu0 %v804
      %818 = vmatprep.subr.bf16.mxu0 0
      %819 = vmatpush1.bf16.msra.mxu0 %v803
      %820 = vmatprep.subr.bf16.mxu0 0
      %821 = vmatpush1.bf16.msra.mxu0 %v802
      %822 = vmatprep.subr.bf16.mxu0 0
      %823 = vmatpush1.bf16.msra.mxu0 %v801
      %824 = vmatprep.subr.bf16.mxu0 0
      %825 = vmatpush1.bf16.msra.mxu0 %v800
      %826 = vmatprep.subr.bf16.mxu0 0
      %827 = vmatpush1.bf16.msra.mxu0 %v799
      %828 = vmatprep.subr.bf16.mxu0 0
      %829 = vmatpush1.bf16.msra.mxu0 %v798
      %830 = vmatprep.subr.bf16.mxu0 0
      %831 = vmatpush2.bf16.msra.mxu0 0
      %832 = vmatprep.subr.bf16.mxu0 0
      %833 = vmatpush2.bf16.msra.mxu0 0
      %834 = vmatprep.subr.bf16.mxu0 0
      %835 = vmatpush2.bf16.msra.mxu0 0
      %836 = vmatprep.subr.bf16.mxu0 0
      %837 = vmatpush2.bf16.msra.mxu0 0
      %838 = vmatprep.subr.bf16.mxu0 0
      %839 = vmatpush2.bf16.msra.mxu0 0
      %840 = vmatprep.subr.bf16.mxu0 0
      %841 = vmatpush2.bf16.msra.mxu0 0
      %842 = vmatprep.subr.bf16.mxu0 0
      %843 = vmatpush2.bf16.msra.mxu0 0
      %844 = vmatprep.subr.bf16.mxu0 0
      %845 = vmatpush2.bf16.msra.mxu0 0
      %846 = vmatprep.mubr.bf16.mxu0 0
      %847 = vmatmul.mubr.bf16.gmra.mxu0 %v763
      %v848 = vpop.f32.mrf.mxu0
      %v849 = vadd.f32 0.0, %v848
      %v850 = vpop.f32.mrf.mxu0
      %v851 = vpop.f32.mrf.mxu0
      %v852 = vadd.f32 0.0, %v851
      %v853 = vpop.f32.mrf.mxu0
      %854 = vdwg.mxu0
      %v855 = vadd.f32 %v754, %v849
      %v856 = vadd.f32 %v755, %v852
      %s857 = scalar_lea.vmem %s199, 48
      %v858 = vld [vmem:[%s857] sm:$0xf]
      %v859 = vld [vmem:[%s857 + $0x4] sm:$0xf]
      %v862 = vunpack.c.l.b16 %v858
      %v863 = vunpack.c.l.b16 %v859
      %v864 = vpack.c.b16 %v863, %v862
      %866 = vrot.lane.b32.xlu0 %v292, 118
      %v867 = vpop.permute.xlu0 %866
      %868 = vrot.lane.b32.xlu0 %v293, 118
      %v869 = vpop.permute.xlu0 %868
      %870 = vrot.lane.b32.xlu0 %v294, 118
      %v871 = vpop.permute.xlu0 %870
      %872 = vrot.lane.b32.xlu0 %v295, 118
      %v873 = vpop.permute.xlu0 %872
      %874 = vrot.lane.b32.xlu0 %v296, 118
      %v875 = vpop.permute.xlu0 %874
      %876 = vrot.lane.b32.xlu0 %v297, 118
      %v877 = vpop.permute.xlu0 %876
      %878 = vrot.lane.b32.xlu0 %v298, 118
      %v879 = vpop.permute.xlu0 %878
      %880 = vrot.lane.b32.xlu0 %v299, 118
      %v881 = vpop.permute.xlu0 %880
      %882 = vrot.lane.b32.xlu0 %v300, 118
      %v883 = vpop.permute.xlu0 %882
      %884 = vrot.lane.b32.xlu0 %v301, 118
      %v885 = vpop.permute.xlu0 %884
      %886 = vrot.lane.b32.xlu0 %v302, 118
      %v887 = vpop.permute.xlu0 %886
      %888 = vrot.lane.b32.xlu0 %v303, 118
      %v889 = vpop.permute.xlu0 %888
      %890 = vrot.lane.b32.xlu0 %v304, 118
      %v891 = vpop.permute.xlu0 %890
      %892 = vrot.lane.b32.xlu0 %v305, 118
      %v893 = vpop.permute.xlu0 %892
      %894 = vrot.lane.b32.xlu0 %v306, 118
      %v895 = vpop.permute.xlu0 %894
      %896 = vrot.lane.b32.xlu0 %v307, 118
      %v897 = vpop.permute.xlu0 %896
      %vm898 = vcmask 965632
      %v899 = vsel %vm898, %v867, %v869
      %v900 = vsel %vm898, %v871, %v873
      %v901 = vsel %vm898, %v875, %v877
      %v902 = vsel %vm898, %v879, %v881
      %v903 = vsel %vm898, %v883, %v885
      %v904 = vsel %vm898, %v887, %v889
      %v905 = vsel %vm898, %v891, %v893
      %v906 = vsel %vm898, %v895, %v897
      %915 = vmatprep.subr.bf16.mxu0 0
      %916 = vmatpush1.bf16.msra.mxu0 %v906
      %917 = vmatprep.subr.bf16.mxu0 0
      %918 = vmatpush1.bf16.msra.mxu0 %v905
      %919 = vmatprep.subr.bf16.mxu0 0
      %920 = vmatpush1.bf16.msra.mxu0 %v904
      %921 = vmatprep.subr.bf16.mxu0 0
      %922 = vmatpush1.bf16.msra.mxu0 %v903
      %923 = vmatprep.subr.bf16.mxu0 0
      %924 = vmatpush1.bf16.msra.mxu0 %v902
      %925 = vmatprep.subr.bf16.mxu0 0
      %926 = vmatpush1.bf16.msra.mxu0 %v901
      %927 = vmatprep.subr.bf16.mxu0 0
      %928 = vmatpush1.bf16.msra.mxu0 %v900
      %929 = vmatprep.subr.bf16.mxu0 0
      %930 = vmatpush1.bf16.msra.mxu0 %v899
      %931 = vmatprep.subr.bf16.mxu0 0
      %932 = vmatpush2.bf16.msra.mxu0 0
      %933 = vmatprep.subr.bf16.mxu0 0
      %934 = vmatpush2.bf16.msra.mxu0 0
      %935 = vmatprep.subr.bf16.mxu0 0
      %936 = vmatpush2.bf16.msra.mxu0 0
      %937 = vmatprep.subr.bf16.mxu0 0
      %938 = vmatpush2.bf16.msra.mxu0 0
      %939 = vmatprep.subr.bf16.mxu0 0
      %940 = vmatpush2.bf16.msra.mxu0 0
      %941 = vmatprep.subr.bf16.mxu0 0
      %942 = vmatpush2.bf16.msra.mxu0 0
      %943 = vmatprep.subr.bf16.mxu0 0
      %944 = vmatpush2.bf16.msra.mxu0 0
      %945 = vmatprep.subr.bf16.mxu0 0
      %946 = vmatpush2.bf16.msra.mxu0 0
      %947 = vmatprep.mubr.bf16.mxu0 0
      %948 = vmatmul.mubr.bf16.gmra.mxu0 %v864
      %v949 = vpop.f32.mrf.mxu0
      %v950 = vadd.f32 0.0, %v949
      %v951 = vpop.f32.mrf.mxu0
      %v952 = vpop.f32.mrf.mxu0
      %v953 = vadd.f32 0.0, %v952
      %v954 = vpop.f32.mrf.mxu0
      %955 = vdwg.mxu0
      %v956 = vadd.f32 %v855, %v950
      %v957 = vadd.f32 %v856, %v953
      %s958 = scalar_lea.vmem %s199, 56
      %v959 = vld [vmem:[%s958] sm:$0xf]
      %v960 = vld [vmem:[%s958 + $0x4] sm:$0xf]
      %v963 = vunpack.c.l.b16 %v959
      %v964 = vunpack.c.l.b16 %v960
      %v965 = vpack.c.b16 %v964, %v963
      %967 = vrot.lane.b32.xlu0 %v292, 117
      %v968 = vpop.permute.xlu0 %967
      %969 = vrot.lane.b32.xlu0 %v293, 117
      %v970 = vpop.permute.xlu0 %969
      %971 = vrot.lane.b32.xlu0 %v294, 117
      %v972 = vpop.permute.xlu0 %971
      %973 = vrot.lane.b32.xlu0 %v295, 117
      %v974 = vpop.permute.xlu0 %973
      %975 = vrot.lane.b32.xlu0 %v296, 117
      %v976 = vpop.permute.xlu0 %975
      %977 = vrot.lane.b32.xlu0 %v297, 117
      %v978 = vpop.permute.xlu0 %977
      %979 = vrot.lane.b32.xlu0 %v298, 117
      %v980 = vpop.permute.xlu0 %979
      %981 = vrot.lane.b32.xlu0 %v299, 117
      %v982 = vpop.permute.xlu0 %981
      %983 = vrot.lane.b32.xlu0 %v300, 117
      %v984 = vpop.permute.xlu0 %983
      %985 = vrot.lane.b32.xlu0 %v301, 117
      %v986 = vpop.permute.xlu0 %985
      %987 = vrot.lane.b32.xlu0 %v302, 117
      %v988 = vpop.permute.xlu0 %987
      %989 = vrot.lane.b32.xlu0 %v303, 117
      %v990 = vpop.permute.xlu0 %989
      %991 = vrot.lane.b32.xlu0 %v304, 117
      %v992 = vpop.permute.xlu0 %991
      %993 = vrot.lane.b32.xlu0 %v305, 117
      %v994 = vpop.permute.xlu0 %993
      %995 = vrot.lane.b32.xlu0 %v306, 117
      %v996 = vpop.permute.xlu0 %995
      %997 = vrot.lane.b32.xlu0 %v307, 117
      %v998 = vpop.permute.xlu0 %997
      %vm999 = vcmask 957440
      %v1000 = vsel %vm999, %v968, %v970
      %v1001 = vsel %vm999, %v972, %v974
      %v1002 = vsel %vm999, %v976, %v978
      %v1003 = vsel %vm999, %v980, %v982
      %v1004 = vsel %vm999, %v984, %v986
      %v1005 = vsel %vm999, %v988, %v990
      %v1006 = vsel %vm999, %v992, %v994
      %v1007 = vsel %vm999, %v996, %v998
      %1016 = vmatprep.subr.bf16.mxu0 0
      %1017 = vmatpush1.bf16.msra.mxu0 %v1007
      %1018 = vmatprep.subr.bf16.mxu0 0
      %1019 = vmatpush1.bf16.msra.mxu0 %v1006
      %1020 = vmatprep.subr.bf16.mxu0 0
      %1021 = vmatpush1.bf16.msra.mxu0 %v1005
      %1022 = vmatprep.subr.bf16.mxu0 0
      %1023 = vmatpush1.bf16.msra.mxu0 %v1004
      %1024 = vmatprep.subr.bf16.mxu0 0
      %1025 = vmatpush1.bf16.msra.mxu0 %v1003
      %1026 = vmatprep.subr.bf16.mxu0 0
      %1027 = vmatpush1.bf16.msra.mxu0 %v1002
      %1028 = vmatprep.subr.bf16.mxu0 0
      %1029 = vmatpush1.bf16.msra.mxu0 %v1001
      %1030 = vmatprep.subr.bf16.mxu0 0
      %1031 = vmatpush1.bf16.msra.mxu0 %v1000
      %1032 = vmatprep.subr.bf16.mxu0 0
      %1033 = vmatpush2.bf16.msra.mxu0 0
      %1034 = vmatprep.subr.bf16.mxu0 0
      %1035 = vmatpush2.bf16.msra.mxu0 0
      %1036 = vmatprep.subr.bf16.mxu0 0
      %1037 = vmatpush2.bf16.msra.mxu0 0
      %1038 = vmatprep.subr.bf16.mxu0 0
      %1039 = vmatpush2.bf16.msra.mxu0 0
      %1040 = vmatprep.subr.bf16.mxu0 0
      %1041 = vmatpush2.bf16.msra.mxu0 0
      %1042 = vmatprep.subr.bf16.mxu0 0
      %1043 = vmatpush2.bf16.msra.mxu0 0
      %1044 = vmatprep.subr.bf16.mxu0 0
      %1045 = vmatpush2.bf16.msra.mxu0 0
      %1046 = vmatprep.subr.bf16.mxu0 0
      %1047 = vmatpush2.bf16.msra.mxu0 0
      %1048 = vmatprep.mubr.bf16.mxu0 0
      %1049 = vmatmul.mubr.bf16.gmra.mxu0 %v965
      %v1050 = vpop.f32.mrf.mxu0
      %v1051 = vadd.f32 0.0, %v1050
      %v1052 = vpop.f32.mrf.mxu0
      %v1053 = vpop.f32.mrf.mxu0
      %v1054 = vadd.f32 0.0, %v1053
      %v1055 = vpop.f32.mrf.mxu0
      %1056 = vdwg.mxu0
      %v1057 = vadd.f32 %v956, %v1051
      %v1058 = vadd.f32 %v957, %v1054
      %1059 = vst [vmem:[%s214] sm:$0xff] %v1057
      %1060 = vst [vmem:[%s214 + $0x8] sm:$0xff] %v1058
      %s1061 = smul.u32 2, %s19
      %p1062 = scmp.lt.s32.totalorder %s18, 1
      %s1063 = scalar_select %p1062, %s18, 1
      %p1064 = scmp.lt.s32.totalorder %s1061, 1
      %s1065 = scalar_select %p1064, %s1061, 1
      %s1066 = smul.addr %s1063, 2
      %s1067 = sadd.s32 %s1065, %s1066
      %s1068 = smul.addr %s1067, 8
      %s1069 = scalar_lea.vmem %s3, %s1068
      // Predicated region
      $region33: #{dnpf_forward.9} parent=31 // pred_check
        %p1070 = pneg %p119
      $region34: #{dnpf_forward.9} parent=31 // pred_check_branch
        %1072 = sbr.rel (%p1070) target = $region36
      $region35: #{dnpf_forward.9} parent=31 // pred_region
        %s1073 = smul.u32 2, %s19
      $region36: #{dnpf_forward.9} parent=31 // pred_fallthru
        _
    $region32: #{dnpf_forward.9} parent=5 // pred_fallthru
      _
    %p1074 = scmp.le.s32.totalorder 2, %s9
    // Predicated region
    $region37: #{dnpf_forward.9} parent=5 // pred_check
      %p1075 = pneg %p1074
    $region38: #{dnpf_forward.9} parent=5 // pred_check_branch
      %1077 = sbr.rel (%p1075) target = $region40
    $region39: #{dnpf_forward.9} parent=5 // pred_region
      %s1078 = ssub.s32 %s9, 2
      // Predicated region
      $region41: #{dnpf_forward.9} parent=39 // pred_check
        %p1079 = pneg %p125
      $region42: #{dnpf_forward.9} parent=39 // pred_check_branch
        %1081 = sbr.rel (%p1079) target = $region44
      $region43: #{dnpf_forward.9} parent=39 // pred_region
        %s1082 = smul.u32 2, %s21
        %p1083 = scmp.lt.s32.totalorder %s20, 1
        %s1084 = scalar_select %p1083, %s20, 1
        %p1085 = scmp.lt.s32.totalorder %s1082, 1
        %s1086 = scalar_select %p1085, %s1082, 1
        %s1087 = smul.addr %s1084, 2
        %s1088 = sadd.s32 %s1086, %s1087
        %s1089 = smul.addr %s1088, 8
        %s1090 = scalar_lea.vmem %s3, %s1089
      $region44: #{dnpf_forward.9} parent=39 // pred_fallthru
        _
    $region40: #{dnpf_forward.9} parent=5 // pred_fallthru
      _
  $region6: #{dnpf_forward.9} parent=0 // loop_footer
    %s13 = sadd.s32 1, %s9
  $region7: #{dnpf_forward.9} parent=0 // loop_footer_branch
    %8 = sbr.rel target = $region3
  $region8: #{dnpf_forward.9} parent=0 // loop_exit
    _

</llo_original>
